<compile_context>
chip_gen: v7x
topology: tpu7x:2x2x1
jax: 0.10.0
libtpu: 0.0.40
codegen_flags: <defaults>
</compile_context>

<pallas_src>
import functools

import jax
import jax.numpy as jnp
import numpy as np
from jax.experimental import pallas as pl
from jax.experimental.pallas import tpu as pltpu

NEG_SLOPE = 0.01  # nn.LeakyReLU default negative_slope


# ---------------------------------------------------------------------------
# Fused Pallas kernel: fc + concat + pad + im2col + 4 parity GEMMs + bias + lrelu
# ---------------------------------------------------------------------------
def _fused_decode_kernel(x_ref, z_ref, wfc_ref, bfc_ref, wr_ref, bc_ref,
                         o_ref, pad_ref, flat3_ref, xs_ref,
                         *, H, W, Cin_s, c_fc, Cin_total, Cout):
    HW = H * W
    Hp = H + 2

    # ---- fc(z): (1, Z) @ (Z, c_fc*H*W) + b ---------------------------------
    fvec = (jnp.dot(z_ref[0], wfc_ref[...],
                    preferred_element_type=jnp.float32)
            + bfc_ref[...])                                    # (1, c_fc*H*W)

    # ---- zero-padded concat([x, fc(z).view(c_fc, H, W)]) in VMEM -----------
    pad_ref[...] = jnp.zeros_like(pad_ref)
    for r in range(H):
        # skip-connection channels
        pad_ref[0:Cin_s, 1 + r, 1:W + 1] = x_ref[0, :, r, :]
        # fc(z) channels (fvec lanes are ordered (channel, row, col))
        for ci in range(c_fc):
            base = (ci * H + r) * W
            pad_ref[Cin_s + ci:Cin_s + ci + 1, 1 + r, 1:W + 1] = \
                fvec[:, base:base + W]

    # ---- column-shifted, row-flattened copies:
    #      flat3[ox, ci, pr*W + c] = pad[ci, pr, ox + c]        (ox in 0..2)
    # so the shifted window (oy, ox) is the contiguous lane slice
    #      flat3[ox, :, oy*W : oy*W + H*W]
    for ox in range(3):
        for pr in range(Hp):
            flat3_ref[ox, :, pr * W:(pr + 1) * W] = pad_ref[:, pr, ox:ox + W]

    # ---- 4 output-parity GEMMs ---------------------------------------------
    # out[co, 2a+py, 2c+px] = sum_{dy,dx,ci} pad[ci, a+py+dy, c+px+dx]
    #                         * Wt[ci, co, 3-py-2dy, 3-px-2dx] + bias[co]
    for p, (py, px) in enumerate(((0, 0), (0, 1), (1, 0), (1, 1))):
        for q, (dy, dx) in enumerate(((0, 0), (0, 1), (1, 0), (1, 1))):
            oy, ox = py + dy, px + dx
            xs_ref[q * Cin_total:(q + 1) * Cin_total, :] = \
                flat3_ref[ox, :, oy * W:oy * W + HW]
        acc = jnp.dot(wr_ref[p], xs_ref[...],
                      preferred_element_type=jnp.float32)       # (Cout, HW)
        acc = acc + bc_ref[...]
        o_ref[0, :, p * HW:(p + 1) * HW] = jnp.where(
            acc > 0, acc, NEG_SLOPE * acc).astype(o_ref.dtype)


def _fused_call(x, z, w_fc, b_fc, w_r, b_c, H, W):
    B, Cin_s = x.shape[0], x.shape[1]
    Z = z.shape[-1]
    N = w_fc.shape[1]
    Cout, K = w_r.shape[1], w_r.shape[2]
    Cin_total = K // 4
    c_fc = Cin_total - Cin_s
    HW = H * W
    assert N == c_fc * H * W

    kernel = functools.partial(
        _fused_decode_kernel, H=H, W=W, Cin_s=Cin_s, c_fc=c_fc,
        Cin_total=Cin_total, Cout=Cout)

    return pl.pallas_call(
        kernel,
        out_shape=jax.ShapeDtypeStruct((B, Cout, 4 * HW), jnp.float32),
        grid=(B,),
        in_specs=[
            pl.BlockSpec((1, Cin_s, H, W), lambda b: (b, 0, 0, 0)),
            pl.BlockSpec((1, 1, Z), lambda b: (b, 0, 0)),
            pl.BlockSpec((Z, N), lambda b: (0, 0)),          # constant -> DMA once
            pl.BlockSpec((1, N), lambda b: (0, 0)),
            pl.BlockSpec((4, Cout, K), lambda b: (0, 0, 0)),
            pl.BlockSpec((Cout, 1), lambda b: (0, 0)),
        ],
        out_specs=pl.BlockSpec((1, Cout, 4 * HW), lambda b: (b, 0, 0)),
        scratch_shapes=[
            pltpu.VMEM((Cin_total, H + 2, W + 2), jnp.float32),   # padded concat
            pltpu.VMEM((3, Cin_total, (H + 2) * W), jnp.float32),  # flat3 staging
            pltpu.VMEM((K, HW), jnp.float32),                      # parity im2col
        ],
        compiler_params=pltpu.CompilerParams(
            dimension_semantics=("parallel",)),
    )(x, z.reshape(B, 1, Z), w_fc, b_fc.reshape(1, N), w_r,
      b_c.reshape(Cout, 1))


# ---------------------------------------------------------------------------
# Host-side weight re-layout (done once; validated mapping)
#   w_t: (Cin, Cout, 4, 4) PyTorch ConvTranspose2d layout -> (4, Cout, 4*Cin)
# ---------------------------------------------------------------------------
def rearrange_deconv_weight(w_t):
    parts = []
    for py in range(2):
        for px in range(2):
            row = []
            for dy in range(2):
                for dx in range(2):
                    ky = 3 - py - 2 * dy
                    kx = 3 - px - 2 * dx
                    row.append(w_t[:, :, ky, kx].T)       # (Cout, Cin)
            parts.append(jnp.concatenate(row, axis=1))    # (Cout, 4*Cin)
    return jnp.stack(parts, axis=0)                       # (4, Cout, 4*Cin)


def cnn_decode_layer_forward(x, z, params, input_img_dims):
    """CNNDecodeLayer.forward, concat branch, batchnorm=False, act='lrelu'."""
    H, W = input_img_dims
    B = z.shape[0]
    w_fc, b_fc, w_t, b_c = params
    cout = w_t.shape[1]

    w_r = rearrange_deconv_weight(w_t)
    y = _fused_call(x, z, w_fc, b_fc, w_r, b_c, H, W)   # (B, Cout, 4*H*W)

    # parity interleave (wrapper layout plumbing): lanes ordered (py, px, h, w)
    y = y.reshape(B, cout, 2, 2, H, W).transpose(0, 1, 4, 2, 5, 3)
    return y.reshape(B, cout, 2 * H, 2 * W)


# ---------------------------------------------------------------------------
# Pure-JAX reference (mirrors PyTorch semantics) for self-check
# ---------------------------------------------------------------------------
def reference_forward(x, z, params, input_img_dims):
    H, W = input_img_dims
    B = z.shape[0]
    w_fc, b_fc, w_t, b_c = params
    c_fc = w_fc.shape[1] // (H * W)
    f = (z @ w_fc + b_fc).reshape(B, c_fc, H, W)
    x_cat = jnp.concatenate([x, f], axis=1)
    kern = jnp.flip(w_t, axis=(2, 3)).transpose(1, 0, 2, 3)   # (Cout, Cin, 4, 4)
    y = jax.lax.conv_general_dilated(
        x_cat, kern, window_strides=(1, 1), padding=((2, 2), (2, 2)),
        lhs_dilation=(2, 2), dimension_numbers=('NCHW', 'OIHW', 'NCHW'))
    y = y + b_c.reshape(1, -1, 1, 1)
    return jnp.where(y > 0, y, NEG_SLOPE * y)


if __name__ == "__main__":
    key = jax.random.PRNGKey(0)
    B, Z = 2, 32
    Cin_s = 4            # `input` arg (skip-connection channels)
    Cout = 4             # `output` arg
    H, Wd = 8, 8         # input_img_dims
    Cin_total = 2 * Cin_s  # init branch: input *= 2 after building fc

    k1, k2, k3, k4, k5, k6 = jax.random.split(key, 6)
    x = jax.random.normal(k1, (B, Cin_s, H, Wd), jnp.float32)
    z = jax.random.normal(k2, (B, Z), jnp.float32)
    # deterministic synthetic parameters
    # (Linear(zdim, Cin_s*H*W), ConvTranspose2d(2*Cin_s, Cout, 4, stride=2, padding=1))
    w_fc = 0.1 * jax.random.normal(k3, (Z, Cin_s * H * Wd), jnp.float32)
    b_fc = 0.1 * jax.random.normal(k4, (Cin_s * H * Wd,), jnp.float32)
    w_t = 0.1 * jax.random.normal(k5, (Cin_total, Cout, 4, 4), jnp.float32)
    b_c = 0.1 * jax.random.normal(k6, (Cout,), jnp.float32)
    params = (w_fc, b_fc, w_t, b_c)

    forward = jax.jit(cnn_decode_layer_forward, static_argnums=(3,))
    out = forward(x, z, params, (H, Wd))
    out = jax.block_until_ready(out)

    ref = reference_forward(x, z, params, (H, Wd))
    assert out.shape == (B, Cout, 2 * H, 2 * Wd), out.shape
    np.testing.assert_allclose(np.asarray(out), np.asarray(ref),
                               rtol=1e-4, atol=1e-4)
    print("KERNEL_OK")
</pallas_src>

<mosaic_0001>
module attributes {stable_mosaic.version = 11 : i64} {
  func.func @_fused_decode_kernel(%arg0: i32, %arg1: memref<1x4x8x8xf32, #tpu.memory_space<vmem>>, %arg2: memref<1x1x32xf32, #tpu.memory_space<vmem>>, %arg3: memref<32x256xf32, #tpu.memory_space<vmem>>, %arg4: memref<1x256xf32, #tpu.memory_space<vmem>>, %arg5: memref<4x4x32xf32, #tpu.memory_space<vmem>>, %arg6: memref<4x1xf32, #tpu.memory_space<vmem>>, %arg7: memref<1x4x256xf32, #tpu.memory_space<vmem>>, %arg8: memref<8x10x10xf32, #tpu.memory_space<vmem>>, %arg9: memref<3x8x80xf32, #tpu.memory_space<vmem>>, %arg10: memref<32x64xf32, #tpu.memory_space<vmem>>) attributes {dimension_semantics = [#tpu.dimension_semantics<parallel>], iteration_bounds = array<i64: 2>, scalar_prefetch = 0 : i64, scratch_operands = 3 : i64, tpu.core_type = #tpu.core_type<tc>, window_params = [{transform_indices = @transform_0, window_bounds = array<i64: 1, 4, 8, 8>}, {transform_indices = @transform_1, window_bounds = array<i64: 1, 1, 32>}, {pipeline_mode = #tpu.pipeline_mode<synchronous>, transform_indices = @transform_2, window_bounds = array<i64: 32, 256>}, {pipeline_mode = #tpu.pipeline_mode<synchronous>, transform_indices = @transform_3, window_bounds = array<i64: 1, 256>}, {pipeline_mode = #tpu.pipeline_mode<synchronous>, transform_indices = @transform_4, window_bounds = array<i64: 4, 4, 32>}, {pipeline_mode = #tpu.pipeline_mode<synchronous>, transform_indices = @transform_5, window_bounds = array<i64: 4, 1>}, {transform_indices = @transform_6, window_bounds = array<i64: 1, 4, 256>}]} {
    %c0 = arith.constant 0 : index
    %c0_0 = arith.constant 0 : index
    %c0_1 = arith.constant 0 : index
    %0 = vector.load %arg2[%c0, %c0_0, %c0_1] : memref<1x1x32xf32, #tpu.memory_space<vmem>>, vector<1x1x32xf32>
    %1 = vector.shape_cast %0 : vector<1x1x32xf32> to vector<1x32xf32>
    %c0_2 = arith.constant 0 : index
    %c0_3 = arith.constant 0 : index
    %2 = vector.load %arg3[%c0_2, %c0_3] : memref<32x256xf32, #tpu.memory_space<vmem>>, vector<32x256xf32>
    %cst = arith.constant dense<0.000000e+00> : vector<1x256xf32>
    %3 = tpu.matmul %1, %2, %cst {dimension_numbers = #tpu.dot_dimension_numbers<[1], [0], [0], [1], [0, 0, 1, 1], [], []>} : vector<1x32xf32>, vector<32x256xf32>, vector<1x256xf32> -> vector<1x256xf32>
    %c0_4 = arith.constant 0 : index
    %c0_5 = arith.constant 0 : index
    %4 = vector.load %arg4[%c0_4, %c0_5] : memref<1x256xf32, #tpu.memory_space<vmem>>, vector<1x256xf32>
    %5 = arith.addf %3, %4 : vector<1x256xf32>
    %cst_6 = arith.constant 0.000000e+00 : f32
    %6 = vector.broadcast %cst_6 : f32 to vector<8x10x10xf32>
    %c0_7 = arith.constant 0 : index
    %c0_8 = arith.constant 0 : index
    %c0_9 = arith.constant 0 : index
    %7 = vector.load %arg8[%c0_7, %c0_8, %c0_9] : memref<8x10x10xf32, #tpu.memory_space<vmem>>, vector<8x10x10xf32>
    tpu.vector_store %arg8[%c0_7, %c0_8, %c0_9], %6 {strides = array<i32>} : memref<8x10x10xf32, #tpu.memory_space<vmem>>, vector<8x10x10xf32>,
    %c0_10 = arith.constant 0 : index
    %c0_11 = arith.constant 0 : index
    %c0_12 = arith.constant 0 : index
    %c0_13 = arith.constant 0 : index
    %8 = vector.load %arg1[%c0_10, %c0_11, %c0_12, %c0_13] : memref<1x4x8x8xf32, #tpu.memory_space<vmem>>, vector<1x4x1x8xf32>
    %9 = vector.shape_cast %8 : vector<1x4x1x8xf32> to vector<4x8xf32>
    %c0_14 = arith.constant 0 : index
    %c1 = arith.constant 1 : index
    %c1_15 = arith.constant 1 : index
    %10 = vector.load %arg8[%c0_14, %c1, %c1_15] : memref<8x10x10xf32, #tpu.memory_space<vmem>>, vector<4x1x8xf32>
    %11 = vector.shape_cast %10 : vector<4x1x8xf32> to vector<4x8xf32>
    %12 = vector.shape_cast %9 : vector<4x8xf32> to vector<4x1x8xf32>
    tpu.vector_store %arg8[%c0_14, %c1, %c1_15], %12 {strides = array<i32>} : memref<8x10x10xf32, #tpu.memory_space<vmem>>, vector<4x1x8xf32>,
    %13 = vector.extract_strided_slice %5 {offsets = [0, 0], sizes = [1, 8], strides = [1, 1]} : vector<1x256xf32> to vector<1x8xf32>
    %c4 = arith.constant 4 : index
    %c1_16 = arith.constant 1 : index
    %c1_17 = arith.constant 1 : index
    %14 = vector.load %arg8[%c4, %c1_16, %c1_17] : memref<8x10x10xf32, #tpu.memory_space<vmem>>, vector<1x1x8xf32>
    %15 = vector.shape_cast %14 : vector<1x1x8xf32> to vector<1x8xf32>
    %16 = vector.shape_cast %13 : vector<1x8xf32> to vector<1x1x8xf32>
    tpu.vector_store %arg8[%c4, %c1_16, %c1_17], %16 {strides = array<i32>} : memref<8x10x10xf32, #tpu.memory_space<vmem>>, vector<1x1x8xf32>,
    %17 = vector.extract_strided_slice %5 {offsets = [0, 64], sizes = [1, 8], strides = [1, 1]} : vector<1x256xf32> to vector<1x8xf32>
    %c5 = arith.constant 5 : index
    %c1_18 = arith.constant 1 : index
    %c1_19 = arith.constant 1 : index
    %18 = vector.load %arg8[%c5, %c1_18, %c1_19] : memref<8x10x10xf32, #tpu.memory_space<vmem>>, vector<1x1x8xf32>
    %19 = vector.shape_cast %18 : vector<1x1x8xf32> to vector<1x8xf32>
    %20 = vector.shape_cast %17 : vector<1x8xf32> to vector<1x1x8xf32>
    tpu.vector_store %arg8[%c5, %c1_18, %c1_19], %20 {strides = array<i32>} : memref<8x10x10xf32, #tpu.memory_space<vmem>>, vector<1x1x8xf32>,
    %21 = vector.extract_strided_slice %5 {offsets = [0, 128], sizes = [1, 8], strides = [1, 1]} : vector<1x256xf32> to vector<1x8xf32>
    %c6 = arith.constant 6 : index
    %c1_20 = arith.constant 1 : index
    %c1_21 = arith.constant 1 : index
    %22 = vector.load %arg8[%c6, %c1_20, %c1_21] : memref<8x10x10xf32, #tpu.memory_space<vmem>>, vector<1x1x8xf32>
    %23 = vector.shape_cast %22 : vector<1x1x8xf32> to vector<1x8xf32>
    %24 = vector.shape_cast %21 : vector<1x8xf32> to vector<1x1x8xf32>
    tpu.vector_store %arg8[%c6, %c1_20, %c1_21], %24 {strides = array<i32>} : memref<8x10x10xf32, #tpu.memory_space<vmem>>, vector<1x1x8xf32>,
    %25 = vector.extract_strided_slice %5 {offsets = [0, 192], sizes = [1, 8], strides = [1, 1]} : vector<1x256xf32> to vector<1x8xf32>
    %c7 = arith.constant 7 : index
    %c1_22 = arith.constant 1 : index
    %c1_23 = arith.constant 1 : index
    %26 = vector.load %arg8[%c7, %c1_22, %c1_23] : memref<8x10x10xf32, #tpu.memory_space<vmem>>, vector<1x1x8xf32>
    %27 = vector.shape_cast %26 : vector<1x1x8xf32> to vector<1x8xf32>
    %28 = vector.shape_cast %25 : vector<1x8xf32> to vector<1x1x8xf32>
    tpu.vector_store %arg8[%c7, %c1_22, %c1_23], %28 {strides = array<i32>} : memref<8x10x10xf32, #tpu.memory_space<vmem>>, vector<1x1x8xf32>,
    %c0_24 = arith.constant 0 : index
    %c0_25 = arith.constant 0 : index
    %c1_26 = arith.constant 1 : index
    %c0_27 = arith.constant 0 : index
    %29 = vector.load %arg1[%c0_24, %c0_25, %c1_26, %c0_27] : memref<1x4x8x8xf32, #tpu.memory_space<vmem>>, vector<1x4x1x8xf32>
    %30 = vector.shape_cast %29 : vector<1x4x1x8xf32> to vector<4x8xf32>
    %c0_28 = arith.constant 0 : index
    %c2 = arith.constant 2 : index
    %c1_29 = arith.constant 1 : index
    %31 = vector.load %arg8[%c0_28, %c2, %c1_29] : memref<8x10x10xf32, #tpu.memory_space<vmem>>, vector<4x1x8xf32>
    %32 = vector.shape_cast %31 : vector<4x1x8xf32> to vector<4x8xf32>
    %33 = vector.shape_cast %30 : vector<4x8xf32> to vector<4x1x8xf32>
    tpu.vector_store %arg8[%c0_28, %c2, %c1_29], %33 {strides = array<i32>} : memref<8x10x10xf32, #tpu.memory_space<vmem>>, vector<4x1x8xf32>,
    %34 = vector.extract_strided_slice %5 {offsets = [0, 8], sizes = [1, 8], strides = [1, 1]} : vector<1x256xf32> to vector<1x8xf32>
    %c4_30 = arith.constant 4 : index
    %c2_31 = arith.constant 2 : index
    %c1_32 = arith.constant 1 : index
    %35 = vector.load %arg8[%c4_30, %c2_31, %c1_32] : memref<8x10x10xf32, #tpu.memory_space<vmem>>, vector<1x1x8xf32>
    %36 = vector.shape_cast %35 : vector<1x1x8xf32> to vector<1x8xf32>
    %37 = vector.shape_cast %34 : vector<1x8xf32> to vector<1x1x8xf32>
    tpu.vector_store %arg8[%c4_30, %c2_31, %c1_32], %37 {strides = array<i32>} : memref<8x10x10xf32, #tpu.memory_space<vmem>>, vector<1x1x8xf32>,
    %38 = vector.extract_strided_slice %5 {offsets = [0, 72], sizes = [1, 8], strides = [1, 1]} : vector<1x256xf32> to vector<1x8xf32>
    %c5_33 = arith.constant 5 : index
    %c2_34 = arith.constant 2 : index
    %c1_35 = arith.constant 1 : index
    %39 = vector.load %arg8[%c5_33, %c2_34, %c1_35] : memref<8x10x10xf32, #tpu.memory_space<vmem>>, vector<1x1x8xf32>
    %40 = vector.shape_cast %39 : vector<1x1x8xf32> to vector<1x8xf32>
    %41 = vector.shape_cast %38 : vector<1x8xf32> to vector<1x1x8xf32>
    tpu.vector_store %arg8[%c5_33, %c2_34, %c1_35], %41 {strides = array<i32>} : memref<8x10x10xf32, #tpu.memory_space<vmem>>, vector<1x1x8xf32>,
    %42 = vector.extract_strided_slice %5 {offsets = [0, 136], sizes = [1, 8], strides = [1, 1]} : vector<1x256xf32> to vector<1x8xf32>
    %c6_36 = arith.constant 6 : index
    %c2_37 = arith.constant 2 : index
    %c1_38 = arith.constant 1 : index
    %43 = vector.load %arg8[%c6_36, %c2_37, %c1_38] : memref<8x10x10xf32, #tpu.memory_space<vmem>>, vector<1x1x8xf32>
    %44 = vector.shape_cast %43 : vector<1x1x8xf32> to vector<1x8xf32>
    %45 = vector.shape_cast %42 : vector<1x8xf32> to vector<1x1x8xf32>
    tpu.vector_store %arg8[%c6_36, %c2_37, %c1_38], %45 {strides = array<i32>} : memref<8x10x10xf32, #tpu.memory_space<vmem>>, vector<1x1x8xf32>,
    %46 = vector.extract_strided_slice %5 {offsets = [0, 200], sizes = [1, 8], strides = [1, 1]} : vector<1x256xf32> to vector<1x8xf32>
    %c7_39 = arith.constant 7 : index
    %c2_40 = arith.constant 2 : index
    %c1_41 = arith.constant 1 : index
    %47 = vector.load %arg8[%c7_39, %c2_40, %c1_41] : memref<8x10x10xf32, #tpu.memory_space<vmem>>, vector<1x1x8xf32>
    %48 = vector.shape_cast %47 : vector<1x1x8xf32> to vector<1x8xf32>
    %49 = vector.shape_cast %46 : vector<1x8xf32> to vector<1x1x8xf32>
    tpu.vector_store %arg8[%c7_39, %c2_40, %c1_41], %49 {strides = array<i32>} : memref<8x10x10xf32, #tpu.memory_space<vmem>>, vector<1x1x8xf32>,
    %c0_42 = arith.constant 0 : index
    %c0_43 = arith.constant 0 : index
    %c2_44 = arith.constant 2 : index
    %c0_45 = arith.constant 0 : index
    %50 = vector.load %arg1[%c0_42, %c0_43, %c2_44, %c0_45] : memref<1x4x8x8xf32, #tpu.memory_space<vmem>>, vector<1x4x1x8xf32>
    %51 = vector.shape_cast %50 : vector<1x4x1x8xf32> to vector<4x8xf32>
    %c0_46 = arith.constant 0 : index
    %c3 = arith.constant 3 : index
    %c1_47 = arith.constant 1 : index
    %52 = vector.load %arg8[%c0_46, %c3, %c1_47] : memref<8x10x10xf32, #tpu.memory_space<vmem>>, vector<4x1x8xf32>
    %53 = vector.shape_cast %52 : vector<4x1x8xf32> to vector<4x8xf32>
    %54 = vector.shape_cast %51 : vector<4x8xf32> to vector<4x1x8xf32>
    tpu.vector_store %arg8[%c0_46, %c3, %c1_47], %54 {strides = array<i32>} : memref<8x10x10xf32, #tpu.memory_space<vmem>>, vector<4x1x8xf32>,
    %55 = vector.extract_strided_slice %5 {offsets = [0, 16], sizes = [1, 8], strides = [1, 1]} : vector<1x256xf32> to vector<1x8xf32>
    %c4_48 = arith.constant 4 : index
    %c3_49 = arith.constant 3 : index
    %c1_50 = arith.constant 1 : index
    %56 = vector.load %arg8[%c4_48, %c3_49, %c1_50] : memref<8x10x10xf32, #tpu.memory_space<vmem>>, vector<1x1x8xf32>
    %57 = vector.shape_cast %56 : vector<1x1x8xf32> to vector<1x8xf32>
    %58 = vector.shape_cast %55 : vector<1x8xf32> to vector<1x1x8xf32>
    tpu.vector_store %arg8[%c4_48, %c3_49, %c1_50], %58 {strides = array<i32>} : memref<8x10x10xf32, #tpu.memory_space<vmem>>, vector<1x1x8xf32>,
    %59 = vector.extract_strided_slice %5 {offsets = [0, 80], sizes = [1, 8], strides = [1, 1]} : vector<1x256xf32> to vector<1x8xf32>
    %c5_51 = arith.constant 5 : index
    %c3_52 = arith.constant 3 : index
    %c1_53 = arith.constant 1 : index
    %60 = vector.load %arg8[%c5_51, %c3_52, %c1_53] : memref<8x10x10xf32, #tpu.memory_space<vmem>>, vector<1x1x8xf32>
    %61 = vector.shape_cast %60 : vector<1x1x8xf32> to vector<1x8xf32>
    %62 = vector.shape_cast %59 : vector<1x8xf32> to vector<1x1x8xf32>
    tpu.vector_store %arg8[%c5_51, %c3_52, %c1_53], %62 {strides = array<i32>} : memref<8x10x10xf32, #tpu.memory_space<vmem>>, vector<1x1x8xf32>,
    %63 = vector.extract_strided_slice %5 {offsets = [0, 144], sizes = [1, 8], strides = [1, 1]} : vector<1x256xf32> to vector<1x8xf32>
    %c6_54 = arith.constant 6 : index
    %c3_55 = arith.constant 3 : index
    %c1_56 = arith.constant 1 : index
    %64 = vector.load %arg8[%c6_54, %c3_55, %c1_56] : memref<8x10x10xf32, #tpu.memory_space<vmem>>, vector<1x1x8xf32>
    %65 = vector.shape_cast %64 : vector<1x1x8xf32> to vector<1x8xf32>
    %66 = vector.shape_cast %63 : vector<1x8xf32> to vector<1x1x8xf32>
    tpu.vector_store %arg8[%c6_54, %c3_55, %c1_56], %66 {strides = array<i32>} : memref<8x10x10xf32, #tpu.memory_space<vmem>>, vector<1x1x8xf32>,
    %67 = vector.extract_strided_slice %5 {offsets = [0, 208], sizes = [1, 8], strides = [1, 1]} : vector<1x256xf32> to vector<1x8xf32>
    %c7_57 = arith.constant 7 : index
    %c3_58 = arith.constant 3 : index
    %c1_59 = arith.constant 1 : index
    %68 = vector.load %arg8[%c7_57, %c3_58, %c1_59] : memref<8x10x10xf32, #tpu.memory_space<vmem>>, vector<1x1x8xf32>
    %69 = vector.shape_cast %68 : vector<1x1x8xf32> to vector<1x8xf32>
    %70 = vector.shape_cast %67 : vector<1x8xf32> to vector<1x1x8xf32>
    tpu.vector_store %arg8[%c7_57, %c3_58, %c1_59], %70 {strides = array<i32>} : memref<8x10x10xf32, #tpu.memory_space<vmem>>, vector<1x1x8xf32>,
    %c0_60 = arith.constant 0 : index
    %c0_61 = arith.constant 0 : index
    %c3_62 = arith.constant 3 : index
    %c0_63 = arith.constant 0 : index
    %71 = vector.load %arg1[%c0_60, %c0_61, %c3_62, %c0_63] : memref<1x4x8x8xf32, #tpu.memory_space<vmem>>, vector<1x4x1x8xf32>
    %72 = vector.shape_cast %71 : vector<1x4x1x8xf32> to vector<4x8xf32>
    %c0_64 = arith.constant 0 : index
    %c4_65 = arith.constant 4 : index
    %c1_66 = arith.constant 1 : index
    %73 = vector.load %arg8[%c0_64, %c4_65, %c1_66] : memref<8x10x10xf32, #tpu.memory_space<vmem>>, vector<4x1x8xf32>
    %74 = vector.shape_cast %73 : vector<4x1x8xf32> to vector<4x8xf32>
    %75 = vector.shape_cast %72 : vector<4x8xf32> to vector<4x1x8xf32>
    tpu.vector_store %arg8[%c0_64, %c4_65, %c1_66], %75 {strides = array<i32>} : memref<8x10x10xf32, #tpu.memory_space<vmem>>, vector<4x1x8xf32>,
    %76 = vector.extract_strided_slice %5 {offsets = [0, 24], sizes = [1, 8], strides = [1, 1]} : vector<1x256xf32> to vector<1x8xf32>
    %c4_67 = arith.constant 4 : index
    %c4_68 = arith.constant 4 : index
    %c1_69 = arith.constant 1 : index
    %77 = vector.load %arg8[%c4_67, %c4_68, %c1_69] : memref<8x10x10xf32, #tpu.memory_space<vmem>>, vector<1x1x8xf32>
    %78 = vector.shape_cast %77 : vector<1x1x8xf32> to vector<1x8xf32>
    %79 = vector.shape_cast %76 : vector<1x8xf32> to vector<1x1x8xf32>
    tpu.vector_store %arg8[%c4_67, %c4_68, %c1_69], %79 {strides = array<i32>} : memref<8x10x10xf32, #tpu.memory_space<vmem>>, vector<1x1x8xf32>,
    %80 = vector.extract_strided_slice %5 {offsets = [0, 88], sizes = [1, 8], strides = [1, 1]} : vector<1x256xf32> to vector<1x8xf32>
    %c5_70 = arith.constant 5 : index
    %c4_71 = arith.constant 4 : index
    %c1_72 = arith.constant 1 : index
    %81 = vector.load %arg8[%c5_70, %c4_71, %c1_72] : memref<8x10x10xf32, #tpu.memory_space<vmem>>, vector<1x1x8xf32>
    %82 = vector.shape_cast %81 : vector<1x1x8xf32> to vector<1x8xf32>
    %83 = vector.shape_cast %80 : vector<1x8xf32> to vector<1x1x8xf32>
    tpu.vector_store %arg8[%c5_70, %c4_71, %c1_72], %83 {strides = array<i32>} : memref<8x10x10xf32, #tpu.memory_space<vmem>>, vector<1x1x8xf32>,
    %84 = vector.extract_strided_slice %5 {offsets = [0, 152], sizes = [1, 8], strides = [1, 1]} : vector<1x256xf32> to vector<1x8xf32>
    %c6_73 = arith.constant 6 : index
    %c4_74 = arith.constant 4 : index
    %c1_75 = arith.constant 1 : index
    %85 = vector.load %arg8[%c6_73, %c4_74, %c1_75] : memref<8x10x10xf32, #tpu.memory_space<vmem>>, vector<1x1x8xf32>
    %86 = vector.shape_cast %85 : vector<1x1x8xf32> to vector<1x8xf32>
    %87 = vector.shape_cast %84 : vector<1x8xf32> to vector<1x1x8xf32>
    tpu.vector_store %arg8[%c6_73, %c4_74, %c1_75], %87 {strides = array<i32>} : memref<8x10x10xf32, #tpu.memory_space<vmem>>, vector<1x1x8xf32>,
    %88 = vector.extract_strided_slice %5 {offsets = [0, 216], sizes = [1, 8], strides = [1, 1]} : vector<1x256xf32> to vector<1x8xf32>
    %c7_76 = arith.constant 7 : index
    %c4_77 = arith.constant 4 : index
    %c1_78 = arith.constant 1 : index
    %89 = vector.load %arg8[%c7_76, %c4_77, %c1_78] : memref<8x10x10xf32, #tpu.memory_space<vmem>>, vector<1x1x8xf32>
    %90 = vector.shape_cast %89 : vector<1x1x8xf32> to vector<1x8xf32>
    %91 = vector.shape_cast %88 : vector<1x8xf32> to vector<1x1x8xf32>
    tpu.vector_store %arg8[%c7_76, %c4_77, %c1_78], %91 {strides = array<i32>} : memref<8x10x10xf32, #tpu.memory_space<vmem>>, vector<1x1x8xf32>,
    %c0_79 = arith.constant 0 : index
    %c0_80 = arith.constant 0 : index
    %c4_81 = arith.constant 4 : index
    %c0_82 = arith.constant 0 : index
    %92 = vector.load %arg1[%c0_79, %c0_80, %c4_81, %c0_82] : memref<1x4x8x8xf32, #tpu.memory_space<vmem>>, vector<1x4x1x8xf32>
    %93 = vector.shape_cast %92 : vector<1x4x1x8xf32> to vector<4x8xf32>
    %c0_83 = arith.constant 0 : index
    %c5_84 = arith.constant 5 : index
    %c1_85 = arith.constant 1 : index
    %94 = vector.load %arg8[%c0_83, %c5_84, %c1_85] : memref<8x10x10xf32, #tpu.memory_space<vmem>>, vector<4x1x8xf32>
    %95 = vector.shape_cast %94 : vector<4x1x8xf32> to vector<4x8xf32>
    %96 = vector.shape_cast %93 : vector<4x8xf32> to vector<4x1x8xf32>
    tpu.vector_store %arg8[%c0_83, %c5_84, %c1_85], %96 {strides = array<i32>} : memref<8x10x10xf32, #tpu.memory_space<vmem>>, vector<4x1x8xf32>,
    %97 = vector.extract_strided_slice %5 {offsets = [0, 32], sizes = [1, 8], strides = [1, 1]} : vector<1x256xf32> to vector<1x8xf32>
    %c4_86 = arith.constant 4 : index
    %c5_87 = arith.constant 5 : index
    %c1_88 = arith.constant 1 : index
    %98 = vector.load %arg8[%c4_86, %c5_87, %c1_88] : memref<8x10x10xf32, #tpu.memory_space<vmem>>, vector<1x1x8xf32>
    %99 = vector.shape_cast %98 : vector<1x1x8xf32> to vector<1x8xf32>
    %100 = vector.shape_cast %97 : vector<1x8xf32> to vector<1x1x8xf32>
    tpu.vector_store %arg8[%c4_86, %c5_87, %c1_88], %100 {strides = array<i32>} : memref<8x10x10xf32, #tpu.memory_space<vmem>>, vector<1x1x8xf32>,
    %101 = vector.extract_strided_slice %5 {offsets = [0, 96], sizes = [1, 8], strides = [1, 1]} : vector<1x256xf32> to vector<1x8xf32>
    %c5_89 = arith.constant 5 : index
    %c5_90 = arith.constant 5 : index
    %c1_91 = arith.constant 1 : index
    %102 = vector.load %arg8[%c5_89, %c5_90, %c1_91] : memref<8x10x10xf32, #tpu.memory_space<vmem>>, vector<1x1x8xf32>
    %103 = vector.shape_cast %102 : vector<1x1x8xf32> to vector<1x8xf32>
    %104 = vector.shape_cast %101 : vector<1x8xf32> to vector<1x1x8xf32>
    tpu.vector_store %arg8[%c5_89, %c5_90, %c1_91], %104 {strides = array<i32>} : memref<8x10x10xf32, #tpu.memory_space<vmem>>, vector<1x1x8xf32>,
    %105 = vector.extract_strided_slice %5 {offsets = [0, 160], sizes = [1, 8], strides = [1, 1]} : vector<1x256xf32> to vector<1x8xf32>
    %c6_92 = arith.constant 6 : index
    %c5_93 = arith.constant 5 : index
    %c1_94 = arith.constant 1 : index
    %106 = vector.load %arg8[%c6_92, %c5_93, %c1_94] : memref<8x10x10xf32, #tpu.memory_space<vmem>>, vector<1x1x8xf32>
    %107 = vector.shape_cast %106 : vector<1x1x8xf32> to vector<1x8xf32>
    %108 = vector.shape_cast %105 : vector<1x8xf32> to vector<1x1x8xf32>
    tpu.vector_store %arg8[%c6_92, %c5_93, %c1_94], %108 {strides = array<i32>} : memref<8x10x10xf32, #tpu.memory_space<vmem>>, vector<1x1x8xf32>,
    %109 = vector.extract_strided_slice %5 {offsets = [0, 224], sizes = [1, 8], strides = [1, 1]} : vector<1x256xf32> to vector<1x8xf32>
    %c7_95 = arith.constant 7 : index
    %c5_96 = arith.constant 5 : index
    %c1_97 = arith.constant 1 : index
    %110 = vector.load %arg8[%c7_95, %c5_96, %c1_97] : memref<8x10x10xf32, #tpu.memory_space<vmem>>, vector<1x1x8xf32>
    %111 = vector.shape_cast %110 : vector<1x1x8xf32> to vector<1x8xf32>
    %112 = vector.shape_cast %109 : vector<1x8xf32> to vector<1x1x8xf32>
    tpu.vector_store %arg8[%c7_95, %c5_96, %c1_97], %112 {strides = array<i32>} : memref<8x10x10xf32, #tpu.memory_space<vmem>>, vector<1x1x8xf32>,
    %c0_98 = arith.constant 0 : index
    %c0_99 = arith.constant 0 : index
    %c5_100 = arith.constant 5 : index
    %c0_101 = arith.constant 0 : index
    %113 = vector.load %arg1[%c0_98, %c0_99, %c5_100, %c0_101] : memref<1x4x8x8xf32, #tpu.memory_space<vmem>>, vector<1x4x1x8xf32>
    %114 = vector.shape_cast %113 : vector<1x4x1x8xf32> to vector<4x8xf32>
    %c0_102 = arith.constant 0 : index
    %c6_103 = arith.constant 6 : index
    %c1_104 = arith.constant 1 : index
    %115 = vector.load %arg8[%c0_102, %c6_103, %c1_104] : memref<8x10x10xf32, #tpu.memory_space<vmem>>, vector<4x1x8xf32>
    %116 = vector.shape_cast %115 : vector<4x1x8xf32> to vector<4x8xf32>
    %117 = vector.shape_cast %114 : vector<4x8xf32> to vector<4x1x8xf32>
    tpu.vector_store %arg8[%c0_102, %c6_103, %c1_104], %117 {strides = array<i32>} : memref<8x10x10xf32, #tpu.memory_space<vmem>>, vector<4x1x8xf32>,
    %118 = vector.extract_strided_slice %5 {offsets = [0, 40], sizes = [1, 8], strides = [1, 1]} : vector<1x256xf32> to vector<1x8xf32>
    %c4_105 = arith.constant 4 : index
    %c6_106 = arith.constant 6 : index
    %c1_107 = arith.constant 1 : index
    %119 = vector.load %arg8[%c4_105, %c6_106, %c1_107] : memref<8x10x10xf32, #tpu.memory_space<vmem>>, vector<1x1x8xf32>
    %120 = vector.shape_cast %119 : vector<1x1x8xf32> to vector<1x8xf32>
    %121 = vector.shape_cast %118 : vector<1x8xf32> to vector<1x1x8xf32>
    tpu.vector_store %arg8[%c4_105, %c6_106, %c1_107], %121 {strides = array<i32>} : memref<8x10x10xf32, #tpu.memory_space<vmem>>, vector<1x1x8xf32>,
    %122 = vector.extract_strided_slice %5 {offsets = [0, 104], sizes = [1, 8], strides = [1, 1]} : vector<1x256xf32> to vector<1x8xf32>
    %c5_108 = arith.constant 5 : index
    %c6_109 = arith.constant 6 : index
    %c1_110 = arith.constant 1 : index
    %123 = vector.load %arg8[%c5_108, %c6_109, %c1_110] : memref<8x10x10xf32, #tpu.memory_space<vmem>>, vector<1x1x8xf32>
    %124 = vector.shape_cast %123 : vector<1x1x8xf32> to vector<1x8xf32>
    %125 = vector.shape_cast %122 : vector<1x8xf32> to vector<1x1x8xf32>
    tpu.vector_store %arg8[%c5_108, %c6_109, %c1_110], %125 {strides = array<i32>} : memref<8x10x10xf32, #tpu.memory_space<vmem>>, vector<1x1x8xf32>,
    %126 = vector.extract_strided_slice %5 {offsets = [0, 168], sizes = [1, 8], strides = [1, 1]} : vector<1x256xf32> to vector<1x8xf32>
    %c6_111 = arith.constant 6 : index
    %c6_112 = arith.constant 6 : index
    %c1_113 = arith.constant 1 : index
    %127 = vector.load %arg8[%c6_111, %c6_112, %c1_113] : memref<8x10x10xf32, #tpu.memory_space<vmem>>, vector<1x1x8xf32>
    %128 = vector.shape_cast %127 : vector<1x1x8xf32> to vector<1x8xf32>
    %129 = vector.shape_cast %126 : vector<1x8xf32> to vector<1x1x8xf32>
    tpu.vector_store %arg8[%c6_111, %c6_112, %c1_113], %129 {strides = array<i32>} : memref<8x10x10xf32, #tpu.memory_space<vmem>>, vector<1x1x8xf32>,
    %130 = vector.extract_strided_slice %5 {offsets = [0, 232], sizes = [1, 8], strides = [1, 1]} : vector<1x256xf32> to vector<1x8xf32>
    %c7_114 = arith.constant 7 : index
    %c6_115 = arith.constant 6 : index
    %c1_116 = arith.constant 1 : index
    %131 = vector.load %arg8[%c7_114, %c6_115, %c1_116] : memref<8x10x10xf32, #tpu.memory_space<vmem>>, vector<1x1x8xf32>
    %132 = vector.shape_cast %131 : vector<1x1x8xf32> to vector<1x8xf32>
    %133 = vector.shape_cast %130 : vector<1x8xf32> to vector<1x1x8xf32>
    tpu.vector_store %arg8[%c7_114, %c6_115, %c1_116], %133 {strides = array<i32>} : memref<8x10x10xf32, #tpu.memory_space<vmem>>, vector<1x1x8xf32>,
    %c0_117 = arith.constant 0 : index
    %c0_118 = arith.constant 0 : index
    %c6_119 = arith.constant 6 : index
    %c0_120 = arith.constant 0 : index
    %134 = vector.load %arg1[%c0_117, %c0_118, %c6_119, %c0_120] : memref<1x4x8x8xf32, #tpu.memory_space<vmem>>, vector<1x4x1x8xf32>
    %135 = vector.shape_cast %134 : vector<1x4x1x8xf32> to vector<4x8xf32>
    %c0_121 = arith.constant 0 : index
    %c7_122 = arith.constant 7 : index
    %c1_123 = arith.constant 1 : index
    %136 = vector.load %arg8[%c0_121, %c7_122, %c1_123] : memref<8x10x10xf32, #tpu.memory_space<vmem>>, vector<4x1x8xf32>
    %137 = vector.shape_cast %136 : vector<4x1x8xf32> to vector<4x8xf32>
    %138 = vector.shape_cast %135 : vector<4x8xf32> to vector<4x1x8xf32>
    tpu.vector_store %arg8[%c0_121, %c7_122, %c1_123], %138 {strides = array<i32>} : memref<8x10x10xf32, #tpu.memory_space<vmem>>, vector<4x1x8xf32>,
    %139 = vector.extract_strided_slice %5 {offsets = [0, 48], sizes = [1, 8], strides = [1, 1]} : vector<1x256xf32> to vector<1x8xf32>
    %c4_124 = arith.constant 4 : index
    %c7_125 = arith.constant 7 : index
    %c1_126 = arith.constant 1 : index
    %140 = vector.load %arg8[%c4_124, %c7_125, %c1_126] : memref<8x10x10xf32, #tpu.memory_space<vmem>>, vector<1x1x8xf32>
    %141 = vector.shape_cast %140 : vector<1x1x8xf32> to vector<1x8xf32>
    %142 = vector.shape_cast %139 : vector<1x8xf32> to vector<1x1x8xf32>
    tpu.vector_store %arg8[%c4_124, %c7_125, %c1_126], %142 {strides = array<i32>} : memref<8x10x10xf32, #tpu.memory_space<vmem>>, vector<1x1x8xf32>,
    %143 = vector.extract_strided_slice %5 {offsets = [0, 112], sizes = [1, 8], strides = [1, 1]} : vector<1x256xf32> to vector<1x8xf32>
    %c5_127 = arith.constant 5 : index
    %c7_128 = arith.constant 7 : index
    %c1_129 = arith.constant 1 : index
    %144 = vector.load %arg8[%c5_127, %c7_128, %c1_129] : memref<8x10x10xf32, #tpu.memory_space<vmem>>, vector<1x1x8xf32>
    %145 = vector.shape_cast %144 : vector<1x1x8xf32> to vector<1x8xf32>
    %146 = vector.shape_cast %143 : vector<1x8xf32> to vector<1x1x8xf32>
    tpu.vector_store %arg8[%c5_127, %c7_128, %c1_129], %146 {strides = array<i32>} : memref<8x10x10xf32, #tpu.memory_space<vmem>>, vector<1x1x8xf32>,
    %147 = vector.extract_strided_slice %5 {offsets = [0, 176], sizes = [1, 8], strides = [1, 1]} : vector<1x256xf32> to vector<1x8xf32>
    %c6_130 = arith.constant 6 : index
    %c7_131 = arith.constant 7 : index
    %c1_132 = arith.constant 1 : index
    %148 = vector.load %arg8[%c6_130, %c7_131, %c1_132] : memref<8x10x10xf32, #tpu.memory_space<vmem>>, vector<1x1x8xf32>
    %149 = vector.shape_cast %148 : vector<1x1x8xf32> to vector<1x8xf32>
    %150 = vector.shape_cast %147 : vector<1x8xf32> to vector<1x1x8xf32>
    tpu.vector_store %arg8[%c6_130, %c7_131, %c1_132], %150 {strides = array<i32>} : memref<8x10x10xf32, #tpu.memory_space<vmem>>, vector<1x1x8xf32>,
    %151 = vector.extract_strided_slice %5 {offsets = [0, 240], sizes = [1, 8], strides = [1, 1]} : vector<1x256xf32> to vector<1x8xf32>
    %c7_133 = arith.constant 7 : index
    %c7_134 = arith.constant 7 : index
    %c1_135 = arith.constant 1 : index
    %152 = vector.load %arg8[%c7_133, %c7_134, %c1_135] : memref<8x10x10xf32, #tpu.memory_space<vmem>>, vector<1x1x8xf32>
    %153 = vector.shape_cast %152 : vector<1x1x8xf32> to vector<1x8xf32>
    %154 = vector.shape_cast %151 : vector<1x8xf32> to vector<1x1x8xf32>
    tpu.vector_store %arg8[%c7_133, %c7_134, %c1_135], %154 {strides = array<i32>} : memref<8x10x10xf32, #tpu.memory_space<vmem>>, vector<1x1x8xf32>,
    %c0_136 = arith.constant 0 : index
    %c0_137 = arith.constant 0 : index
    %c7_138 = arith.constant 7 : index
    %c0_139 = arith.constant 0 : index
    %155 = vector.load %arg1[%c0_136, %c0_137, %c7_138, %c0_139] : memref<1x4x8x8xf32, #tpu.memory_space<vmem>>, vector<1x4x1x8xf32>
    %156 = vector.shape_cast %155 : vector<1x4x1x8xf32> to vector<4x8xf32>
    %c0_140 = arith.constant 0 : index
    %c8 = arith.constant 8 : index
    %c1_141 = arith.constant 1 : index
    %157 = vector.load %arg8[%c0_140, %c8, %c1_141] : memref<8x10x10xf32, #tpu.memory_space<vmem>>, vector<4x1x8xf32>
    %158 = vector.shape_cast %157 : vector<4x1x8xf32> to vector<4x8xf32>
    %159 = vector.shape_cast %156 : vector<4x8xf32> to vector<4x1x8xf32>
    tpu.vector_store %arg8[%c0_140, %c8, %c1_141], %159 {strides = array<i32>} : memref<8x10x10xf32, #tpu.memory_space<vmem>>, vector<4x1x8xf32>,
    %160 = vector.extract_strided_slice %5 {offsets = [0, 56], sizes = [1, 8], strides = [1, 1]} : vector<1x256xf32> to vector<1x8xf32>
    %c4_142 = arith.constant 4 : index
    %c8_143 = arith.constant 8 : index
    %c1_144 = arith.constant 1 : index
    %161 = vector.load %arg8[%c4_142, %c8_143, %c1_144] : memref<8x10x10xf32, #tpu.memory_space<vmem>>, vector<1x1x8xf32>
    %162 = vector.shape_cast %161 : vector<1x1x8xf32> to vector<1x8xf32>
    %163 = vector.shape_cast %160 : vector<1x8xf32> to vector<1x1x8xf32>
    tpu.vector_store %arg8[%c4_142, %c8_143, %c1_144], %163 {strides = array<i32>} : memref<8x10x10xf32, #tpu.memory_space<vmem>>, vector<1x1x8xf32>,
    %164 = vector.extract_strided_slice %5 {offsets = [0, 120], sizes = [1, 8], strides = [1, 1]} : vector<1x256xf32> to vector<1x8xf32>
    %c5_145 = arith.constant 5 : index
    %c8_146 = arith.constant 8 : index
    %c1_147 = arith.constant 1 : index
    %165 = vector.load %arg8[%c5_145, %c8_146, %c1_147] : memref<8x10x10xf32, #tpu.memory_space<vmem>>, vector<1x1x8xf32>
    %166 = vector.shape_cast %165 : vector<1x1x8xf32> to vector<1x8xf32>
    %167 = vector.shape_cast %164 : vector<1x8xf32> to vector<1x1x8xf32>
    tpu.vector_store %arg8[%c5_145, %c8_146, %c1_147], %167 {strides = array<i32>} : memref<8x10x10xf32, #tpu.memory_space<vmem>>, vector<1x1x8xf32>,
    %168 = vector.extract_strided_slice %5 {offsets = [0, 184], sizes = [1, 8], strides = [1, 1]} : vector<1x256xf32> to vector<1x8xf32>
    %c6_148 = arith.constant 6 : index
    %c8_149 = arith.constant 8 : index
    %c1_150 = arith.constant 1 : index
    %169 = vector.load %arg8[%c6_148, %c8_149, %c1_150] : memref<8x10x10xf32, #tpu.memory_space<vmem>>, vector<1x1x8xf32>
    %170 = vector.shape_cast %169 : vector<1x1x8xf32> to vector<1x8xf32>
    %171 = vector.shape_cast %168 : vector<1x8xf32> to vector<1x1x8xf32>
    tpu.vector_store %arg8[%c6_148, %c8_149, %c1_150], %171 {strides = array<i32>} : memref<8x10x10xf32, #tpu.memory_space<vmem>>, vector<1x1x8xf32>,
    %172 = vector.extract_strided_slice %5 {offsets = [0, 248], sizes = [1, 8], strides = [1, 1]} : vector<1x256xf32> to vector<1x8xf32>
    %c7_151 = arith.constant 7 : index
    %c8_152 = arith.constant 8 : index
    %c1_153 = arith.constant 1 : index
    %173 = vector.load %arg8[%c7_151, %c8_152, %c1_153] : memref<8x10x10xf32, #tpu.memory_space<vmem>>, vector<1x1x8xf32>
    %174 = vector.shape_cast %173 : vector<1x1x8xf32> to vector<1x8xf32>
    %175 = vector.shape_cast %172 : vector<1x8xf32> to vector<1x1x8xf32>
    tpu.vector_store %arg8[%c7_151, %c8_152, %c1_153], %175 {strides = array<i32>} : memref<8x10x10xf32, #tpu.memory_space<vmem>>, vector<1x1x8xf32>,
    %c0_154 = arith.constant 0 : index
    %c0_155 = arith.constant 0 : index
    %c0_156 = arith.constant 0 : index
    %176 = vector.load %arg8[%c0_154, %c0_155, %c0_156] : memref<8x10x10xf32, #tpu.memory_space<vmem>>, vector<8x1x8xf32>
    %177 = vector.shape_cast %176 : vector<8x1x8xf32> to vector<8x8xf32>
    %c0_157 = arith.constant 0 : index
    %c0_158 = arith.constant 0 : index
    %c0_159 = arith.constant 0 : index
    %178 = vector.load %arg9[%c0_157, %c0_158, %c0_159] : memref<3x8x80xf32, #tpu.memory_space<vmem>>, vector<1x8x8xf32>
    %179 = vector.shape_cast %178 : vector<1x8x8xf32> to vector<8x8xf32>
    %180 = vector.shape_cast %177 : vector<8x8xf32> to vector<1x8x8xf32>
    tpu.vector_store %arg9[%c0_157, %c0_158, %c0_159], %180 {strides = array<i32>} : memref<3x8x80xf32, #tpu.memory_space<vmem>>, vector<1x8x8xf32>,
    %c0_160 = arith.constant 0 : index
    %c1_161 = arith.constant 1 : index
    %c0_162 = arith.constant 0 : index
    %181 = vector.load %arg8[%c0_160, %c1_161, %c0_162] : memref<8x10x10xf32, #tpu.memory_space<vmem>>, vector<8x1x8xf32>
    %182 = vector.shape_cast %181 : vector<8x1x8xf32> to vector<8x8xf32>
    %c0_163 = arith.constant 0 : index
    %c0_164 = arith.constant 0 : index
    %c8_165 = arith.constant 8 : index
    %183 = vector.load %arg9[%c0_163, %c0_164, %c8_165] : memref<3x8x80xf32, #tpu.memory_space<vmem>>, vector<1x8x8xf32>
    %184 = vector.shape_cast %183 : vector<1x8x8xf32> to vector<8x8xf32>
    %185 = vector.shape_cast %182 : vector<8x8xf32> to vector<1x8x8xf32>
    tpu.vector_store %arg9[%c0_163, %c0_164, %c8_165], %185 {strides = array<i32>} : memref<3x8x80xf32, #tpu.memory_space<vmem>>, vector<1x8x8xf32>,
    %c0_166 = arith.constant 0 : index
    %c2_167 = arith.constant 2 : index
    %c0_168 = arith.constant 0 : index
    %186 = vector.load %arg8[%c0_166, %c2_167, %c0_168] : memref<8x10x10xf32, #tpu.memory_space<vmem>>, vector<8x1x8xf32>
    %187 = vector.shape_cast %186 : vector<8x1x8xf32> to vector<8x8xf32>
    %c0_169 = arith.constant 0 : index
    %c0_170 = arith.constant 0 : index
    %c16 = arith.constant 16 : index
    %188 = vector.load %arg9[%c0_169, %c0_170, %c16] : memref<3x8x80xf32, #tpu.memory_space<vmem>>, vector<1x8x8xf32>
    %189 = vector.shape_cast %188 : vector<1x8x8xf32> to vector<8x8xf32>
    %190 = vector.shape_cast %187 : vector<8x8xf32> to vector<1x8x8xf32>
    tpu.vector_store %arg9[%c0_169, %c0_170, %c16], %190 {strides = array<i32>} : memref<3x8x80xf32, #tpu.memory_space<vmem>>, vector<1x8x8xf32>,
    %c0_171 = arith.constant 0 : index
    %c3_172 = arith.constant 3 : index
    %c0_173 = arith.constant 0 : index
    %191 = vector.load %arg8[%c0_171, %c3_172, %c0_173] : memref<8x10x10xf32, #tpu.memory_space<vmem>>, vector<8x1x8xf32>
    %192 = vector.shape_cast %191 : vector<8x1x8xf32> to vector<8x8xf32>
    %c0_174 = arith.constant 0 : index
    %c0_175 = arith.constant 0 : index
    %c24 = arith.constant 24 : index
    %193 = vector.load %arg9[%c0_174, %c0_175, %c24] : memref<3x8x80xf32, #tpu.memory_space<vmem>>, vector<1x8x8xf32>
    %194 = vector.shape_cast %193 : vector<1x8x8xf32> to vector<8x8xf32>
    %195 = vector.shape_cast %192 : vector<8x8xf32> to vector<1x8x8xf32>
    tpu.vector_store %arg9[%c0_174, %c0_175, %c24], %195 {strides = array<i32>} : memref<3x8x80xf32, #tpu.memory_space<vmem>>, vector<1x8x8xf32>,
    %c0_176 = arith.constant 0 : index
    %c4_177 = arith.constant 4 : index
    %c0_178 = arith.constant 0 : index
    %196 = vector.load %arg8[%c0_176, %c4_177, %c0_178] : memref<8x10x10xf32, #tpu.memory_space<vmem>>, vector<8x1x8xf32>
    %197 = vector.shape_cast %196 : vector<8x1x8xf32> to vector<8x8xf32>
    %c0_179 = arith.constant 0 : index
    %c0_180 = arith.constant 0 : index
    %c32 = arith.constant 32 : index
    %198 = vector.load %arg9[%c0_179, %c0_180, %c32] : memref<3x8x80xf32, #tpu.memory_space<vmem>>, vector<1x8x8xf32>
    %199 = vector.shape_cast %198 : vector<1x8x8xf32> to vector<8x8xf32>
    %200 = vector.shape_cast %197 : vector<8x8xf32> to vector<1x8x8xf32>
    tpu.vector_store %arg9[%c0_179, %c0_180, %c32], %200 {strides = array<i32>} : memref<3x8x80xf32, #tpu.memory_space<vmem>>, vector<1x8x8xf32>,
    %c0_181 = arith.constant 0 : index
    %c5_182 = arith.constant 5 : index
    %c0_183 = arith.constant 0 : index
    %201 = vector.load %arg8[%c0_181, %c5_182, %c0_183] : memref<8x10x10xf32, #tpu.memory_space<vmem>>, vector<8x1x8xf32>
    %202 = vector.shape_cast %201 : vector<8x1x8xf32> to vector<8x8xf32>
    %c0_184 = arith.constant 0 : index
    %c0_185 = arith.constant 0 : index
    %c40 = arith.constant 40 : index
    %203 = vector.load %arg9[%c0_184, %c0_185, %c40] : memref<3x8x80xf32, #tpu.memory_space<vmem>>, vector<1x8x8xf32>
    %204 = vector.shape_cast %203 : vector<1x8x8xf32> to vector<8x8xf32>
    %205 = vector.shape_cast %202 : vector<8x8xf32> to vector<1x8x8xf32>
    tpu.vector_store %arg9[%c0_184, %c0_185, %c40], %205 {strides = array<i32>} : memref<3x8x80xf32, #tpu.memory_space<vmem>>, vector<1x8x8xf32>,
    %c0_186 = arith.constant 0 : index
    %c6_187 = arith.constant 6 : index
    %c0_188 = arith.constant 0 : index
    %206 = vector.load %arg8[%c0_186, %c6_187, %c0_188] : memref<8x10x10xf32, #tpu.memory_space<vmem>>, vector<8x1x8xf32>
    %207 = vector.shape_cast %206 : vector<8x1x8xf32> to vector<8x8xf32>
    %c0_189 = arith.constant 0 : index
    %c0_190 = arith.constant 0 : index
    %c48 = arith.constant 48 : index
    %208 = vector.load %arg9[%c0_189, %c0_190, %c48] : memref<3x8x80xf32, #tpu.memory_space<vmem>>, vector<1x8x8xf32>
    %209 = vector.shape_cast %208 : vector<1x8x8xf32> to vector<8x8xf32>
    %210 = vector.shape_cast %207 : vector<8x8xf32> to vector<1x8x8xf32>
    tpu.vector_store %arg9[%c0_189, %c0_190, %c48], %210 {strides = array<i32>} : memref<3x8x80xf32, #tpu.memory_space<vmem>>, vector<1x8x8xf32>,
    %c0_191 = arith.constant 0 : index
    %c7_192 = arith.constant 7 : index
    %c0_193 = arith.constant 0 : index
    %211 = vector.load %arg8[%c0_191, %c7_192, %c0_193] : memref<8x10x10xf32, #tpu.memory_space<vmem>>, vector<8x1x8xf32>
    %212 = vector.shape_cast %211 : vector<8x1x8xf32> to vector<8x8xf32>
    %c0_194 = arith.constant 0 : index
    %c0_195 = arith.constant 0 : index
    %c56 = arith.constant 56 : index
    %213 = vector.load %arg9[%c0_194, %c0_195, %c56] : memref<3x8x80xf32, #tpu.memory_space<vmem>>, vector<1x8x8xf32>
    %214 = vector.shape_cast %213 : vector<1x8x8xf32> to vector<8x8xf32>
    %215 = vector.shape_cast %212 : vector<8x8xf32> to vector<1x8x8xf32>
    tpu.vector_store %arg9[%c0_194, %c0_195, %c56], %215 {strides = array<i32>} : memref<3x8x80xf32, #tpu.memory_space<vmem>>, vector<1x8x8xf32>,
    %c0_196 = arith.constant 0 : index
    %c8_197 = arith.constant 8 : index
    %c0_198 = arith.constant 0 : index
    %216 = vector.load %arg8[%c0_196, %c8_197, %c0_198] : memref<8x10x10xf32, #tpu.memory_space<vmem>>, vector<8x1x8xf32>
    %217 = vector.shape_cast %216 : vector<8x1x8xf32> to vector<8x8xf32>
    %c0_199 = arith.constant 0 : index
    %c0_200 = arith.constant 0 : index
    %c64 = arith.constant 64 : index
    %218 = vector.load %arg9[%c0_199, %c0_200, %c64] : memref<3x8x80xf32, #tpu.memory_space<vmem>>, vector<1x8x8xf32>
    %219 = vector.shape_cast %218 : vector<1x8x8xf32> to vector<8x8xf32>
    %220 = vector.shape_cast %217 : vector<8x8xf32> to vector<1x8x8xf32>
    tpu.vector_store %arg9[%c0_199, %c0_200, %c64], %220 {strides = array<i32>} : memref<3x8x80xf32, #tpu.memory_space<vmem>>, vector<1x8x8xf32>,
    %c0_201 = arith.constant 0 : index
    %c9 = arith.constant 9 : index
    %c0_202 = arith.constant 0 : index
    %221 = vector.load %arg8[%c0_201, %c9, %c0_202] : memref<8x10x10xf32, #tpu.memory_space<vmem>>, vector<8x1x8xf32>
    %222 = vector.shape_cast %221 : vector<8x1x8xf32> to vector<8x8xf32>
    %c0_203 = arith.constant 0 : index
    %c0_204 = arith.constant 0 : index
    %c72 = arith.constant 72 : index
    %223 = vector.load %arg9[%c0_203, %c0_204, %c72] : memref<3x8x80xf32, #tpu.memory_space<vmem>>, vector<1x8x8xf32>
    %224 = vector.shape_cast %223 : vector<1x8x8xf32> to vector<8x8xf32>
    %225 = vector.shape_cast %222 : vector<8x8xf32> to vector<1x8x8xf32>
    tpu.vector_store %arg9[%c0_203, %c0_204, %c72], %225 {strides = array<i32>} : memref<3x8x80xf32, #tpu.memory_space<vmem>>, vector<1x8x8xf32>,
    %c0_205 = arith.constant 0 : index
    %c0_206 = arith.constant 0 : index
    %c1_207 = arith.constant 1 : index
    %226 = vector.load %arg8[%c0_205, %c0_206, %c1_207] : memref<8x10x10xf32, #tpu.memory_space<vmem>>, vector<8x1x8xf32>
    %227 = vector.shape_cast %226 : vector<8x1x8xf32> to vector<8x8xf32>
    %c1_208 = arith.constant 1 : index
    %c0_209 = arith.constant 0 : index
    %c0_210 = arith.constant 0 : index
    %228 = vector.load %arg9[%c1_208, %c0_209, %c0_210] : memref<3x8x80xf32, #tpu.memory_space<vmem>>, vector<1x8x8xf32>
    %229 = vector.shape_cast %228 : vector<1x8x8xf32> to vector<8x8xf32>
    %230 = vector.shape_cast %227 : vector<8x8xf32> to vector<1x8x8xf32>
    tpu.vector_store %arg9[%c1_208, %c0_209, %c0_210], %230 {strides = array<i32>} : memref<3x8x80xf32, #tpu.memory_space<vmem>>, vector<1x8x8xf32>,
    %c0_211 = arith.constant 0 : index
    %c1_212 = arith.constant 1 : index
    %c1_213 = arith.constant 1 : index
    %231 = vector.load %arg8[%c0_211, %c1_212, %c1_213] : memref<8x10x10xf32, #tpu.memory_space<vmem>>, vector<8x1x8xf32>
    %232 = vector.shape_cast %231 : vector<8x1x8xf32> to vector<8x8xf32>
    %c1_214 = arith.constant 1 : index
    %c0_215 = arith.constant 0 : index
    %c8_216 = arith.constant 8 : index
    %233 = vector.load %arg9[%c1_214, %c0_215, %c8_216] : memref<3x8x80xf32, #tpu.memory_space<vmem>>, vector<1x8x8xf32>
    %234 = vector.shape_cast %233 : vector<1x8x8xf32> to vector<8x8xf32>
    %235 = vector.shape_cast %232 : vector<8x8xf32> to vector<1x8x8xf32>
    tpu.vector_store %arg9[%c1_214, %c0_215, %c8_216], %235 {strides = array<i32>} : memref<3x8x80xf32, #tpu.memory_space<vmem>>, vector<1x8x8xf32>,
    %c0_217 = arith.constant 0 : index
    %c2_218 = arith.constant 2 : index
    %c1_219 = arith.constant 1 : index
    %236 = vector.load %arg8[%c0_217, %c2_218, %c1_219] : memref<8x10x10xf32, #tpu.memory_space<vmem>>, vector<8x1x8xf32>
    %237 = vector.shape_cast %236 : vector<8x1x8xf32> to vector<8x8xf32>
    %c1_220 = arith.constant 1 : index
    %c0_221 = arith.constant 0 : index
    %c16_222 = arith.constant 16 : index
    %238 = vector.load %arg9[%c1_220, %c0_221, %c16_222] : memref<3x8x80xf32, #tpu.memory_space<vmem>>, vector<1x8x8xf32>
    %239 = vector.shape_cast %238 : vector<1x8x8xf32> to vector<8x8xf32>
    %240 = vector.shape_cast %237 : vector<8x8xf32> to vector<1x8x8xf32>
    tpu.vector_store %arg9[%c1_220, %c0_221, %c16_222], %240 {strides = array<i32>} : memref<3x8x80xf32, #tpu.memory_space<vmem>>, vector<1x8x8xf32>,
    %c0_223 = arith.constant 0 : index
    %c3_224 = arith.constant 3 : index
    %c1_225 = arith.constant 1 : index
    %241 = vector.load %arg8[%c0_223, %c3_224, %c1_225] : memref<8x10x10xf32, #tpu.memory_space<vmem>>, vector<8x1x8xf32>
    %242 = vector.shape_cast %241 : vector<8x1x8xf32> to vector<8x8xf32>
    %c1_226 = arith.constant 1 : index
    %c0_227 = arith.constant 0 : index
    %c24_228 = arith.constant 24 : index
    %243 = vector.load %arg9[%c1_226, %c0_227, %c24_228] : memref<3x8x80xf32, #tpu.memory_space<vmem>>, vector<1x8x8xf32>
    %244 = vector.shape_cast %243 : vector<1x8x8xf32> to vector<8x8xf32>
    %245 = vector.shape_cast %242 : vector<8x8xf32> to vector<1x8x8xf32>
    tpu.vector_store %arg9[%c1_226, %c0_227, %c24_228], %245 {strides = array<i32>} : memref<3x8x80xf32, #tpu.memory_space<vmem>>, vector<1x8x8xf32>,
    %c0_229 = arith.constant 0 : index
    %c4_230 = arith.constant 4 : index
    %c1_231 = arith.constant 1 : index
    %246 = vector.load %arg8[%c0_229, %c4_230, %c1_231] : memref<8x10x10xf32, #tpu.memory_space<vmem>>, vector<8x1x8xf32>
    %247 = vector.shape_cast %246 : vector<8x1x8xf32> to vector<8x8xf32>
    %c1_232 = arith.constant 1 : index
    %c0_233 = arith.constant 0 : index
    %c32_234 = arith.constant 32 : index
    %248 = vector.load %arg9[%c1_232, %c0_233, %c32_234] : memref<3x8x80xf32, #tpu.memory_space<vmem>>, vector<1x8x8xf32>
    %249 = vector.shape_cast %248 : vector<1x8x8xf32> to vector<8x8xf32>
    %250 = vector.shape_cast %247 : vector<8x8xf32> to vector<1x8x8xf32>
    tpu.vector_store %arg9[%c1_232, %c0_233, %c32_234], %250 {strides = array<i32>} : memref<3x8x80xf32, #tpu.memory_space<vmem>>, vector<1x8x8xf32>,
    %c0_235 = arith.constant 0 : index
    %c5_236 = arith.constant 5 : index
    %c1_237 = arith.constant 1 : index
    %251 = vector.load %arg8[%c0_235, %c5_236, %c1_237] : memref<8x10x10xf32, #tpu.memory_space<vmem>>, vector<8x1x8xf32>
    %252 = vector.shape_cast %251 : vector<8x1x8xf32> to vector<8x8xf32>
    %c1_238 = arith.constant 1 : index
    %c0_239 = arith.constant 0 : index
    %c40_240 = arith.constant 40 : index
    %253 = vector.load %arg9[%c1_238, %c0_239, %c40_240] : memref<3x8x80xf32, #tpu.memory_space<vmem>>, vector<1x8x8xf32>
    %254 = vector.shape_cast %253 : vector<1x8x8xf32> to vector<8x8xf32>
    %255 = vector.shape_cast %252 : vector<8x8xf32> to vector<1x8x8xf32>
    tpu.vector_store %arg9[%c1_238, %c0_239, %c40_240], %255 {strides = array<i32>} : memref<3x8x80xf32, #tpu.memory_space<vmem>>, vector<1x8x8xf32>,
    %c0_241 = arith.constant 0 : index
    %c6_242 = arith.constant 6 : index
    %c1_243 = arith.constant 1 : index
    %256 = vector.load %arg8[%c0_241, %c6_242, %c1_243] : memref<8x10x10xf32, #tpu.memory_space<vmem>>, vector<8x1x8xf32>
    %257 = vector.shape_cast %256 : vector<8x1x8xf32> to vector<8x8xf32>
    %c1_244 = arith.constant 1 : index
    %c0_245 = arith.constant 0 : index
    %c48_246 = arith.constant 48 : index
    %258 = vector.load %arg9[%c1_244, %c0_245, %c48_246] : memref<3x8x80xf32, #tpu.memory_space<vmem>>, vector<1x8x8xf32>
    %259 = vector.shape_cast %258 : vector<1x8x8xf32> to vector<8x8xf32>
    %260 = vector.shape_cast %257 : vector<8x8xf32> to vector<1x8x8xf32>
    tpu.vector_store %arg9[%c1_244, %c0_245, %c48_246], %260 {strides = array<i32>} : memref<3x8x80xf32, #tpu.memory_space<vmem>>, vector<1x8x8xf32>,
    %c0_247 = arith.constant 0 : index
    %c7_248 = arith.constant 7 : index
    %c1_249 = arith.constant 1 : index
    %261 = vector.load %arg8[%c0_247, %c7_248, %c1_249] : memref<8x10x10xf32, #tpu.memory_space<vmem>>, vector<8x1x8xf32>
    %262 = vector.shape_cast %261 : vector<8x1x8xf32> to vector<8x8xf32>
    %c1_250 = arith.constant 1 : index
    %c0_251 = arith.constant 0 : index
    %c56_252 = arith.constant 56 : index
    %263 = vector.load %arg9[%c1_250, %c0_251, %c56_252] : memref<3x8x80xf32, #tpu.memory_space<vmem>>, vector<1x8x8xf32>
    %264 = vector.shape_cast %263 : vector<1x8x8xf32> to vector<8x8xf32>
    %265 = vector.shape_cast %262 : vector<8x8xf32> to vector<1x8x8xf32>
    tpu.vector_store %arg9[%c1_250, %c0_251, %c56_252], %265 {strides = array<i32>} : memref<3x8x80xf32, #tpu.memory_space<vmem>>, vector<1x8x8xf32>,
    %c0_253 = arith.constant 0 : index
    %c8_254 = arith.constant 8 : index
    %c1_255 = arith.constant 1 : index
    %266 = vector.load %arg8[%c0_253, %c8_254, %c1_255] : memref<8x10x10xf32, #tpu.memory_space<vmem>>, vector<8x1x8xf32>
    %267 = vector.shape_cast %266 : vector<8x1x8xf32> to vector<8x8xf32>
    %c1_256 = arith.constant 1 : index
    %c0_257 = arith.constant 0 : index
    %c64_258 = arith.constant 64 : index
    %268 = vector.load %arg9[%c1_256, %c0_257, %c64_258] : memref<3x8x80xf32, #tpu.memory_space<vmem>>, vector<1x8x8xf32>
    %269 = vector.shape_cast %268 : vector<1x8x8xf32> to vector<8x8xf32>
    %270 = vector.shape_cast %267 : vector<8x8xf32> to vector<1x8x8xf32>
    tpu.vector_store %arg9[%c1_256, %c0_257, %c64_258], %270 {strides = array<i32>} : memref<3x8x80xf32, #tpu.memory_space<vmem>>, vector<1x8x8xf32>,
    %c0_259 = arith.constant 0 : index
    %c9_260 = arith.constant 9 : index
    %c1_261 = arith.constant 1 : index
    %271 = vector.load %arg8[%c0_259, %c9_260, %c1_261] : memref<8x10x10xf32, #tpu.memory_space<vmem>>, vector<8x1x8xf32>
    %272 = vector.shape_cast %271 : vector<8x1x8xf32> to vector<8x8xf32>
    %c1_262 = arith.constant 1 : index
    %c0_263 = arith.constant 0 : index
    %c72_264 = arith.constant 72 : index
    %273 = vector.load %arg9[%c1_262, %c0_263, %c72_264] : memref<3x8x80xf32, #tpu.memory_space<vmem>>, vector<1x8x8xf32>
    %274 = vector.shape_cast %273 : vector<1x8x8xf32> to vector<8x8xf32>
    %275 = vector.shape_cast %272 : vector<8x8xf32> to vector<1x8x8xf32>
    tpu.vector_store %arg9[%c1_262, %c0_263, %c72_264], %275 {strides = array<i32>} : memref<3x8x80xf32, #tpu.memory_space<vmem>>, vector<1x8x8xf32>,
    %c0_265 = arith.constant 0 : index
    %c0_266 = arith.constant 0 : index
    %c2_267 = arith.constant 2 : index
    %276 = vector.load %arg8[%c0_265, %c0_266, %c2_267] : memref<8x10x10xf32, #tpu.memory_space<vmem>>, vector<8x1x8xf32>
    %277 = vector.shape_cast %276 : vector<8x1x8xf32> to vector<8x8xf32>
    %c2_268 = arith.constant 2 : index
    %c0_269 = arith.constant 0 : index
    %c0_270 = arith.constant 0 : index
    %278 = vector.load %arg9[%c2_268, %c0_269, %c0_270] : memref<3x8x80xf32, #tpu.memory_space<vmem>>, vector<1x8x8xf32>
    %279 = vector.shape_cast %278 : vector<1x8x8xf32> to vector<8x8xf32>
    %280 = vector.shape_cast %277 : vector<8x8xf32> to vector<1x8x8xf32>
    tpu.vector_store %arg9[%c2_268, %c0_269, %c0_270], %280 {strides = array<i32>} : memref<3x8x80xf32, #tpu.memory_space<vmem>>, vector<1x8x8xf32>,
    %c0_271 = arith.constant 0 : index
    %c1_272 = arith.constant 1 : index
    %c2_273 = arith.constant 2 : index
    %281 = vector.load %arg8[%c0_271, %c1_272, %c2_273] : memref<8x10x10xf32, #tpu.memory_space<vmem>>, vector<8x1x8xf32>
    %282 = vector.shape_cast %281 : vector<8x1x8xf32> to vector<8x8xf32>
    %c2_274 = arith.constant 2 : index
    %c0_275 = arith.constant 0 : index
    %c8_276 = arith.constant 8 : index
    %283 = vector.load %arg9[%c2_274, %c0_275, %c8_276] : memref<3x8x80xf32, #tpu.memory_space<vmem>>, vector<1x8x8xf32>
    %284 = vector.shape_cast %283 : vector<1x8x8xf32> to vector<8x8xf32>
    %285 = vector.shape_cast %282 : vector<8x8xf32> to vector<1x8x8xf32>
    tpu.vector_store %arg9[%c2_274, %c0_275, %c8_276], %285 {strides = array<i32>} : memref<3x8x80xf32, #tpu.memory_space<vmem>>, vector<1x8x8xf32>,
    %c0_277 = arith.constant 0 : index
    %c2_278 = arith.constant 2 : index
    %c2_279 = arith.constant 2 : index
    %286 = vector.load %arg8[%c0_277, %c2_278, %c2_279] : memref<8x10x10xf32, #tpu.memory_space<vmem>>, vector<8x1x8xf32>
    %287 = vector.shape_cast %286 : vector<8x1x8xf32> to vector<8x8xf32>
    %c2_280 = arith.constant 2 : index
    %c0_281 = arith.constant 0 : index
    %c16_282 = arith.constant 16 : index
    %288 = vector.load %arg9[%c2_280, %c0_281, %c16_282] : memref<3x8x80xf32, #tpu.memory_space<vmem>>, vector<1x8x8xf32>
    %289 = vector.shape_cast %288 : vector<1x8x8xf32> to vector<8x8xf32>
    %290 = vector.shape_cast %287 : vector<8x8xf32> to vector<1x8x8xf32>
    tpu.vector_store %arg9[%c2_280, %c0_281, %c16_282], %290 {strides = array<i32>} : memref<3x8x80xf32, #tpu.memory_space<vmem>>, vector<1x8x8xf32>,
    %c0_283 = arith.constant 0 : index
    %c3_284 = arith.constant 3 : index
    %c2_285 = arith.constant 2 : index
    %291 = vector.load %arg8[%c0_283, %c3_284, %c2_285] : memref<8x10x10xf32, #tpu.memory_space<vmem>>, vector<8x1x8xf32>
    %292 = vector.shape_cast %291 : vector<8x1x8xf32> to vector<8x8xf32>
    %c2_286 = arith.constant 2 : index
    %c0_287 = arith.constant 0 : index
    %c24_288 = arith.constant 24 : index
    %293 = vector.load %arg9[%c2_286, %c0_287, %c24_288] : memref<3x8x80xf32, #tpu.memory_space<vmem>>, vector<1x8x8xf32>
    %294 = vector.shape_cast %293 : vector<1x8x8xf32> to vector<8x8xf32>
    %295 = vector.shape_cast %292 : vector<8x8xf32> to vector<1x8x8xf32>
    tpu.vector_store %arg9[%c2_286, %c0_287, %c24_288], %295 {strides = array<i32>} : memref<3x8x80xf32, #tpu.memory_space<vmem>>, vector<1x8x8xf32>,
    %c0_289 = arith.constant 0 : index
    %c4_290 = arith.constant 4 : index
    %c2_291 = arith.constant 2 : index
    %296 = vector.load %arg8[%c0_289, %c4_290, %c2_291] : memref<8x10x10xf32, #tpu.memory_space<vmem>>, vector<8x1x8xf32>
    %297 = vector.shape_cast %296 : vector<8x1x8xf32> to vector<8x8xf32>
    %c2_292 = arith.constant 2 : index
    %c0_293 = arith.constant 0 : index
    %c32_294 = arith.constant 32 : index
    %298 = vector.load %arg9[%c2_292, %c0_293, %c32_294] : memref<3x8x80xf32, #tpu.memory_space<vmem>>, vector<1x8x8xf32>
    %299 = vector.shape_cast %298 : vector<1x8x8xf32> to vector<8x8xf32>
    %300 = vector.shape_cast %297 : vector<8x8xf32> to vector<1x8x8xf32>
    tpu.vector_store %arg9[%c2_292, %c0_293, %c32_294], %300 {strides = array<i32>} : memref<3x8x80xf32, #tpu.memory_space<vmem>>, vector<1x8x8xf32>,
    %c0_295 = arith.constant 0 : index
    %c5_296 = arith.constant 5 : index
    %c2_297 = arith.constant 2 : index
    %301 = vector.load %arg8[%c0_295, %c5_296, %c2_297] : memref<8x10x10xf32, #tpu.memory_space<vmem>>, vector<8x1x8xf32>
    %302 = vector.shape_cast %301 : vector<8x1x8xf32> to vector<8x8xf32>
    %c2_298 = arith.constant 2 : index
    %c0_299 = arith.constant 0 : index
    %c40_300 = arith.constant 40 : index
    %303 = vector.load %arg9[%c2_298, %c0_299, %c40_300] : memref<3x8x80xf32, #tpu.memory_space<vmem>>, vector<1x8x8xf32>
    %304 = vector.shape_cast %303 : vector<1x8x8xf32> to vector<8x8xf32>
    %305 = vector.shape_cast %302 : vector<8x8xf32> to vector<1x8x8xf32>
    tpu.vector_store %arg9[%c2_298, %c0_299, %c40_300], %305 {strides = array<i32>} : memref<3x8x80xf32, #tpu.memory_space<vmem>>, vector<1x8x8xf32>,
    %c0_301 = arith.constant 0 : index
    %c6_302 = arith.constant 6 : index
    %c2_303 = arith.constant 2 : index
    %306 = vector.load %arg8[%c0_301, %c6_302, %c2_303] : memref<8x10x10xf32, #tpu.memory_space<vmem>>, vector<8x1x8xf32>
    %307 = vector.shape_cast %306 : vector<8x1x8xf32> to vector<8x8xf32>
    %c2_304 = arith.constant 2 : index
    %c0_305 = arith.constant 0 : index
    %c48_306 = arith.constant 48 : index
    %308 = vector.load %arg9[%c2_304, %c0_305, %c48_306] : memref<3x8x80xf32, #tpu.memory_space<vmem>>, vector<1x8x8xf32>
    %309 = vector.shape_cast %308 : vector<1x8x8xf32> to vector<8x8xf32>
    %310 = vector.shape_cast %307 : vector<8x8xf32> to vector<1x8x8xf32>
    tpu.vector_store %arg9[%c2_304, %c0_305, %c48_306], %310 {strides = array<i32>} : memref<3x8x80xf32, #tpu.memory_space<vmem>>, vector<1x8x8xf32>,
    %c0_307 = arith.constant 0 : index
    %c7_308 = arith.constant 7 : index
    %c2_309 = arith.constant 2 : index
    %311 = vector.load %arg8[%c0_307, %c7_308, %c2_309] : memref<8x10x10xf32, #tpu.memory_space<vmem>>, vector<8x1x8xf32>
    %312 = vector.shape_cast %311 : vector<8x1x8xf32> to vector<8x8xf32>
    %c2_310 = arith.constant 2 : index
    %c0_311 = arith.constant 0 : index
    %c56_312 = arith.constant 56 : index
    %313 = vector.load %arg9[%c2_310, %c0_311, %c56_312] : memref<3x8x80xf32, #tpu.memory_space<vmem>>, vector<1x8x8xf32>
    %314 = vector.shape_cast %313 : vector<1x8x8xf32> to vector<8x8xf32>
    %315 = vector.shape_cast %312 : vector<8x8xf32> to vector<1x8x8xf32>
    tpu.vector_store %arg9[%c2_310, %c0_311, %c56_312], %315 {strides = array<i32>} : memref<3x8x80xf32, #tpu.memory_space<vmem>>, vector<1x8x8xf32>,
    %c0_313 = arith.constant 0 : index
    %c8_314 = arith.constant 8 : index
    %c2_315 = arith.constant 2 : index
    %316 = vector.load %arg8[%c0_313, %c8_314, %c2_315] : memref<8x10x10xf32, #tpu.memory_space<vmem>>, vector<8x1x8xf32>
    %317 = vector.shape_cast %316 : vector<8x1x8xf32> to vector<8x8xf32>
    %c2_316 = arith.constant 2 : index
    %c0_317 = arith.constant 0 : index
    %c64_318 = arith.constant 64 : index
    %318 = vector.load %arg9[%c2_316, %c0_317, %c64_318] : memref<3x8x80xf32, #tpu.memory_space<vmem>>, vector<1x8x8xf32>
    %319 = vector.shape_cast %318 : vector<1x8x8xf32> to vector<8x8xf32>
    %320 = vector.shape_cast %317 : vector<8x8xf32> to vector<1x8x8xf32>
    tpu.vector_store %arg9[%c2_316, %c0_317, %c64_318], %320 {strides = array<i32>} : memref<3x8x80xf32, #tpu.memory_space<vmem>>, vector<1x8x8xf32>,
    %c0_319 = arith.constant 0 : index
    %c9_320 = arith.constant 9 : index
    %c2_321 = arith.constant 2 : index
    %321 = vector.load %arg8[%c0_319, %c9_320, %c2_321] : memref<8x10x10xf32, #tpu.memory_space<vmem>>, vector<8x1x8xf32>
    %322 = vector.shape_cast %321 : vector<8x1x8xf32> to vector<8x8xf32>
    %c2_322 = arith.constant 2 : index
    %c0_323 = arith.constant 0 : index
    %c72_324 = arith.constant 72 : index
    %323 = vector.load %arg9[%c2_322, %c0_323, %c72_324] : memref<3x8x80xf32, #tpu.memory_space<vmem>>, vector<1x8x8xf32>
    %324 = vector.shape_cast %323 : vector<1x8x8xf32> to vector<8x8xf32>
    %325 = vector.shape_cast %322 : vector<8x8xf32> to vector<1x8x8xf32>
    tpu.vector_store %arg9[%c2_322, %c0_323, %c72_324], %325 {strides = array<i32>} : memref<3x8x80xf32, #tpu.memory_space<vmem>>, vector<1x8x8xf32>,
    %c0_325 = arith.constant 0 : index
    %c0_326 = arith.constant 0 : index
    %c0_327 = arith.constant 0 : index
    %326 = vector.load %arg9[%c0_325, %c0_326, %c0_327] : memref<3x8x80xf32, #tpu.memory_space<vmem>>, vector<1x8x64xf32>
    %327 = vector.shape_cast %326 : vector<1x8x64xf32> to vector<8x64xf32>
    %c0_328 = arith.constant 0 : index
    %c0_329 = arith.constant 0 : index
    %328 = vector.load %arg10[%c0_328, %c0_329] : memref<32x64xf32, #tpu.memory_space<vmem>>, vector<8x64xf32>
    tpu.vector_store %arg10[%c0_328, %c0_329], %327 {strides = array<i32>} : memref<32x64xf32, #tpu.memory_space<vmem>>, vector<8x64xf32>,
    %c1_330 = arith.constant 1 : index
    %c0_331 = arith.constant 0 : index
    %c0_332 = arith.constant 0 : index
    %329 = vector.load %arg9[%c1_330, %c0_331, %c0_332] : memref<3x8x80xf32, #tpu.memory_space<vmem>>, vector<1x8x64xf32>
    %330 = vector.shape_cast %329 : vector<1x8x64xf32> to vector<8x64xf32>
    %c8_333 = arith.constant 8 : index
    %c0_334 = arith.constant 0 : index
    %331 = vector.load %arg10[%c8_333, %c0_334] : memref<32x64xf32, #tpu.memory_space<vmem>>, vector<8x64xf32>
    tpu.vector_store %arg10[%c8_333, %c0_334], %330 {strides = array<i32>} : memref<32x64xf32, #tpu.memory_space<vmem>>, vector<8x64xf32>,
    %c0_335 = arith.constant 0 : index
    %c0_336 = arith.constant 0 : index
    %c8_337 = arith.constant 8 : index
    %332 = vector.load %arg9[%c0_335, %c0_336, %c8_337] : memref<3x8x80xf32, #tpu.memory_space<vmem>>, vector<1x8x64xf32>
    %333 = vector.shape_cast %332 : vector<1x8x64xf32> to vector<8x64xf32>
    %c16_338 = arith.constant 16 : index
    %c0_339 = arith.constant 0 : index
    %334 = vector.load %arg10[%c16_338, %c0_339] : memref<32x64xf32, #tpu.memory_space<vmem>>, vector<8x64xf32>
    tpu.vector_store %arg10[%c16_338, %c0_339], %333 {strides = array<i32>} : memref<32x64xf32, #tpu.memory_space<vmem>>, vector<8x64xf32>,
    %c1_340 = arith.constant 1 : index
    %c0_341 = arith.constant 0 : index
    %c8_342 = arith.constant 8 : index
    %335 = vector.load %arg9[%c1_340, %c0_341, %c8_342] : memref<3x8x80xf32, #tpu.memory_space<vmem>>, vector<1x8x64xf32>
    %336 = vector.shape_cast %335 : vector<1x8x64xf32> to vector<8x64xf32>
    %c24_343 = arith.constant 24 : index
    %c0_344 = arith.constant 0 : index
    %337 = vector.load %arg10[%c24_343, %c0_344] : memref<32x64xf32, #tpu.memory_space<vmem>>, vector<8x64xf32>
    tpu.vector_store %arg10[%c24_343, %c0_344], %336 {strides = array<i32>} : memref<32x64xf32, #tpu.memory_space<vmem>>, vector<8x64xf32>,
    %c0_345 = arith.constant 0 : index
    %c0_346 = arith.constant 0 : index
    %c0_347 = arith.constant 0 : index
    %338 = vector.load %arg5[%c0_345, %c0_346, %c0_347] : memref<4x4x32xf32, #tpu.memory_space<vmem>>, vector<1x4x32xf32>
    %339 = vector.shape_cast %338 : vector<1x4x32xf32> to vector<4x32xf32>
    %c0_348 = arith.constant 0 : index
    %c0_349 = arith.constant 0 : index
    %340 = vector.load %arg10[%c0_348, %c0_349] : memref<32x64xf32, #tpu.memory_space<vmem>>, vector<32x64xf32>
    %cst_350 = arith.constant dense<0.000000e+00> : vector<4x64xf32>
    %341 = tpu.matmul %339, %340, %cst_350 {dimension_numbers = #tpu.dot_dimension_numbers<[1], [0], [0], [1], [0, 0, 1, 1], [], []>} : vector<4x32xf32>, vector<32x64xf32>, vector<4x64xf32> -> vector<4x64xf32>
    %c0_351 = arith.constant 0 : index
    %c0_352 = arith.constant 0 : index
    %342 = vector.load %arg6[%c0_351, %c0_352] : memref<4x1xf32, #tpu.memory_space<vmem>>, vector<4x1xf32>
    %343 = vector.broadcast %342 : vector<4x1xf32> to vector<4x64xf32>
    %344 = arith.addf %341, %343 : vector<4x64xf32>
    %cst_353 = arith.constant 0.000000e+00 : f32
    %345 = vector.broadcast %cst_353 : f32 to vector<4x64xf32>
    %346 = arith.cmpf ogt, %344, %345 : vector<4x64xf32>
    %cst_354 = arith.constant 0.00999999977 : f32
    %347 = vector.broadcast %cst_354 : f32 to vector<4x64xf32>
    %348 = arith.mulf %347, %344 : vector<4x64xf32>
    %349 = arith.select %346, %344, %348 : vector<4x64xi1>, vector<4x64xf32>
    %c0_355 = arith.constant 0 : index
    %c0_356 = arith.constant 0 : index
    %c0_357 = arith.constant 0 : index
    %350 = vector.load %arg7[%c0_355, %c0_356, %c0_357] : memref<1x4x256xf32, #tpu.memory_space<vmem>>, vector<1x4x64xf32>
    %351 = vector.shape_cast %350 : vector<1x4x64xf32> to vector<4x64xf32>
    %352 = vector.shape_cast %349 : vector<4x64xf32> to vector<1x4x64xf32>
    tpu.vector_store %arg7[%c0_355, %c0_356, %c0_357], %352 {strides = array<i32>} : memref<1x4x256xf32, #tpu.memory_space<vmem>>, vector<1x4x64xf32>,
    %c1_358 = arith.constant 1 : index
    %c0_359 = arith.constant 0 : index
    %c0_360 = arith.constant 0 : index
    %353 = vector.load %arg9[%c1_358, %c0_359, %c0_360] : memref<3x8x80xf32, #tpu.memory_space<vmem>>, vector<1x8x64xf32>
    %354 = vector.shape_cast %353 : vector<1x8x64xf32> to vector<8x64xf32>
    %c0_361 = arith.constant 0 : index
    %c0_362 = arith.constant 0 : index
    %355 = vector.load %arg10[%c0_361, %c0_362] : memref<32x64xf32, #tpu.memory_space<vmem>>, vector<8x64xf32>
    tpu.vector_store %arg10[%c0_361, %c0_362], %354 {strides = array<i32>} : memref<32x64xf32, #tpu.memory_space<vmem>>, vector<8x64xf32>,
    %c2_363 = arith.constant 2 : index
    %c0_364 = arith.constant 0 : index
    %c0_365 = arith.constant 0 : index
    %356 = vector.load %arg9[%c2_363, %c0_364, %c0_365] : memref<3x8x80xf32, #tpu.memory_space<vmem>>, vector<1x8x64xf32>
    %357 = vector.shape_cast %356 : vector<1x8x64xf32> to vector<8x64xf32>
    %c8_366 = arith.constant 8 : index
    %c0_367 = arith.constant 0 : index
    %358 = vector.load %arg10[%c8_366, %c0_367] : memref<32x64xf32, #tpu.memory_space<vmem>>, vector<8x64xf32>
    tpu.vector_store %arg10[%c8_366, %c0_367], %357 {strides = array<i32>} : memref<32x64xf32, #tpu.memory_space<vmem>>, vector<8x64xf32>,
    %c1_368 = arith.constant 1 : index
    %c0_369 = arith.constant 0 : index
    %c8_370 = arith.constant 8 : index
    %359 = vector.load %arg9[%c1_368, %c0_369, %c8_370] : memref<3x8x80xf32, #tpu.memory_space<vmem>>, vector<1x8x64xf32>
    %360 = vector.shape_cast %359 : vector<1x8x64xf32> to vector<8x64xf32>
    %c16_371 = arith.constant 16 : index
    %c0_372 = arith.constant 0 : index
    %361 = vector.load %arg10[%c16_371, %c0_372] : memref<32x64xf32, #tpu.memory_space<vmem>>, vector<8x64xf32>
    tpu.vector_store %arg10[%c16_371, %c0_372], %360 {strides = array<i32>} : memref<32x64xf32, #tpu.memory_space<vmem>>, vector<8x64xf32>,
    %c2_373 = arith.constant 2 : index
    %c0_374 = arith.constant 0 : index
    %c8_375 = arith.constant 8 : index
    %362 = vector.load %arg9[%c2_373, %c0_374, %c8_375] : memref<3x8x80xf32, #tpu.memory_space<vmem>>, vector<1x8x64xf32>
    %363 = vector.shape_cast %362 : vector<1x8x64xf32> to vector<8x64xf32>
    %c24_376 = arith.constant 24 : index
    %c0_377 = arith.constant 0 : index
    %364 = vector.load %arg10[%c24_376, %c0_377] : memref<32x64xf32, #tpu.memory_space<vmem>>, vector<8x64xf32>
    tpu.vector_store %arg10[%c24_376, %c0_377], %363 {strides = array<i32>} : memref<32x64xf32, #tpu.memory_space<vmem>>, vector<8x64xf32>,
    %c1_378 = arith.constant 1 : index
    %c0_379 = arith.constant 0 : index
    %c0_380 = arith.constant 0 : index
    %365 = vector.load %arg5[%c1_378, %c0_379, %c0_380] : memref<4x4x32xf32, #tpu.memory_space<vmem>>, vector<1x4x32xf32>
    %366 = vector.shape_cast %365 : vector<1x4x32xf32> to vector<4x32xf32>
    %c0_381 = arith.constant 0 : index
    %c0_382 = arith.constant 0 : index
    %367 = vector.load %arg10[%c0_381, %c0_382] : memref<32x64xf32, #tpu.memory_space<vmem>>, vector<32x64xf32>
    %cst_383 = arith.constant dense<0.000000e+00> : vector<4x64xf32>
    %368 = tpu.matmul %366, %367, %cst_383 {dimension_numbers = #tpu.dot_dimension_numbers<[1], [0], [0], [1], [0, 0, 1, 1], [], []>} : vector<4x32xf32>, vector<32x64xf32>, vector<4x64xf32> -> vector<4x64xf32>
    %c0_384 = arith.constant 0 : index
    %c0_385 = arith.constant 0 : index
    %369 = vector.load %arg6[%c0_384, %c0_385] : memref<4x1xf32, #tpu.memory_space<vmem>>, vector<4x1xf32>
    %370 = vector.broadcast %369 : vector<4x1xf32> to vector<4x64xf32>
    %371 = arith.addf %368, %370 : vector<4x64xf32>
    %cst_386 = arith.constant 0.000000e+00 : f32
    %372 = vector.broadcast %cst_386 : f32 to vector<4x64xf32>
    %373 = arith.cmpf ogt, %371, %372 : vector<4x64xf32>
    %cst_387 = arith.constant 0.00999999977 : f32
    %374 = vector.broadcast %cst_387 : f32 to vector<4x64xf32>
    %375 = arith.mulf %374, %371 : vector<4x64xf32>
    %376 = arith.select %373, %371, %375 : vector<4x64xi1>, vector<4x64xf32>
    %c0_388 = arith.constant 0 : index
    %c0_389 = arith.constant 0 : index
    %c64_390 = arith.constant 64 : index
    %377 = vector.load %arg7[%c0_388, %c0_389, %c64_390] : memref<1x4x256xf32, #tpu.memory_space<vmem>>, vector<1x4x64xf32>
    %378 = vector.shape_cast %377 : vector<1x4x64xf32> to vector<4x64xf32>
    %379 = vector.shape_cast %376 : vector<4x64xf32> to vector<1x4x64xf32>
    tpu.vector_store %arg7[%c0_388, %c0_389, %c64_390], %379 {strides = array<i32>} : memref<1x4x256xf32, #tpu.memory_space<vmem>>, vector<1x4x64xf32>,
    %c0_391 = arith.constant 0 : index
    %c0_392 = arith.constant 0 : index
    %c8_393 = arith.constant 8 : index
    %380 = vector.load %arg9[%c0_391, %c0_392, %c8_393] : memref<3x8x80xf32, #tpu.memory_space<vmem>>, vector<1x8x64xf32>
    %381 = vector.shape_cast %380 : vector<1x8x64xf32> to vector<8x64xf32>
    %c0_394 = arith.constant 0 : index
    %c0_395 = arith.constant 0 : index
    %382 = vector.load %arg10[%c0_394, %c0_395] : memref<32x64xf32, #tpu.memory_space<vmem>>, vector<8x64xf32>
    tpu.vector_store %arg10[%c0_394, %c0_395], %381 {strides = array<i32>} : memref<32x64xf32, #tpu.memory_space<vmem>>, vector<8x64xf32>,
    %c1_396 = arith.constant 1 : index
    %c0_397 = arith.constant 0 : index
    %c8_398 = arith.constant 8 : index
    %383 = vector.load %arg9[%c1_396, %c0_397, %c8_398] : memref<3x8x80xf32, #tpu.memory_space<vmem>>, vector<1x8x64xf32>
    %384 = vector.shape_cast %383 : vector<1x8x64xf32> to vector<8x64xf32>
    %c8_399 = arith.constant 8 : index
    %c0_400 = arith.constant 0 : index
    %385 = vector.load %arg10[%c8_399, %c0_400] : memref<32x64xf32, #tpu.memory_space<vmem>>, vector<8x64xf32>
    tpu.vector_store %arg10[%c8_399, %c0_400], %384 {strides = array<i32>} : memref<32x64xf32, #tpu.memory_space<vmem>>, vector<8x64xf32>,
    %c0_401 = arith.constant 0 : index
    %c0_402 = arith.constant 0 : index
    %c16_403 = arith.constant 16 : index
    %386 = vector.load %arg9[%c0_401, %c0_402, %c16_403] : memref<3x8x80xf32, #tpu.memory_space<vmem>>, vector<1x8x64xf32>
    %387 = vector.shape_cast %386 : vector<1x8x64xf32> to vector<8x64xf32>
    %c16_404 = arith.constant 16 : index
    %c0_405 = arith.constant 0 : index
    %388 = vector.load %arg10[%c16_404, %c0_405] : memref<32x64xf32, #tpu.memory_space<vmem>>, vector<8x64xf32>
    tpu.vector_store %arg10[%c16_404, %c0_405], %387 {strides = array<i32>} : memref<32x64xf32, #tpu.memory_space<vmem>>, vector<8x64xf32>,
    %c1_406 = arith.constant 1 : index
    %c0_407 = arith.constant 0 : index
    %c16_408 = arith.constant 16 : index
    %389 = vector.load %arg9[%c1_406, %c0_407, %c16_408] : memref<3x8x80xf32, #tpu.memory_space<vmem>>, vector<1x8x64xf32>
    %390 = vector.shape_cast %389 : vector<1x8x64xf32> to vector<8x64xf32>
    %c24_409 = arith.constant 24 : index
    %c0_410 = arith.constant 0 : index
    %391 = vector.load %arg10[%c24_409, %c0_410] : memref<32x64xf32, #tpu.memory_space<vmem>>, vector<8x64xf32>
    tpu.vector_store %arg10[%c24_409, %c0_410], %390 {strides = array<i32>} : memref<32x64xf32, #tpu.memory_space<vmem>>, vector<8x64xf32>,
    %c2_411 = arith.constant 2 : index
    %c0_412 = arith.constant 0 : index
    %c0_413 = arith.constant 0 : index
    %392 = vector.load %arg5[%c2_411, %c0_412, %c0_413] : memref<4x4x32xf32, #tpu.memory_space<vmem>>, vector<1x4x32xf32>
    %393 = vector.shape_cast %392 : vector<1x4x32xf32> to vector<4x32xf32>
    %c0_414 = arith.constant 0 : index
    %c0_415 = arith.constant 0 : index
    %394 = vector.load %arg10[%c0_414, %c0_415] : memref<32x64xf32, #tpu.memory_space<vmem>>, vector<32x64xf32>
    %cst_416 = arith.constant dense<0.000000e+00> : vector<4x64xf32>
    %395 = tpu.matmul %393, %394, %cst_416 {dimension_numbers = #tpu.dot_dimension_numbers<[1], [0], [0], [1], [0, 0, 1, 1], [], []>} : vector<4x32xf32>, vector<32x64xf32>, vector<4x64xf32> -> vector<4x64xf32>
    %c0_417 = arith.constant 0 : index
    %c0_418 = arith.constant 0 : index
    %396 = vector.load %arg6[%c0_417, %c0_418] : memref<4x1xf32, #tpu.memory_space<vmem>>, vector<4x1xf32>
    %397 = vector.broadcast %396 : vector<4x1xf32> to vector<4x64xf32>
    %398 = arith.addf %395, %397 : vector<4x64xf32>
    %cst_419 = arith.constant 0.000000e+00 : f32
    %399 = vector.broadcast %cst_419 : f32 to vector<4x64xf32>
    %400 = arith.cmpf ogt, %398, %399 : vector<4x64xf32>
    %cst_420 = arith.constant 0.00999999977 : f32
    %401 = vector.broadcast %cst_420 : f32 to vector<4x64xf32>
    %402 = arith.mulf %401, %398 : vector<4x64xf32>
    %403 = arith.select %400, %398, %402 : vector<4x64xi1>, vector<4x64xf32>
    %c0_421 = arith.constant 0 : index
    %c0_422 = arith.constant 0 : index
    %c128 = arith.constant 128 : index
    %404 = vector.load %arg7[%c0_421, %c0_422, %c128] : memref<1x4x256xf32, #tpu.memory_space<vmem>>, vector<1x4x64xf32>
    %405 = vector.shape_cast %404 : vector<1x4x64xf32> to vector<4x64xf32>
    %406 = vector.shape_cast %403 : vector<4x64xf32> to vector<1x4x64xf32>
    tpu.vector_store %arg7[%c0_421, %c0_422, %c128], %406 {strides = array<i32>} : memref<1x4x256xf32, #tpu.memory_space<vmem>>, vector<1x4x64xf32>,
    %c1_423 = arith.constant 1 : index
    %c0_424 = arith.constant 0 : index
    %c8_425 = arith.constant 8 : index
    %407 = vector.load %arg9[%c1_423, %c0_424, %c8_425] : memref<3x8x80xf32, #tpu.memory_space<vmem>>, vector<1x8x64xf32>
    %408 = vector.shape_cast %407 : vector<1x8x64xf32> to vector<8x64xf32>
    %c0_426 = arith.constant 0 : index
    %c0_427 = arith.constant 0 : index
    %409 = vector.load %arg10[%c0_426, %c0_427] : memref<32x64xf32, #tpu.memory_space<vmem>>, vector<8x64xf32>
    tpu.vector_store %arg10[%c0_426, %c0_427], %408 {strides = array<i32>} : memref<32x64xf32, #tpu.memory_space<vmem>>, vector<8x64xf32>,
    %c2_428 = arith.constant 2 : index
    %c0_429 = arith.constant 0 : index
    %c8_430 = arith.constant 8 : index
    %410 = vector.load %arg9[%c2_428, %c0_429, %c8_430] : memref<3x8x80xf32, #tpu.memory_space<vmem>>, vector<1x8x64xf32>
    %411 = vector.shape_cast %410 : vector<1x8x64xf32> to vector<8x64xf32>
    %c8_431 = arith.constant 8 : index
    %c0_432 = arith.constant 0 : index
    %412 = vector.load %arg10[%c8_431, %c0_432] : memref<32x64xf32, #tpu.memory_space<vmem>>, vector<8x64xf32>
    tpu.vector_store %arg10[%c8_431, %c0_432], %411 {strides = array<i32>} : memref<32x64xf32, #tpu.memory_space<vmem>>, vector<8x64xf32>,
    %c1_433 = arith.constant 1 : index
    %c0_434 = arith.constant 0 : index
    %c16_435 = arith.constant 16 : index
    %413 = vector.load %arg9[%c1_433, %c0_434, %c16_435] : memref<3x8x80xf32, #tpu.memory_space<vmem>>, vector<1x8x64xf32>
    %414 = vector.shape_cast %413 : vector<1x8x64xf32> to vector<8x64xf32>
    %c16_436 = arith.constant 16 : index
    %c0_437 = arith.constant 0 : index
    %415 = vector.load %arg10[%c16_436, %c0_437] : memref<32x64xf32, #tpu.memory_space<vmem>>, vector<8x64xf32>
    tpu.vector_store %arg10[%c16_436, %c0_437], %414 {strides = array<i32>} : memref<32x64xf32, #tpu.memory_space<vmem>>, vector<8x64xf32>,
    %c2_438 = arith.constant 2 : index
    %c0_439 = arith.constant 0 : index
    %c16_440 = arith.constant 16 : index
    %416 = vector.load %arg9[%c2_438, %c0_439, %c16_440] : memref<3x8x80xf32, #tpu.memory_space<vmem>>, vector<1x8x64xf32>
    %417 = vector.shape_cast %416 : vector<1x8x64xf32> to vector<8x64xf32>
    %c24_441 = arith.constant 24 : index
    %c0_442 = arith.constant 0 : index
    %418 = vector.load %arg10[%c24_441, %c0_442] : memref<32x64xf32, #tpu.memory_space<vmem>>, vector<8x64xf32>
    tpu.vector_store %arg10[%c24_441, %c0_442], %417 {strides = array<i32>} : memref<32x64xf32, #tpu.memory_space<vmem>>, vector<8x64xf32>,
    %c3_443 = arith.constant 3 : index
    %c0_444 = arith.constant 0 : index
    %c0_445 = arith.constant 0 : index
    %419 = vector.load %arg5[%c3_443, %c0_444, %c0_445] : memref<4x4x32xf32, #tpu.memory_space<vmem>>, vector<1x4x32xf32>
    %420 = vector.shape_cast %419 : vector<1x4x32xf32> to vector<4x32xf32>
    %c0_446 = arith.constant 0 : index
    %c0_447 = arith.constant 0 : index
    %421 = vector.load %arg10[%c0_446, %c0_447] : memref<32x64xf32, #tpu.memory_space<vmem>>, vector<32x64xf32>
    %cst_448 = arith.constant dense<0.000000e+00> : vector<4x64xf32>
    %422 = tpu.matmul %420, %421, %cst_448 {dimension_numbers = #tpu.dot_dimension_numbers<[1], [0], [0], [1], [0, 0, 1, 1], [], []>} : vector<4x32xf32>, vector<32x64xf32>, vector<4x64xf32> -> vector<4x64xf32>
    %c0_449 = arith.constant 0 : index
    %c0_450 = arith.constant 0 : index
    %423 = vector.load %arg6[%c0_449, %c0_450] : memref<4x1xf32, #tpu.memory_space<vmem>>, vector<4x1xf32>
    %424 = vector.broadcast %423 : vector<4x1xf32> to vector<4x64xf32>
    %425 = arith.addf %422, %424 : vector<4x64xf32>
    %cst_451 = arith.constant 0.000000e+00 : f32
    %426 = vector.broadcast %cst_451 : f32 to vector<4x64xf32>
    %427 = arith.cmpf ogt, %425, %426 : vector<4x64xf32>
    %cst_452 = arith.constant 0.00999999977 : f32
    %428 = vector.broadcast %cst_452 : f32 to vector<4x64xf32>
    %429 = arith.mulf %428, %425 : vector<4x64xf32>
    %430 = arith.select %427, %425, %429 : vector<4x64xi1>, vector<4x64xf32>
    %c0_453 = arith.constant 0 : index
    %c0_454 = arith.constant 0 : index
    %c192 = arith.constant 192 : index
    %431 = vector.load %arg7[%c0_453, %c0_454, %c192] : memref<1x4x256xf32, #tpu.memory_space<vmem>>, vector<1x4x64xf32>
    %432 = vector.shape_cast %431 : vector<1x4x64xf32> to vector<4x64xf32>
    %433 = vector.shape_cast %430 : vector<4x64xf32> to vector<1x4x64xf32>
    tpu.vector_store %arg7[%c0_453, %c0_454, %c192], %433 {strides = array<i32>} : memref<1x4x256xf32, #tpu.memory_space<vmem>>, vector<1x4x64xf32>,
    return
  }
  func.func @transform_0(%arg0: i32) -> (i32, i32, i32, i32) {
    %c0_i32 = arith.constant 0 : i32
    %c0_i32_0 = arith.constant 0 : i32
    %c0_i32_1 = arith.constant 0 : i32
    %c0_i32_2 = arith.constant 0 : i32
    return %arg0, %c0_i32, %c0_i32_0, %c0_i32_1 : i32, i32, i32, i32
  }
  func.func @transform_1(%arg0: i32) -> (i32, i32, i32) {
    %c0_i32 = arith.constant 0 : i32
    %c0_i32_0 = arith.constant 0 : i32
    %c0_i32_1 = arith.constant 0 : i32
    return %arg0, %c0_i32, %c0_i32_0 : i32, i32, i32
  }
  func.func @transform_2(%arg0: i32) -> (i32, i32) {
    %c0_i32 = arith.constant 0 : i32
    %c0_i32_0 = arith.constant 0 : i32
    %c0_i32_1 = arith.constant 0 : i32
    return %c0_i32, %c0_i32_0 : i32, i32
  }
  func.func @transform_3(%arg0: i32) -> (i32, i32) {
    %c0_i32 = arith.constant 0 : i32
    %c0_i32_0 = arith.constant 0 : i32
    %c0_i32_1 = arith.constant 0 : i32
    return %c0_i32, %c0_i32_0 : i32, i32
  }
  func.func @transform_4(%arg0: i32) -> (i32, i32, i32) {
    %c0_i32 = arith.constant 0 : i32
    %c0_i32_0 = arith.constant 0 : i32
    %c0_i32_1 = arith.constant 0 : i32
    %c0_i32_2 = arith.constant 0 : i32
    return %c0_i32, %c0_i32_0, %c0_i32_1 : i32, i32, i32
  }
  func.func @transform_5(%arg0: i32) -> (i32, i32) {
    %c0_i32 = arith.constant 0 : i32
    %c0_i32_0 = arith.constant 0 : i32
    %c0_i32_1 = arith.constant 0 : i32
    return %c0_i32, %c0_i32_0 : i32, i32
  }
  func.func @transform_6(%arg0: i32) -> (i32, i32, i32) {
    %c0_i32 = arith.constant 0 : i32
    %c0_i32_0 = arith.constant 0 : i32
    %c0_i32_1 = arith.constant 0 : i32
    return %arg0, %c0_i32, %c0_i32_0 : i32, i32, i32
  }
}

</mosaic_0001>

<llo_original>
// kernel: cnn_decode_layer_forward.1
$region0: #{cnn_decode_layer_forward.1}
  #allocation0 [shape = 'u32[]', space=smem, size = 0x4, offset = 0x4, fixed_abs, tag = 'smem constant byte address 0x4 - core index']
  #allocation1 [shape = 'u32[144,128]{1,0:T(1,128)}', space=vmem, size = 0x12000, scoped, tag = 'internal scratch']
  #allocation2 [shape = 'f32[8,10,10]{2,1,0:T(8,128)}', space=vmem, size = 0x10000, scoped, tag = 'scratch operand']
  #allocation3 [shape = 'f32[3,8,80]{2,1,0:T(8,128)}', space=vmem, size = 0x3000, scoped, tag = 'scratch operand']
  #allocation4 [shape = 'f32[32,64]{1,0:T(8,128)}', space=vmem, size = 0x4000, scoped, tag = 'scratch operand']
  %s0 = inlined_call_operand.vmem [shape: f32[2,4,8,8], index: 0, kind: input, shape index: {}]
  %s1 = inlined_call_operand.vmem [shape: f32[2,1,32], index: 1, kind: input, shape index: {}]
  %s2 = inlined_call_operand.vmem [shape: f32[32,256], index: 2, kind: input, shape index: {}]
  %s3 = inlined_call_operand.vmem [shape: f32[1,256], index: 3, kind: input, shape index: {}]
  %s4 = inlined_call_operand.vmem [shape: f32[4,4,32], index: 4, kind: input, shape index: {}]
  %s5 = inlined_call_operand.vmem [shape: f32[4,1], index: 5, kind: input, shape index: {}]
  %s6 = inlined_call_operand.vmem [shape: f32[2,4,256], index: 6, kind: output, shape index: {}]
  %s7 = sld [smem:[#allocation0]]
  $region57: #{cnn_decode_layer_forward.1} parent=0
    _
  %s9 = ssub.s32 1, %s7
  %s10 = scalar_select 0, %s9, %s7
  loop: start=0, step=1, limit=4
  $region2: #{cnn_decode_layer_forward.1} parent=0 // loop_pre_header
    _
  $region3: #{cnn_decode_layer_forward.1} parent=0 // loop_header
    %s12 = sphi 0, %s16
    %p13 = scmp.ge.s32.totalorder %s12, 4
    %s22 = sphi 0, %s24
    %s25 = sphi 0, %s22
    %s26 = sphi 0, %s25
    %s42 = sphi 0, %s26
    %s48 = sphi 0, %s50
    %s51 = sphi 0, %s48
    %s52 = sphi 0, %s51
    %s68 = sphi 0, %s52
    %s72 = sphi 0, %s72
    %s74 = sphi 0, %s72
    %s75 = sphi 0, %s74
    %s89 = sphi 0, %s75
    %s93 = sphi 0, %s93
    %s95 = sphi 0, %s93
    %s96 = sphi 0, %s95
    %s110 = sphi 0, %s96
    %s114 = sphi 0, %s114
    %s116 = sphi 0, %s114
    %s117 = sphi 0, %s116
    %s131 = sphi 0, %s117
    %s135 = sphi 0, %s135
    %s137 = sphi 0, %s135
    %s138 = sphi 0, %s137
    %s152 = sphi 0, %s138
    %s158 = sphi 0, %s160
    %s161 = sphi 0, %s158
    %s162 = sphi 0, %s161
    %s178 = sphi 0, %s162
  $region4: #{cnn_decode_layer_forward.1} parent=0 // loop_header_branch
    %15 = sbr.rel (%p13) target = $region8
  $region5: #{cnn_decode_layer_forward.1} parent=0 // loop_body
    %s17 = ssub.s32 %s12, 1
    %s18 = ssub.s32 %s12, 2
    %s19 = sadd.s32 %s12, 1
    %s20 = ssub.s32 %s12, %s19
    %p21 = scmp.eq.s32.totalorder %s20, 0
    %s23 = sadd.s32 %s22, 1
    %s24 = scalar_select %p21, %s22, %s23
    %p27 = pneg %p21
    %p28 = scmp.eq.s32.totalorder %s12, 1
    %p29 = por %p27, %p28
    %p30 = scmp.ne.s32.totalorder %s22, %s25
    %p31 = scmp.eq.s32.totalorder %s12, 0
    %p32 = por %p30, %p31
    %p33 = scmp.ne.s32.totalorder %s22, %s25
    %p34 = scmp.eq.s32.totalorder %s17, 1
    %p35 = por %p33, %p34
    %p36 = scmp.ne.s32.totalorder %s25, %s26
    %p37 = scmp.eq.s32.totalorder %s17, 0
    %p38 = por %p36, %p37
    %p39 = scmp.ne.s32.totalorder %s25, %s26
    %p40 = scmp.eq.s32.totalorder %s18, 1
    %p41 = por %p39, %p40
    %p43 = scmp.ne.s32.totalorder %s26, %s42
    %p44 = scmp.eq.s32.totalorder %s18, 0
    %p45 = por %p43, %p44
    %s46 = ssub.s32 %s12, %s19
    %p47 = scmp.eq.s32.totalorder %s46, 0
    %s49 = sadd.s32 %s48, 1
    %s50 = scalar_select %p47, %s48, %s49
    %p53 = pneg %p47
    %p54 = scmp.eq.s32.totalorder %s12, 1
    %p55 = por %p53, %p54
    %p56 = scmp.ne.s32.totalorder %s48, %s51
    %p57 = scmp.eq.s32.totalorder %s12, 0
    %p58 = por %p56, %p57
    %p59 = scmp.ne.s32.totalorder %s48, %s51
    %p60 = scmp.eq.s32.totalorder %s17, 1
    %p61 = por %p59, %p60
    %p62 = scmp.ne.s32.totalorder %s51, %s52
    %p63 = scmp.eq.s32.totalorder %s17, 0
    %p64 = por %p62, %p63
    %p65 = scmp.ne.s32.totalorder %s51, %s52
    %p66 = scmp.eq.s32.totalorder %s18, 1
    %p67 = por %p65, %p66
    %p69 = scmp.ne.s32.totalorder %s52, %s68
    %p70 = scmp.eq.s32.totalorder %s18, 0
    %p71 = por %p69, %p70
    %s73 = sadd.s32 %s72, 1
    %p76 = scmp.eq.s32.totalorder %s12, 1
    %p77 = scmp.ne.s32.totalorder %s72, %s74
    %p78 = scmp.eq.s32.totalorder %s12, 0
    %p79 = por %p77, %p78
    %p80 = scmp.ne.s32.totalorder %s72, %s74
    %p81 = scmp.eq.s32.totalorder %s17, 1
    %p82 = por %p80, %p81
    %p83 = scmp.ne.s32.totalorder %s74, %s75
    %p84 = scmp.eq.s32.totalorder %s17, 0
    %p85 = por %p83, %p84
    %p86 = scmp.ne.s32.totalorder %s74, %s75
    %p87 = scmp.eq.s32.totalorder %s18, 1
    %p88 = por %p86, %p87
    %p90 = scmp.ne.s32.totalorder %s75, %s89
    %p91 = scmp.eq.s32.totalorder %s18, 0
    %p92 = por %p90, %p91
    %s94 = sadd.s32 %s93, 1
    %p97 = scmp.eq.s32.totalorder %s12, 1
    %p98 = scmp.ne.s32.totalorder %s93, %s95
    %p99 = scmp.eq.s32.totalorder %s12, 0
    %p100 = por %p98, %p99
    %p101 = scmp.ne.s32.totalorder %s93, %s95
    %p102 = scmp.eq.s32.totalorder %s17, 1
    %p103 = por %p101, %p102
    %p104 = scmp.ne.s32.totalorder %s95, %s96
    %p105 = scmp.eq.s32.totalorder %s17, 0
    %p106 = por %p104, %p105
    %p107 = scmp.ne.s32.totalorder %s95, %s96
    %p108 = scmp.eq.s32.totalorder %s18, 1
    %p109 = por %p107, %p108
    %p111 = scmp.ne.s32.totalorder %s96, %s110
    %p112 = scmp.eq.s32.totalorder %s18, 0
    %p113 = por %p111, %p112
    %s115 = sadd.s32 %s114, 1
    %p118 = scmp.eq.s32.totalorder %s12, 1
    %p119 = scmp.ne.s32.totalorder %s114, %s116
    %p120 = scmp.eq.s32.totalorder %s12, 0
    %p121 = por %p119, %p120
    %p122 = scmp.ne.s32.totalorder %s114, %s116
    %p123 = scmp.eq.s32.totalorder %s17, 1
    %p124 = por %p122, %p123
    %p125 = scmp.ne.s32.totalorder %s116, %s117
    %p126 = scmp.eq.s32.totalorder %s17, 0
    %p127 = por %p125, %p126
    %p128 = scmp.ne.s32.totalorder %s116, %s117
    %p129 = scmp.eq.s32.totalorder %s18, 1
    %p130 = por %p128, %p129
    %p132 = scmp.ne.s32.totalorder %s117, %s131
    %p133 = scmp.eq.s32.totalorder %s18, 0
    %p134 = por %p132, %p133
    %s136 = sadd.s32 %s135, 1
    %p139 = scmp.eq.s32.totalorder %s12, 1
    %p140 = scmp.ne.s32.totalorder %s135, %s137
    %p141 = scmp.eq.s32.totalorder %s12, 0
    %p142 = por %p140, %p141
    %p143 = scmp.ne.s32.totalorder %s135, %s137
    %p144 = scmp.eq.s32.totalorder %s17, 1
    %p145 = por %p143, %p144
    %p146 = scmp.ne.s32.totalorder %s137, %s138
    %p147 = scmp.eq.s32.totalorder %s17, 0
    %p148 = por %p146, %p147
    %p149 = scmp.ne.s32.totalorder %s137, %s138
    %p150 = scmp.eq.s32.totalorder %s18, 1
    %p151 = por %p149, %p150
    %p153 = scmp.ne.s32.totalorder %s138, %s152
    %p154 = scmp.eq.s32.totalorder %s18, 0
    %p155 = por %p153, %p154
    %s156 = ssub.s32 %s12, %s19
    %p157 = scmp.eq.s32.totalorder %s156, 0
    %s159 = sadd.s32 %s158, 1
    %s160 = scalar_select %p157, %s158, %s159
    %p163 = pneg %p157
    %p164 = scmp.eq.s32.totalorder %s12, 1
    %p165 = por %p163, %p164
    %p166 = scmp.ne.s32.totalorder %s158, %s161
    %p167 = scmp.eq.s32.totalorder %s12, 0
    %p168 = por %p166, %p167
    %p169 = scmp.ne.s32.totalorder %s158, %s161
    %p170 = scmp.eq.s32.totalorder %s17, 1
    %p171 = por %p169, %p170
    %p172 = scmp.ne.s32.totalorder %s161, %s162
    %p173 = scmp.eq.s32.totalorder %s17, 0
    %p174 = por %p172, %p173
    %p175 = scmp.ne.s32.totalorder %s161, %s162
    %p176 = scmp.eq.s32.totalorder %s18, 1
    %p177 = por %p175, %p176
    %p179 = scmp.ne.s32.totalorder %s162, %s178
    %p180 = scmp.eq.s32.totalorder %s18, 0
    %p181 = por %p179, %p180
    %p182 = scmp.le.s32.totalorder 1, %s12
    %p183 = scmp.lt.s32.totalorder %s12, 3
    %p184 = pnand %p182, %p183
    %p185 = pneg %p184
    // Predicated region
    $region9: #{cnn_decode_layer_forward.1} parent=5 // pred_check
      _
    $region10: #{cnn_decode_layer_forward.1} parent=5 // pred_check_branch
      %187 = sbr.rel (%p184) target = $region12
    $region11: #{cnn_decode_layer_forward.1} parent=5 // pred_region
      %s188 = ssub.s32 %s12, 1
      // Predicated region
      $region13: #{cnn_decode_layer_forward.1} parent=11 // pred_check
        %p189 = pneg %p85
      $region14: #{cnn_decode_layer_forward.1} parent=11 // pred_check_branch
        %191 = sbr.rel (%p189) target = $region16
      $region15: #{cnn_decode_layer_forward.1} parent=11 // pred_region
        _
      $region16: #{cnn_decode_layer_forward.1} parent=11 // pred_fallthru
        _
      // Predicated region
      $region17: #{cnn_decode_layer_forward.1} parent=11 // pred_check
        %p192 = pneg %p106
      $region18: #{cnn_decode_layer_forward.1} parent=11 // pred_check_branch
        %194 = sbr.rel (%p192) target = $region20
      $region19: #{cnn_decode_layer_forward.1} parent=11 // pred_region
        _
      $region20: #{cnn_decode_layer_forward.1} parent=11 // pred_fallthru
        _
      // Predicated region
      $region21: #{cnn_decode_layer_forward.1} parent=11 // pred_check
        %p195 = pneg %p127
      $region22: #{cnn_decode_layer_forward.1} parent=11 // pred_check_branch
        %197 = sbr.rel (%p195) target = $region24
      $region23: #{cnn_decode_layer_forward.1} parent=11 // pred_region
        _
      $region24: #{cnn_decode_layer_forward.1} parent=11 // pred_fallthru
        _
      // Predicated region
      $region25: #{cnn_decode_layer_forward.1} parent=11 // pred_check
        %p198 = pneg %p148
      $region26: #{cnn_decode_layer_forward.1} parent=11 // pred_check_branch
        %200 = sbr.rel (%p198) target = $region28
      $region27: #{cnn_decode_layer_forward.1} parent=11 // pred_region
        _
      $region28: #{cnn_decode_layer_forward.1} parent=11 // pred_fallthru
        _
    $region12: #{cnn_decode_layer_forward.1} parent=5 // pred_fallthru
      _
    %p201 = scmp.lt.s32.totalorder %s12, 2
    // Predicated region
    $region29: #{cnn_decode_layer_forward.1} parent=5 // pred_check
      %p202 = pneg %p201
    $region30: #{cnn_decode_layer_forward.1} parent=5 // pred_check_branch
      %204 = sbr.rel (%p202) target = $region32
    $region31: #{cnn_decode_layer_forward.1} parent=5 // pred_region
      // Predicated region
      $region33: #{cnn_decode_layer_forward.1} parent=31 // pred_check
        %p205 = pneg %p32
      $region34: #{cnn_decode_layer_forward.1} parent=31 // pred_check_branch
        %207 = sbr.rel (%p205) target = $region36
      $region35: #{cnn_decode_layer_forward.1} parent=31 // pred_region
        %p208 = scmp.lt.s32.totalorder %s12, 1
        %s209 = scalar_select %p208, %s12, 1
        %s210 = smul.addr %s209, 4
        %s211 = smul.addr %s210, 8
        %s212 = scalar_lea.vmem %s0, %s211
      $region36: #{cnn_decode_layer_forward.1} parent=31 // pred_fallthru
        _
      // Predicated region
      $region37: #{cnn_decode_layer_forward.1} parent=31 // pred_check
        %p213 = pneg %p58
      $region38: #{cnn_decode_layer_forward.1} parent=31 // pred_check_branch
        %215 = sbr.rel (%p213) target = $region40
      $region39: #{cnn_decode_layer_forward.1} parent=31 // pred_region
        %p216 = scmp.lt.s32.totalorder %s12, 1
        %s217 = scalar_select %p216, %s12, 1
        %s218 = scalar_lea.vmem %s1, %s217
      $region40: #{cnn_decode_layer_forward.1} parent=31 // pred_fallthru
        _
    $region32: #{cnn_decode_layer_forward.1} parent=5 // pred_fallthru
      _
    %p219 = scmp.le.s32.totalorder 1, %s12
    %p220 = scmp.lt.s32.totalorder %s12, 3
    %p221 = pnand %p219, %p220
    %p222 = pneg %p221
    // Predicated region
    $region41: #{cnn_decode_layer_forward.1} parent=5 // pred_check
      _
    $region42: #{cnn_decode_layer_forward.1} parent=5 // pred_check_branch
      %224 = sbr.rel (%p221) target = $region44
    $region43: #{cnn_decode_layer_forward.1} parent=5 // pred_region
      %s225 = ssub.s32 %s12, 1
      %p226 = scmp.lt.s32.totalorder %s17, 1
      %s227 = scalar_select %p226, %s17, 1
      %s228 = smul.addr %s227, 4
      %s229 = smul.addr %s228, 8
      %s230 = scalar_lea.vmem %s0, %s229
      %p231 = pneg %p38
      %p232 = pneg %p35
      %p233 = scmp.lt.s32.totalorder %s17, 1
      %s234 = scalar_select %p233, %s17, 1
      %s235 = scalar_lea.vmem %s1, %s234
      %p236 = pneg %p64
      %p237 = pneg %p61
      %p238 = pneg %p85
      %p239 = pneg %p82
      %p240 = pneg %p106
      %p241 = pneg %p103
      %p242 = pneg %p127
      %p243 = pneg %p124
      %p244 = pneg %p148
      %p245 = pneg %p145
      %p246 = pneg %p174
      %p247 = pneg %p171
      %p248 = scmp.lt.s32.totalorder %s17, 1
      %s249 = scalar_select %p248, %s17, 1
      %s250 = smul.addr %s249, 2
      %s251 = smul.addr %s250, 4
      %s252 = scalar_lea.vmem %s6, %s251
      %p253 = scmp.lt.s32.totalorder %s17, 1
      %s254 = scalar_select %p253, %s17, 1
      %s255 = smul.addr %s254, 4
      %s256 = smul.addr %s255, 8
      %s257 = scalar_lea.vmem %s0, %s256
      %p258 = scmp.lt.s32.totalorder %s17, 1
      %s259 = scalar_select %p258, %s17, 1
      %s260 = scalar_lea.vmem %s1, %s259
      %p261 = scmp.lt.s32.totalorder %s17, 1
      %s262 = scalar_select %p261, %s17, 1
      %s263 = smul.addr %s262, 2
      %s264 = smul.addr %s263, 4
      %s265 = scalar_lea.vmem %s6, %s264
      %v266 = vld [vmem:[%s260] sm:$0x1]
      %v267 = vld [vmem:[%s2] sm:$0xff]
      %v268 = vld [vmem:[%s2 + $0x8] sm:$0xff]
      %v269 = vld [vmem:[%s2 + $0x10] sm:$0xff]
      %v270 = vld [vmem:[%s2 + $0x18] sm:$0xff]
      %v271 = vld [vmem:[%s2 + $0x20] sm:$0xff]
      %v272 = vld [vmem:[%s2 + $0x28] sm:$0xff]
      %v273 = vld [vmem:[%s2 + $0x30] sm:$0xff]
      %v274 = vld [vmem:[%s2 + $0x38] sm:$0xff]
      %v275 = vld [vmem:[%s3] sm:$0x3]
      %v277 = vlaneseq
      %v278 = vshrl.u32 %v277, 7
      %v279 = vsub.s32 0, %v278
      %v280 = vrot.slane %v275, %v279
      %v281 = vlaneseq
      %v282 = vshrl.u32 %v281, 7
      %v283 = vsub.s32 1, %v282
      %v284 = vrot.slane %v275, %v283
      %vm287 = vcmask 261120
      %v289 = vsel %vm287, %v266, 0
      %291 = vmatprep.subr.mxu0 %v268
      %292 = vmatpush1.msra.mxu0 %v267
      %293 = vmatprep.subr.mxu0 %v270
      %294 = vmatpush1.msra.mxu0 %v269
      %295 = vmatprep.subr.mxu0 %v272
      %296 = vmatpush1.msra.mxu0 %v271
      %297 = vmatprep.subr.mxu0 %v274
      %298 = vmatpush1.msra.mxu0 %v273
      %299 = vmatprep.subr.mxu0 0.0
      %300 = vmatpush1.msra.mxu0 0.0
      %301 = vmatprep.subr.mxu0 0.0
      %302 = vmatpush1.msra.mxu0 0.0
      %303 = vmatprep.subr.mxu0 0.0
      %304 = vmatpush1.msra.mxu0 0.0
      %305 = vmatprep.subr.mxu0 0.0
      %306 = vmatpush1.msra.mxu0 0.0
      %307 = vmatprep.subr.mxu0 0.0
      %308 = vmatpush1.msra.mxu0 0.0
      %309 = vmatprep.subr.mxu0 0.0
      %310 = vmatpush1.msra.mxu0 0.0
      %311 = vmatprep.subr.mxu0 0.0
      %312 = vmatpush1.msra.mxu0 0.0
      %313 = vmatprep.subr.mxu0 0.0
      %314 = vmatpush1.msra.mxu0 0.0
      %315 = vmatprep.subr.mxu0 0.0
      %316 = vmatpush1.msra.mxu0 0.0
      %317 = vmatprep.subr.mxu0 0.0
      %318 = vmatpush1.msra.mxu0 0.0
      %319 = vmatprep.subr.mxu0 0.0
      %320 = vmatpush1.msra.mxu0 0.0
      %321 = vmatprep.subr.mxu0 0.0
      %322 = vmatpush1.msra.mxu0 0.0
      %323 = vmatprep.subr.mxu0 0.0
      %324 = vmatpush1.msra.mxu0 0.0
      %325 = vmatprep.subr.mxu0 0.0
      %326 = vmatpush1.msra.mxu0 0.0
      %327 = vmatprep.subr.mxu0 0.0
      %328 = vmatpush1.msra.mxu0 0.0
      %329 = vmatprep.subr.mxu0 0.0
      %330 = vmatpush1.msra.mxu0 0.0
      %331 = vmatprep.subr.mxu0 0.0
      %332 = vmatpush1.msra.mxu0 0.0
      %333 = vmatprep.subr.mxu0 0.0
      %334 = vmatpush1.msra.mxu0 0.0
      %335 = vmatprep.subr.mxu0 0.0
      %336 = vmatpush1.msra.mxu0 0.0
      %337 = vmatprep.subr.mxu0 0.0
      %338 = vmatpush1.msra.mxu0 0.0
      %339 = vmatprep.subr.mxu0 0.0
      %340 = vmatpush1.msra.mxu0 0.0
      %341 = vmatprep.subr.mxu0 0.0
      %342 = vmatpush1.msra.mxu0 0.0
      %343 = vmatprep.subr.mxu0 0.0
      %344 = vmatpush1.msra.mxu0 0.0
      %345 = vmatprep.subr.mxu0 0.0
      %346 = vmatpush1.msra.mxu0 0.0
      %347 = vmatprep.subr.mxu0 0.0
      %348 = vmatpush1.msra.mxu0 0.0
      %349 = vmatprep.subr.mxu0 0.0
      %350 = vmatpush1.msra.mxu0 0.0
      %351 = vmatprep.subr.mxu0 0.0
      %352 = vmatpush1.msra.mxu0 0.0
      %353 = vmatprep.subr.mxu0 0.0
      %354 = vmatpush1.msra.mxu0 0.0
      %355 = vmatprep.mubr.f32.mxu0 0.0
      %356 = vmatmul.mubr.f32.gmra.mrb[0].mxu0 %v289
      %v357 = vpop.f32.mrb[0].mxu0
      %v358 = vadd.f32 %v280, %v357
      %v359 = vpop.f32.mrb[0].mxu0
      %v360 = vadd.f32 %v284, %v359
      %361 = vdwg.mxu0
      %vm362 = vcmask 80896
      %363 = vst.msk [vmem:[#allocation2] sm:$0xff] %vm362, 0.0
      %vm364 = vcmask 74752
      %365 = vst.msk [vmem:[#allocation2 + $0x8] sm:$0x3] %vm364, 0.0
      %366 = vst.msk [vmem:[#allocation2 + $0x10] sm:$0xff] %vm362, 0.0
      %367 = vst.msk [vmem:[#allocation2 + $0x18] sm:$0x3] %vm364, 0.0
      %368 = vst.msk [vmem:[#allocation2 + $0x20] sm:$0xff] %vm362, 0.0
      %369 = vst.msk [vmem:[#allocation2 + $0x28] sm:$0x3] %vm364, 0.0
      %370 = vst.msk [vmem:[#allocation2 + $0x30] sm:$0xff] %vm362, 0.0
      %371 = vst.msk [vmem:[#allocation2 + $0x38] sm:$0x3] %vm364, 0.0
      %372 = vst.msk [vmem:[#allocation2 + $0x40] sm:$0xff] %vm362, 0.0
      %373 = vst.msk [vmem:[#allocation2 + $0x48] sm:$0x3] %vm364, 0.0
      %374 = vst.msk [vmem:[#allocation2 + $0x50] sm:$0xff] %vm362, 0.0
      %375 = vst.msk [vmem:[#allocation2 + $0x58] sm:$0x3] %vm364, 0.0
      %376 = vst.msk [vmem:[#allocation2 + $0x60] sm:$0xff] %vm362, 0.0
      %377 = vst.msk [vmem:[#allocation2 + $0x68] sm:$0x3] %vm364, 0.0
      %378 = vst.msk [vmem:[#allocation2 + $0x70] sm:$0xff] %vm362, 0.0
      %379 = vst.msk [vmem:[#allocation2 + $0x78] sm:$0x3] %vm364, 0.0
      %v380 = vld [vmem:[%s257] sm:$0x1]
      %v381 = vld [vmem:[%s257 + $0x8] sm:$0x1]
      %v382 = vld [vmem:[%s257 + $0x10] sm:$0x1]
      %v383 = vld [vmem:[%s257 + $0x18] sm:$0x1]
      %388 = vrot.lane.b32.xlu0 %v380, 1
      %v389 = vpop.permute.xlu0 %388
      %390 = vrot.lane.b32.xlu0 %v381, 1
      %v391 = vpop.permute.xlu0 %390
      %392 = vrot.lane.b32.xlu0 %v382, 1
      %v393 = vpop.permute.xlu0 %392
      %394 = vrot.lane.b32.xlu0 %v383, 1
      %v395 = vpop.permute.xlu0 %394
      %vm400 = vcmask 65544
      %401 = vst.msk [vmem:[#allocation2 + $0x1] sm:$0x1] %vm400, %v389
      %402 = vst.msk [vmem:[#allocation2 + $0x11] sm:$0x1] %vm400, %v391
      %403 = vst.msk [vmem:[#allocation2 + $0x21] sm:$0x1] %vm400, %v393
      %404 = vst.msk [vmem:[#allocation2 + $0x31] sm:$0x1] %vm400, %v395
      %406 = vrot.lane.b32.xlu0 %v358, 1
      %v407 = vpop.permute.xlu0 %406
      %s409 = scalar_lea.vmem [#allocation2], 64
      %410 = vst.msk [vmem:[%s409 + $0x1] sm:$0x1] %vm400, %v407
      %411 = vrot.lane.b32.xlu0 %v358, 65
      %v412 = vpop.permute.xlu0 %411
      %s414 = scalar_lea.vmem [#allocation2], 80
      %415 = vst.msk [vmem:[%s414 + $0x1] sm:$0x1] %vm400, %v412
      %417 = vrot.lane.b32.xlu0 %v360, 1
      %v418 = vpop.permute.xlu0 %417
      %s420 = scalar_lea.vmem [#allocation2], 96
      %421 = vst.msk [vmem:[%s420 + $0x1] sm:$0x1] %vm400, %v418
      %422 = vrot.lane.b32.xlu0 %v360, 65
      %v423 = vpop.permute.xlu0 %422
      %s425 = scalar_lea.vmem [#allocation2], 112
      %426 = vst.msk [vmem:[%s425 + $0x1] sm:$0x1] %vm400, %v423
      %v427 = vld [vmem:[%s257 + $0x1] sm:$0x1]
      %v428 = vld [vmem:[%s257 + $0x9] sm:$0x1]
      %v429 = vld [vmem:[%s257 + $0x11] sm:$0x1]
      %v430 = vld [vmem:[%s257 + $0x19] sm:$0x1]
      %435 = vrot.lane.b32.xlu0 %v427, 1
      %v436 = vpop.permute.xlu0 %435
      %437 = vrot.lane.b32.xlu0 %v428, 1
      %v438 = vpop.permute.xlu0 %437
      %439 = vrot.lane.b32.xlu0 %v429, 1
      %v440 = vpop.permute.xlu0 %439
      %441 = vrot.lane.b32.xlu0 %v430, 1
      %v442 = vpop.permute.xlu0 %441
      %447 = vst.msk [vmem:[#allocation2 + $0x2] sm:$0x1] %vm400, %v436
      %448 = vst.msk [vmem:[#allocation2 + $0x12] sm:$0x1] %vm400, %v438
      %449 = vst.msk [vmem:[#allocation2 + $0x22] sm:$0x1] %vm400, %v440
      %450 = vst.msk [vmem:[#allocation2 + $0x32] sm:$0x1] %vm400, %v442
      %451 = vrot.lane.b32.xlu0 %v358, 121
      %v452 = vpop.permute.xlu0 %451
      %454 = vst.msk [vmem:[%s409 + $0x2] sm:$0x1] %vm400, %v452
      %455 = vrot.lane.b32.xlu0 %v358, 57
      %v456 = vpop.permute.xlu0 %455
      %458 = vst.msk [vmem:[%s414 + $0x2] sm:$0x1] %vm400, %v456
      %459 = vrot.lane.b32.xlu0 %v360, 121
      %v460 = vpop.permute.xlu0 %459
      %462 = vst.msk [vmem:[%s420 + $0x2] sm:$0x1] %vm400, %v460
      %463 = vrot.lane.b32.xlu0 %v360, 57
      %v464 = vpop.permute.xlu0 %463
      %466 = vst.msk [vmem:[%s425 + $0x2] sm:$0x1] %vm400, %v464
      %v467 = vld [vmem:[%s257 + $0x2] sm:$0x1]
      %v468 = vld [vmem:[%s257 + $0xa] sm:$0x1]
      %v469 = vld [vmem:[%s257 + $0x12] sm:$0x1]
      %v470 = vld [vmem:[%s257 + $0x1a] sm:$0x1]
      %475 = vrot.lane.b32.xlu0 %v467, 1
      %v476 = vpop.permute.xlu0 %475
      %477 = vrot.lane.b32.xlu0 %v468, 1
      %v478 = vpop.permute.xlu0 %477
      %479 = vrot.lane.b32.xlu0 %v469, 1
      %v480 = vpop.permute.xlu0 %479
      %481 = vrot.lane.b32.xlu0 %v470, 1
      %v482 = vpop.permute.xlu0 %481
      %487 = vst.msk [vmem:[#allocation2 + $0x3] sm:$0x1] %vm400, %v476
      %488 = vst.msk [vmem:[#allocation2 + $0x13] sm:$0x1] %vm400, %v478
      %489 = vst.msk [vmem:[#allocation2 + $0x23] sm:$0x1] %vm400, %v480
      %490 = vst.msk [vmem:[#allocation2 + $0x33] sm:$0x1] %vm400, %v482
      %491 = vrot.lane.b32.xlu0 %v358, 113
      %v492 = vpop.permute.xlu0 %491
      %494 = vst.msk [vmem:[%s409 + $0x3] sm:$0x1] %vm400, %v492
      %495 = vrot.lane.b32.xlu0 %v358, 49
      %v496 = vpop.permute.xlu0 %495
      %498 = vst.msk [vmem:[%s414 + $0x3] sm:$0x1] %vm400, %v496
      %499 = vrot.lane.b32.xlu0 %v360, 113
      %v500 = vpop.permute.xlu0 %499
      %502 = vst.msk [vmem:[%s420 + $0x3] sm:$0x1] %vm400, %v500
      %503 = vrot.lane.b32.xlu0 %v360, 49
      %v504 = vpop.permute.xlu0 %503
      %506 = vst.msk [vmem:[%s425 + $0x3] sm:$0x1] %vm400, %v504
      %v507 = vld [vmem:[%s257 + $0x3] sm:$0x1]
      %v508 = vld [vmem:[%s257 + $0xb] sm:$0x1]
      %v509 = vld [vmem:[%s257 + $0x13] sm:$0x1]
      %v510 = vld [vmem:[%s257 + $0x1b] sm:$0x1]
      %515 = vrot.lane.b32.xlu0 %v507, 1
      %v516 = vpop.permute.xlu0 %515
      %517 = vrot.lane.b32.xlu0 %v508, 1
      %v518 = vpop.permute.xlu0 %517
      %519 = vrot.lane.b32.xlu0 %v509, 1
      %v520 = vpop.permute.xlu0 %519
      %521 = vrot.lane.b32.xlu0 %v510, 1
      %v522 = vpop.permute.xlu0 %521
      %527 = vst.msk [vmem:[#allocation2 + $0x4] sm:$0x1] %vm400, %v516
      %528 = vst.msk [vmem:[#allocation2 + $0x14] sm:$0x1] %vm400, %v518
      %529 = vst.msk [vmem:[#allocation2 + $0x24] sm:$0x1] %vm400, %v520
      %530 = vst.msk [vmem:[#allocation2 + $0x34] sm:$0x1] %vm400, %v522
      %531 = vrot.lane.b32.xlu0 %v358, 105
      %v532 = vpop.permute.xlu0 %531
      %534 = vst.msk [vmem:[%s409 + $0x4] sm:$0x1] %vm400, %v532
      %535 = vrot.lane.b32.xlu0 %v358, 41
      %v536 = vpop.permute.xlu0 %535
      %538 = vst.msk [vmem:[%s414 + $0x4] sm:$0x1] %vm400, %v536
      %539 = vrot.lane.b32.xlu0 %v360, 105
      %v540 = vpop.permute.xlu0 %539
      %542 = vst.msk [vmem:[%s420 + $0x4] sm:$0x1] %vm400, %v540
      %543 = vrot.lane.b32.xlu0 %v360, 41
      %v544 = vpop.permute.xlu0 %543
      %546 = vst.msk [vmem:[%s425 + $0x4] sm:$0x1] %vm400, %v544
      %v547 = vld [vmem:[%s257 + $0x4] sm:$0x1]
      %v548 = vld [vmem:[%s257 + $0xc] sm:$0x1]
      %v549 = vld [vmem:[%s257 + $0x14] sm:$0x1]
      %v550 = vld [vmem:[%s257 + $0x1c] sm:$0x1]
      %555 = vrot.lane.b32.xlu0 %v547, 1
      %v556 = vpop.permute.xlu0 %555
      %557 = vrot.lane.b32.xlu0 %v548, 1
      %v558 = vpop.permute.xlu0 %557
      %559 = vrot.lane.b32.xlu0 %v549, 1
      %v560 = vpop.permute.xlu0 %559
      %561 = vrot.lane.b32.xlu0 %v550, 1
      %v562 = vpop.permute.xlu0 %561
      %567 = vst.msk [vmem:[#allocation2 + $0x5] sm:$0x1] %vm400, %v556
      %568 = vst.msk [vmem:[#allocation2 + $0x15] sm:$0x1] %vm400, %v558
      %569 = vst.msk [vmem:[#allocation2 + $0x25] sm:$0x1] %vm400, %v560
      %570 = vst.msk [vmem:[#allocation2 + $0x35] sm:$0x1] %vm400, %v562
      %571 = vrot.lane.b32.xlu0 %v358, 97
      %v572 = vpop.permute.xlu0 %571
      %574 = vst.msk [vmem:[%s409 + $0x5] sm:$0x1] %vm400, %v572
      %575 = vrot.lane.b32.xlu0 %v358, 33
      %v576 = vpop.permute.xlu0 %575
      %578 = vst.msk [vmem:[%s414 + $0x5] sm:$0x1] %vm400, %v576
      %579 = vrot.lane.b32.xlu0 %v360, 97
      %v580 = vpop.permute.xlu0 %579
      %582 = vst.msk [vmem:[%s420 + $0x5] sm:$0x1] %vm400, %v580
      %583 = vrot.lane.b32.xlu0 %v360, 33
      %v584 = vpop.permute.xlu0 %583
      %586 = vst.msk [vmem:[%s425 + $0x5] sm:$0x1] %vm400, %v584
      %v587 = vld [vmem:[%s257 + $0x5] sm:$0x1]
      %v588 = vld [vmem:[%s257 + $0xd] sm:$0x1]
      %v589 = vld [vmem:[%s257 + $0x15] sm:$0x1]
      %v590 = vld [vmem:[%s257 + $0x1d] sm:$0x1]
      %595 = vrot.lane.b32.xlu0 %v587, 1
      %v596 = vpop.permute.xlu0 %595
      %597 = vrot.lane.b32.xlu0 %v588, 1
      %v598 = vpop.permute.xlu0 %597
      %599 = vrot.lane.b32.xlu0 %v589, 1
      %v600 = vpop.permute.xlu0 %599
      %601 = vrot.lane.b32.xlu0 %v590, 1
      %v602 = vpop.permute.xlu0 %601
      %607 = vst.msk [vmem:[#allocation2 + $0x6] sm:$0x1] %vm400, %v596
      %608 = vst.msk [vmem:[#allocation2 + $0x16] sm:$0x1] %vm400, %v598
      %609 = vst.msk [vmem:[#allocation2 + $0x26] sm:$0x1] %vm400, %v600
      %610 = vst.msk [vmem:[#allocation2 + $0x36] sm:$0x1] %vm400, %v602
      %611 = vrot.lane.b32.xlu0 %v358, 89
      %v612 = vpop.permute.xlu0 %611
      %614 = vst.msk [vmem:[%s409 + $0x6] sm:$0x1] %vm400, %v612
      %615 = vrot.lane.b32.xlu0 %v358, 25
      %v616 = vpop.permute.xlu0 %615
      %618 = vst.msk [vmem:[%s414 + $0x6] sm:$0x1] %vm400, %v616
      %619 = vrot.lane.b32.xlu0 %v360, 89
      %v620 = vpop.permute.xlu0 %619
      %622 = vst.msk [vmem:[%s420 + $0x6] sm:$0x1] %vm400, %v620
      %623 = vrot.lane.b32.xlu0 %v360, 25
      %v624 = vpop.permute.xlu0 %623
      %626 = vst.msk [vmem:[%s425 + $0x6] sm:$0x1] %vm400, %v624
      %v627 = vld [vmem:[%s257 + $0x6] sm:$0x1]
      %v628 = vld [vmem:[%s257 + $0xe] sm:$0x1]
      %v629 = vld [vmem:[%s257 + $0x16] sm:$0x1]
      %v630 = vld [vmem:[%s257 + $0x1e] sm:$0x1]
      %635 = vrot.lane.b32.xlu0 %v627, 1
      %v636 = vpop.permute.xlu0 %635
      %637 = vrot.lane.b32.xlu0 %v628, 1
      %v638 = vpop.permute.xlu0 %637
      %639 = vrot.lane.b32.xlu0 %v629, 1
      %v640 = vpop.permute.xlu0 %639
      %641 = vrot.lane.b32.xlu0 %v630, 1
      %v642 = vpop.permute.xlu0 %641
      %647 = vst.msk [vmem:[#allocation2 + $0x7] sm:$0x1] %vm400, %v636
      %648 = vst.msk [vmem:[#allocation2 + $0x17] sm:$0x1] %vm400, %v638
      %649 = vst.msk [vmem:[#allocation2 + $0x27] sm:$0x1] %vm400, %v640
      %650 = vst.msk [vmem:[#allocation2 + $0x37] sm:$0x1] %vm400, %v642
      %651 = vrot.lane.b32.xlu0 %v358, 81
      %v652 = vpop.permute.xlu0 %651
      %654 = vst.msk [vmem:[%s409 + $0x7] sm:$0x1] %vm400, %v652
      %655 = vrot.lane.b32.xlu0 %v358, 17
      %v656 = vpop.permute.xlu0 %655
      %658 = vst.msk [vmem:[%s414 + $0x7] sm:$0x1] %vm400, %v656
      %659 = vrot.lane.b32.xlu0 %v360, 81
      %v660 = vpop.permute.xlu0 %659
      %662 = vst.msk [vmem:[%s420 + $0x7] sm:$0x1] %vm400, %v660
      %663 = vrot.lane.b32.xlu0 %v360, 17
      %v664 = vpop.permute.xlu0 %663
      %666 = vst.msk [vmem:[%s425 + $0x7] sm:$0x1] %vm400, %v664
      %v667 = vld [vmem:[%s257 + $0x7] sm:$0x1]
      %v668 = vld [vmem:[%s257 + $0xf] sm:$0x1]
      %v669 = vld [vmem:[%s257 + $0x17] sm:$0x1]
      %v670 = vld [vmem:[%s257 + $0x1f] sm:$0x1]
      %675 = vrot.lane.b32.xlu0 %v667, 1
      %v676 = vpop.permute.xlu0 %675
      %677 = vrot.lane.b32.xlu0 %v668, 1
      %v678 = vpop.permute.xlu0 %677
      %679 = vrot.lane.b32.xlu0 %v669, 1
      %v680 = vpop.permute.xlu0 %679
      %681 = vrot.lane.b32.xlu0 %v670, 1
      %v682 = vpop.permute.xlu0 %681
      %687 = vst.msk [vmem:[#allocation2 + $0x8] sm:$0x1] %vm400, %v676
      %688 = vst.msk [vmem:[#allocation2 + $0x18] sm:$0x1] %vm400, %v678
      %689 = vst.msk [vmem:[#allocation2 + $0x28] sm:$0x1] %vm400, %v680
      %690 = vst.msk [vmem:[#allocation2 + $0x38] sm:$0x1] %vm400, %v682
      %691 = vrot.lane.b32.xlu0 %v358, 73
      %v692 = vpop.permute.xlu0 %691
      %694 = vst.msk [vmem:[%s409 + $0x8] sm:$0x1] %vm400, %v692
      %695 = vrot.lane.b32.xlu0 %v358, 9
      %v696 = vpop.permute.xlu0 %695
      %698 = vst.msk [vmem:[%s414 + $0x8] sm:$0x1] %vm400, %v696
      %699 = vrot.lane.b32.xlu0 %v360, 73
      %v700 = vpop.permute.xlu0 %699
      %702 = vst.msk [vmem:[%s420 + $0x8] sm:$0x1] %vm400, %v700
      %703 = vrot.lane.b32.xlu0 %v360, 9
      %v704 = vpop.permute.xlu0 %703
      %706 = vst.msk [vmem:[%s425 + $0x8] sm:$0x1] %vm400, %v704
      %v707 = vld [vmem:[#allocation2] sm:$0x1]
      %v708 = vld [vmem:[#allocation2 + $0x10] sm:$0x1]
      %v709 = vld [vmem:[#allocation2 + $0x20] sm:$0x1]
      %v710 = vld [vmem:[#allocation2 + $0x30] sm:$0x1]
      %v711 = vld [vmem:[#allocation2 + $0x40] sm:$0x1]
      %v712 = vld [vmem:[#allocation2 + $0x50] sm:$0x1]
      %v713 = vld [vmem:[#allocation2 + $0x60] sm:$0x1]
      %v714 = vld [vmem:[#allocation2 + $0x70] sm:$0x1]
      %v723 = vrot.slane %v708, 7
      %vm724 = vcmask 1041409
      %v725 = vsel %vm724, %v723, %v707
      %v726 = vrot.slane %v709, 6
      %vm727 = vcmask 1042434
      %v728 = vsel %vm727, %v726, %v725
      %v729 = vrot.slane %v710, 5
      %vm730 = vcmask 1043459
      %v731 = vsel %vm730, %v729, %v728
      %v732 = vrot.slane %v711, 4
      %vm733 = vcmask 1044484
      %v734 = vsel %vm733, %v732, %v731
      %v735 = vrot.slane %v712, 3
      %vm736 = vcmask 1045509
      %v737 = vsel %vm736, %v735, %v734
      %v738 = vrot.slane %v713, 2
      %vm739 = vcmask 1046534
      %v740 = vsel %vm739, %v738, %v737
      %v741 = vrot.slane %v714, 1
      %vm742 = vcmask 1047559
      %v743 = vsel %vm742, %v741, %v740
      %vm745 = vcmask 64512
      %746 = vst.msk [vmem:[#allocation3] sm:$0xff] %vm745, %v743
      %v747 = vld [vmem:[#allocation2 + $0x1] sm:$0x1]
      %v748 = vld [vmem:[#allocation2 + $0x11] sm:$0x1]
      %v749 = vld [vmem:[#allocation2 + $0x21] sm:$0x1]
      %v750 = vld [vmem:[#allocation2 + $0x31] sm:$0x1]
      %v751 = vld [vmem:[#allocation2 + $0x41] sm:$0x1]
      %v752 = vld [vmem:[#allocation2 + $0x51] sm:$0x1]
      %v753 = vld [vmem:[#allocation2 + $0x61] sm:$0x1]
      %v754 = vld [vmem:[#allocation2 + $0x71] sm:$0x1]
      %v763 = vrot.slane %v748, 7
      %v764 = vsel %vm724, %v763, %v747
      %v765 = vrot.slane %v749, 6
      %v766 = vsel %vm727, %v765, %v764
      %v767 = vrot.slane %v750, 5
      %v768 = vsel %vm730, %v767, %v766
      %v769 = vrot.slane %v751, 4
      %v770 = vsel %vm733, %v769, %v768
      %v771 = vrot.slane %v752, 3
      %v772 = vsel %vm736, %v771, %v770
      %v773 = vrot.slane %v753, 2
      %v774 = vsel %vm739, %v773, %v772
      %v775 = vrot.slane %v754, 1
      %v776 = vsel %vm742, %v775, %v774
      %777 = vrot.lane.b32.xlu0 %v776, 8
      %v778 = vpop.permute.xlu0 %777
      %vm780 = vcmask 130112
      %781 = vst.msk [vmem:[#allocation3] sm:$0xff] %vm780, %v778
      %v782 = vld [vmem:[#allocation2 + $0x2] sm:$0x1]
      %v783 = vld [vmem:[#allocation2 + $0x12] sm:$0x1]
      %v784 = vld [vmem:[#allocation2 + $0x22] sm:$0x1]
      %v785 = vld [vmem:[#allocation2 + $0x32] sm:$0x1]
      %v786 = vld [vmem:[#allocation2 + $0x42] sm:$0x1]
      %v787 = vld [vmem:[#allocation2 + $0x52] sm:$0x1]
      %v788 = vld [vmem:[#allocation2 + $0x62] sm:$0x1]
      %v789 = vld [vmem:[#allocation2 + $0x72] sm:$0x1]
      %v798 = vrot.slane %v783, 7
      %v799 = vsel %vm724, %v798, %v782
      %v800 = vrot.slane %v784, 6
      %v801 = vsel %vm727, %v800, %v799
      %v802 = vrot.slane %v785, 5
      %v803 = vsel %vm730, %v802, %v801
      %v804 = vrot.slane %v786, 4
      %v805 = vsel %vm733, %v804, %v803
      %v806 = vrot.slane %v787, 3
      %v807 = vsel %vm736, %v806, %v805
      %v808 = vrot.slane %v788, 2
      %v809 = vsel %vm739, %v808, %v807
      %v810 = vrot.slane %v789, 1
      %v811 = vsel %vm742, %v810, %v809
      %812 = vrot.lane.b32.xlu0 %v811, 16
      %v813 = vpop.permute.xlu0 %812
      %vm815 = vcmask 195712
      %816 = vst.msk [vmem:[#allocation3] sm:$0xff] %vm815, %v813
      %v817 = vld [vmem:[#allocation2 + $0x3] sm:$0x1]
      %v818 = vld [vmem:[#allocation2 + $0x13] sm:$0x1]
      %v819 = vld [vmem:[#allocation2 + $0x23] sm:$0x1]
      %v820 = vld [vmem:[#allocation2 + $0x33] sm:$0x1]
      %v821 = vld [vmem:[#allocation2 + $0x43] sm:$0x1]
      %v822 = vld [vmem:[#allocation2 + $0x53] sm:$0x1]
      %v823 = vld [vmem:[#allocation2 + $0x63] sm:$0x1]
      %v824 = vld [vmem:[#allocation2 + $0x73] sm:$0x1]
      %v833 = vrot.slane %v818, 7
      %v834 = vsel %vm724, %v833, %v817
      %v835 = vrot.slane %v819, 6
      %v836 = vsel %vm727, %v835, %v834
      %v837 = vrot.slane %v820, 5
      %v838 = vsel %vm730, %v837, %v836
      %v839 = vrot.slane %v821, 4
      %v840 = vsel %vm733, %v839, %v838
      %v841 = vrot.slane %v822, 3
      %v842 = vsel %vm736, %v841, %v840
      %v843 = vrot.slane %v823, 2
      %v844 = vsel %vm739, %v843, %v842
      %v845 = vrot.slane %v824, 1
      %v846 = vsel %vm742, %v845, %v844
      %847 = vrot.lane.b32.xlu0 %v846, 24
      %v848 = vpop.permute.xlu0 %847
      %vm850 = vcmask 261312
      %851 = vst.msk [vmem:[#allocation3] sm:$0xff] %vm850, %v848
      %v852 = vld [vmem:[#allocation2 + $0x4] sm:$0x1]
      %v853 = vld [vmem:[#allocation2 + $0x14] sm:$0x1]
      %v854 = vld [vmem:[#allocation2 + $0x24] sm:$0x1]
      %v855 = vld [vmem:[#allocation2 + $0x34] sm:$0x1]
      %v856 = vld [vmem:[#allocation2 + $0x44] sm:$0x1]
      %v857 = vld [vmem:[#allocation2 + $0x54] sm:$0x1]
      %v858 = vld [vmem:[#allocation2 + $0x64] sm:$0x1]
      %v859 = vld [vmem:[#allocation2 + $0x74] sm:$0x1]
      %v868 = vrot.slane %v853, 7
      %v869 = vsel %vm724, %v868, %v852
      %v870 = vrot.slane %v854, 6
      %v871 = vsel %vm727, %v870, %v869
      %v872 = vrot.slane %v855, 5
      %v873 = vsel %vm730, %v872, %v871
      %v874 = vrot.slane %v856, 4
      %v875 = vsel %vm733, %v874, %v873
      %v876 = vrot.slane %v857, 3
      %v877 = vsel %vm736, %v876, %v875
      %v878 = vrot.slane %v858, 2
      %v879 = vsel %vm739, %v878, %v877
      %v880 = vrot.slane %v859, 1
      %v881 = vsel %vm742, %v880, %v879
      %882 = vrot.lane.b32.xlu0 %v881, 32
      %v883 = vpop.permute.xlu0 %882
      %vm885 = vcmask 326912
      %886 = vst.msk [vmem:[#allocation3] sm:$0xff] %vm885, %v883
      %v887 = vld [vmem:[#allocation2 + $0x5] sm:$0x1]
      %v888 = vld [vmem:[#allocation2 + $0x15] sm:$0x1]
      %v889 = vld [vmem:[#allocation2 + $0x25] sm:$0x1]
      %v890 = vld [vmem:[#allocation2 + $0x35] sm:$0x1]
      %v891 = vld [vmem:[#allocation2 + $0x45] sm:$0x1]
      %v892 = vld [vmem:[#allocation2 + $0x55] sm:$0x1]
      %v893 = vld [vmem:[#allocation2 + $0x65] sm:$0x1]
      %v894 = vld [vmem:[#allocation2 + $0x75] sm:$0x1]
      %v903 = vrot.slane %v888, 7
      %v904 = vsel %vm724, %v903, %v887
      %v905 = vrot.slane %v889, 6
      %v906 = vsel %vm727, %v905, %v904
      %v907 = vrot.slane %v890, 5
      %v908 = vsel %vm730, %v907, %v906
      %v909 = vrot.slane %v891, 4
      %v910 = vsel %vm733, %v909, %v908
      %v911 = vrot.slane %v892, 3
      %v912 = vsel %vm736, %v911, %v910
      %v913 = vrot.slane %v893, 2
      %v914 = vsel %vm739, %v913, %v912
      %v915 = vrot.slane %v894, 1
      %v916 = vsel %vm742, %v915, %v914
      %917 = vrot.lane.b32.xlu0 %v916, 40
      %v918 = vpop.permute.xlu0 %917
      %vm920 = vcmask 392512
      %921 = vst.msk [vmem:[#allocation3] sm:$0xff] %vm920, %v918
      %v922 = vld [vmem:[#allocation2 + $0x6] sm:$0x1]
      %v923 = vld [vmem:[#allocation2 + $0x16] sm:$0x1]
      %v924 = vld [vmem:[#allocation2 + $0x26] sm:$0x1]
      %v925 = vld [vmem:[#allocation2 + $0x36] sm:$0x1]
      %v926 = vld [vmem:[#allocation2 + $0x46] sm:$0x1]
      %v927 = vld [vmem:[#allocation2 + $0x56] sm:$0x1]
      %v928 = vld [vmem:[#allocation2 + $0x66] sm:$0x1]
      %v929 = vld [vmem:[#allocation2 + $0x76] sm:$0x1]
      %v938 = vrot.slane %v923, 7
      %v939 = vsel %vm724, %v938, %v922
      %v940 = vrot.slane %v924, 6
      %v941 = vsel %vm727, %v940, %v939
      %v942 = vrot.slane %v925, 5
      %v943 = vsel %vm730, %v942, %v941
      %v944 = vrot.slane %v926, 4
      %v945 = vsel %vm733, %v944, %v943
      %v946 = vrot.slane %v927, 3
      %v947 = vsel %vm736, %v946, %v945
      %v948 = vrot.slane %v928, 2
      %v949 = vsel %vm739, %v948, %v947
      %v950 = vrot.slane %v929, 1
      %v951 = vsel %vm742, %v950, %v949
      %952 = vrot.lane.b32.xlu0 %v951, 48
      %v953 = vpop.permute.xlu0 %952
      %vm955 = vcmask 458112
      %956 = vst.msk [vmem:[#allocation3] sm:$0xff] %vm955, %v953
      %v957 = vld [vmem:[#allocation2 + $0x7] sm:$0x1]
      %v958 = vld [vmem:[#allocation2 + $0x17] sm:$0x1]
      %v959 = vld [vmem:[#allocation2 + $0x27] sm:$0x1]
      %v960 = vld [vmem:[#allocation2 + $0x37] sm:$0x1]
      %v961 = vld [vmem:[#allocation2 + $0x47] sm:$0x1]
      %v962 = vld [vmem:[#allocation2 + $0x57] sm:$0x1]
      %v963 = vld [vmem:[#allocation2 + $0x67] sm:$0x1]
      %v964 = vld [vmem:[#allocation2 + $0x77] sm:$0x1]
      %v973 = vrot.slane %v958, 7
      %v974 = vsel %vm724, %v973, %v957
      %v975 = vrot.slane %v959, 6
      %v976 = vsel %vm727, %v975, %v974
      %v977 = vrot.slane %v960, 5
      %v978 = vsel %vm730, %v977, %v976
      %v979 = vrot.slane %v961, 4
      %v980 = vsel %vm733, %v979, %v978
      %v981 = vrot.slane %v962, 3
      %v982 = vsel %vm736, %v981, %v980
      %v983 = vrot.slane %v963, 2
      %v984 = vsel %vm739, %v983, %v982
      %v985 = vrot.slane %v964, 1
      %v986 = vsel %vm742, %v985, %v984
      %987 = vrot.lane.b32.xlu0 %v986, 56
      %v988 = vpop.permute.xlu0 %987
      %vm990 = vcmask 523712
      %991 = vst.msk [vmem:[#allocation3] sm:$0xff] %vm990, %v988
      %v992 = vld [vmem:[#allocation2 + $0x8] sm:$0x1]
      %v993 = vld [vmem:[#allocation2 + $0x18] sm:$0x1]
      %v994 = vld [vmem:[#allocation2 + $0x28] sm:$0x1]
      %v995 = vld [vmem:[#allocation2 + $0x38] sm:$0x1]
      %v996 = vld [vmem:[#allocation2 + $0x48] sm:$0x1]
      %v997 = vld [vmem:[#allocation2 + $0x58] sm:$0x1]
      %v998 = vld [vmem:[#allocation2 + $0x68] sm:$0x1]
      %v999 = vld [vmem:[#allocation2 + $0x78] sm:$0x1]
      %v1008 = vrot.slane %v993, 7
      %v1009 = vsel %vm724, %v1008, %v992
      %v1010 = vrot.slane %v994, 6
      %v1011 = vsel %vm727, %v1010, %v1009
      %v1012 = vrot.slane %v995, 5
      %v1013 = vsel %vm730, %v1012, %v1011
      %v1014 = vrot.slane %v996, 4
      %v1015 = vsel %vm733, %v1014, %v1013
      %v1016 = vrot.slane %v997, 3
      %v1017 = vsel %vm736, %v1016, %v1015
      %v1018 = vrot.slane %v998, 2
      %v1019 = vsel %vm739, %v1018, %v1017
      %v1020 = vrot.slane %v999, 1
      %v1021 = vsel %vm742, %v1020, %v1019
      %1022 = vrot.lane.b32.xlu0 %v1021, 64
      %v1023 = vpop.permute.xlu0 %1022
      %vm1025 = vcmask 589312
      %1026 = vst.msk [vmem:[#allocation3] sm:$0xff] %vm1025, %v1023
      %v1027 = vld [vmem:[#allocation2 + $0x9] sm:$0x1]
      %v1028 = vld [vmem:[#allocation2 + $0x19] sm:$0x1]
      %v1029 = vld [vmem:[#allocation2 + $0x29] sm:$0x1]
      %v1030 = vld [vmem:[#allocation2 + $0x39] sm:$0x1]
      %v1031 = vld [vmem:[#allocation2 + $0x49] sm:$0x1]
      %v1032 = vld [vmem:[#allocation2 + $0x59] sm:$0x1]
      %v1033 = vld [vmem:[#allocation2 + $0x69] sm:$0x1]
      %v1034 = vld [vmem:[#allocation2 + $0x79] sm:$0x1]
      %v1043 = vrot.slane %v1028, 7
      %v1044 = vsel %vm724, %v1043, %v1027
      %v1045 = vrot.slane %v1029, 6
      %v1046 = vsel %vm727, %v1045, %v1044
      %v1047 = vrot.slane %v1030, 5
      %v1048 = vsel %vm730, %v1047, %v1046
      %v1049 = vrot.slane %v1031, 4
      %v1050 = vsel %vm733, %v1049, %v1048
      %v1051 = vrot.slane %v1032, 3
      %v1052 = vsel %vm736, %v1051, %v1050
      %v1053 = vrot.slane %v1033, 2
      %v1054 = vsel %vm739, %v1053, %v1052
      %v1055 = vrot.slane %v1034, 1
      %v1056 = vsel %vm742, %v1055, %v1054
      %1057 = vrot.lane.b32.xlu0 %v1056, 72
      %v1058 = vpop.permute.xlu0 %1057
      %vm1060 = vcmask 654912
      %1061 = vst.msk [vmem:[#allocation3] sm:$0xff] %vm1060, %v1058
      %v1062 = vld [vmem:[#allocation2] sm:$0x1]
      %v1063 = vld [vmem:[#allocation2 + $0x10] sm:$0x1]
      %v1064 = vld [vmem:[#allocation2 + $0x20] sm:$0x1]
      %v1065 = vld [vmem:[#allocation2 + $0x30] sm:$0x1]
      %v1066 = vld [vmem:[#allocation2 + $0x40] sm:$0x1]
      %v1067 = vld [vmem:[#allocation2 + $0x50] sm:$0x1]
      %v1068 = vld [vmem:[#allocation2 + $0x60] sm:$0x1]
      %v1069 = vld [vmem:[#allocation2 + $0x70] sm:$0x1]
      %v1078 = vrot.slane %v1063, 7
      %v1079 = vsel %vm724, %v1078, %v1062
      %v1080 = vrot.slane %v1064, 6
      %v1081 = vsel %vm727, %v1080, %v1079
      %v1082 = vrot.slane %v1065, 5
      %v1083 = vsel %vm730, %v1082, %v1081
      %v1084 = vrot.slane %v1066, 4
      %v1085 = vsel %vm733, %v1084, %v1083
      %v1086 = vrot.slane %v1067, 3
      %v1087 = vsel %vm736, %v1086, %v1085
      %v1088 = vrot.slane %v1068, 2
      %v1089 = vsel %vm739, %v1088, %v1087
      %v1090 = vrot.slane %v1069, 1
      %v1091 = vsel %vm742, %v1090, %v1089
      %1092 = vrot.lane.b32.xlu0 %v1091, 127
      %v1093 = vpop.permute.xlu0 %1092
      %s1095 = scalar_lea.vmem [#allocation3], 8
      %1096 = vst.msk [vmem:[%s1095] sm:$0xff] %vm745, %v1093
      %v1097 = vld [vmem:[#allocation2 + $0x1] sm:$0x1]
      %v1098 = vld [vmem:[#allocation2 + $0x11] sm:$0x1]
      %v1099 = vld [vmem:[#allocation2 + $0x21] sm:$0x1]
      %v1100 = vld [vmem:[#allocation2 + $0x31] sm:$0x1]
      %v1101 = vld [vmem:[#allocation2 + $0x41] sm:$0x1]
      %v1102 = vld [vmem:[#allocation2 + $0x51] sm:$0x1]
      %v1103 = vld [vmem:[#allocation2 + $0x61] sm:$0x1]
      %v1104 = vld [vmem:[#allocation2 + $0x71] sm:$0x1]
      %v1113 = vrot.slane %v1098, 7
      %v1114 = vsel %vm724, %v1113, %v1097
      %v1115 = vrot.slane %v1099, 6
      %v1116 = vsel %vm727, %v1115, %v1114
      %v1117 = vrot.slane %v1100, 5
      %v1118 = vsel %vm730, %v1117, %v1116
      %v1119 = vrot.slane %v1101, 4
      %v1120 = vsel %vm733, %v1119, %v1118
      %v1121 = vrot.slane %v1102, 3
      %v1122 = vsel %vm736, %v1121, %v1120
      %v1123 = vrot.slane %v1103, 2
      %v1124 = vsel %vm739, %v1123, %v1122
      %v1125 = vrot.slane %v1104, 1
      %v1126 = vsel %vm742, %v1125, %v1124
      %1127 = vrot.lane.b32.xlu0 %v1126, 7
      %v1128 = vpop.permute.xlu0 %1127
      %1130 = vst.msk [vmem:[%s1095] sm:$0xff] %vm780, %v1128
      %v1131 = vld [vmem:[#allocation2 + $0x2] sm:$0x1]
      %v1132 = vld [vmem:[#allocation2 + $0x12] sm:$0x1]
      %v1133 = vld [vmem:[#allocation2 + $0x22] sm:$0x1]
      %v1134 = vld [vmem:[#allocation2 + $0x32] sm:$0x1]
      %v1135 = vld [vmem:[#allocation2 + $0x42] sm:$0x1]
      %v1136 = vld [vmem:[#allocation2 + $0x52] sm:$0x1]
      %v1137 = vld [vmem:[#allocation2 + $0x62] sm:$0x1]
      %v1138 = vld [vmem:[#allocation2 + $0x72] sm:$0x1]
      %v1147 = vrot.slane %v1132, 7
      %v1148 = vsel %vm724, %v1147, %v1131
      %v1149 = vrot.slane %v1133, 6
      %v1150 = vsel %vm727, %v1149, %v1148
      %v1151 = vrot.slane %v1134, 5
      %v1152 = vsel %vm730, %v1151, %v1150
      %v1153 = vrot.slane %v1135, 4
      %v1154 = vsel %vm733, %v1153, %v1152
      %v1155 = vrot.slane %v1136, 3
      %v1156 = vsel %vm736, %v1155, %v1154
      %v1157 = vrot.slane %v1137, 2
      %v1158 = vsel %vm739, %v1157, %v1156
      %v1159 = vrot.slane %v1138, 1
      %v1160 = vsel %vm742, %v1159, %v1158
      %1161 = vrot.lane.b32.xlu0 %v1160, 15
      %v1162 = vpop.permute.xlu0 %1161
      %1164 = vst.msk [vmem:[%s1095] sm:$0xff] %vm815, %v1162
      %v1165 = vld [vmem:[#allocation2 + $0x3] sm:$0x1]
      %v1166 = vld [vmem:[#allocation2 + $0x13] sm:$0x1]
      %v1167 = vld [vmem:[#allocation2 + $0x23] sm:$0x1]
      %v1168 = vld [vmem:[#allocation2 + $0x33] sm:$0x1]
      %v1169 = vld [vmem:[#allocation2 + $0x43] sm:$0x1]
      %v1170 = vld [vmem:[#allocation2 + $0x53] sm:$0x1]
      %v1171 = vld [vmem:[#allocation2 + $0x63] sm:$0x1]
      %v1172 = vld [vmem:[#allocation2 + $0x73] sm:$0x1]
      %v1181 = vrot.slane %v1166, 7
      %v1182 = vsel %vm724, %v1181, %v1165
      %v1183 = vrot.slane %v1167, 6
      %v1184 = vsel %vm727, %v1183, %v1182
      %v1185 = vrot.slane %v1168, 5
      %v1186 = vsel %vm730, %v1185, %v1184
      %v1187 = vrot.slane %v1169, 4
      %v1188 = vsel %vm733, %v1187, %v1186
      %v1189 = vrot.slane %v1170, 3
      %v1190 = vsel %vm736, %v1189, %v1188
      %v1191 = vrot.slane %v1171, 2
      %v1192 = vsel %vm739, %v1191, %v1190
      %v1193 = vrot.slane %v1172, 1
      %v1194 = vsel %vm742, %v1193, %v1192
      %1195 = vrot.lane.b32.xlu0 %v1194, 23
      %v1196 = vpop.permute.xlu0 %1195
      %1198 = vst.msk [vmem:[%s1095] sm:$0xff] %vm850, %v1196
      %v1199 = vld [vmem:[#allocation2 + $0x4] sm:$0x1]
      %v1200 = vld [vmem:[#allocation2 + $0x14] sm:$0x1]
      %v1201 = vld [vmem:[#allocation2 + $0x24] sm:$0x1]
      %v1202 = vld [vmem:[#allocation2 + $0x34] sm:$0x1]
      %v1203 = vld [vmem:[#allocation2 + $0x44] sm:$0x1]
      %v1204 = vld [vmem:[#allocation2 + $0x54] sm:$0x1]
      %v1205 = vld [vmem:[#allocation2 + $0x64] sm:$0x1]
      %v1206 = vld [vmem:[#allocation2 + $0x74] sm:$0x1]
      %v1215 = vrot.slane %v1200, 7
      %v1216 = vsel %vm724, %v1215, %v1199
      %v1217 = vrot.slane %v1201, 6
      %v1218 = vsel %vm727, %v1217, %v1216
      %v1219 = vrot.slane %v1202, 5
      %v1220 = vsel %vm730, %v1219, %v1218
      %v1221 = vrot.slane %v1203, 4
      %v1222 = vsel %vm733, %v1221, %v1220
      %v1223 = vrot.slane %v1204, 3
      %v1224 = vsel %vm736, %v1223, %v1222
      %v1225 = vrot.slane %v1205, 2
      %v1226 = vsel %vm739, %v1225, %v1224
      %v1227 = vrot.slane %v1206, 1
      %v1228 = vsel %vm742, %v1227, %v1226
      %1229 = vrot.lane.b32.xlu0 %v1228, 31
      %v1230 = vpop.permute.xlu0 %1229
      %1232 = vst.msk [vmem:[%s1095] sm:$0xff] %vm885, %v1230
      %v1233 = vld [vmem:[#allocation2 + $0x5] sm:$0x1]
      %v1234 = vld [vmem:[#allocation2 + $0x15] sm:$0x1]
      %v1235 = vld [vmem:[#allocation2 + $0x25] sm:$0x1]
      %v1236 = vld [vmem:[#allocation2 + $0x35] sm:$0x1]
      %v1237 = vld [vmem:[#allocation2 + $0x45] sm:$0x1]
      %v1238 = vld [vmem:[#allocation2 + $0x55] sm:$0x1]
      %v1239 = vld [vmem:[#allocation2 + $0x65] sm:$0x1]
      %v1240 = vld [vmem:[#allocation2 + $0x75] sm:$0x1]
      %v1249 = vrot.slane %v1234, 7
      %v1250 = vsel %vm724, %v1249, %v1233
      %v1251 = vrot.slane %v1235, 6
      %v1252 = vsel %vm727, %v1251, %v1250
      %v1253 = vrot.slane %v1236, 5
      %v1254 = vsel %vm730, %v1253, %v1252
      %v1255 = vrot.slane %v1237, 4
      %v1256 = vsel %vm733, %v1255, %v1254
      %v1257 = vrot.slane %v1238, 3
      %v1258 = vsel %vm736, %v1257, %v1256
      %v1259 = vrot.slane %v1239, 2
      %v1260 = vsel %vm739, %v1259, %v1258
      %v1261 = vrot.slane %v1240, 1
      %v1262 = vsel %vm742, %v1261, %v1260
      %1263 = vrot.lane.b32.xlu0 %v1262, 39
      %v1264 = vpop.permute.xlu0 %1263
      %1266 = vst.msk [vmem:[%s1095] sm:$0xff] %vm920, %v1264
      %v1267 = vld [vmem:[#allocation2 + $0x6] sm:$0x1]
      %v1268 = vld [vmem:[#allocation2 + $0x16] sm:$0x1]
      %v1269 = vld [vmem:[#allocation2 + $0x26] sm:$0x1]
      %v1270 = vld [vmem:[#allocation2 + $0x36] sm:$0x1]
      %v1271 = vld [vmem:[#allocation2 + $0x46] sm:$0x1]
      %v1272 = vld [vmem:[#allocation2 + $0x56] sm:$0x1]
      %v1273 = vld [vmem:[#allocation2 + $0x66] sm:$0x1]
      %v1274 = vld [vmem:[#allocation2 + $0x76] sm:$0x1]
      %v1283 = vrot.slane %v1268, 7
      %v1284 = vsel %vm724, %v1283, %v1267
      %v1285 = vrot.slane %v1269, 6
      %v1286 = vsel %vm727, %v1285, %v1284
      %v1287 = vrot.slane %v1270, 5
      %v1288 = vsel %vm730, %v1287, %v1286
      %v1289 = vrot.slane %v1271, 4
      %v1290 = vsel %vm733, %v1289, %v1288
      %v1291 = vrot.slane %v1272, 3
      %v1292 = vsel %vm736, %v1291, %v1290
      %v1293 = vrot.slane %v1273, 2
      %v1294 = vsel %vm739, %v1293, %v1292
      %v1295 = vrot.slane %v1274, 1
      %v1296 = vsel %vm742, %v1295, %v1294
      %1297 = vrot.lane.b32.xlu0 %v1296, 47
      %v1298 = vpop.permute.xlu0 %1297
      %1300 = vst.msk [vmem:[%s1095] sm:$0xff] %vm955, %v1298
      %v1301 = vld [vmem:[#allocation2 + $0x7] sm:$0x1]
      %v1302 = vld [vmem:[#allocation2 + $0x17] sm:$0x1]
      %v1303 = vld [vmem:[#allocation2 + $0x27] sm:$0x1]
      %v1304 = vld [vmem:[#allocation2 + $0x37] sm:$0x1]
      %v1305 = vld [vmem:[#allocation2 + $0x47] sm:$0x1]
      %v1306 = vld [vmem:[#allocation2 + $0x57] sm:$0x1]
      %v1307 = vld [vmem:[#allocation2 + $0x67] sm:$0x1]
      %v1308 = vld [vmem:[#allocation2 + $0x77] sm:$0x1]
      %v1317 = vrot.slane %v1302, 7
      %v1318 = vsel %vm724, %v1317, %v1301
      %v1319 = vrot.slane %v1303, 6
      %v1320 = vsel %vm727, %v1319, %v1318
      %v1321 = vrot.slane %v1304, 5
      %v1322 = vsel %vm730, %v1321, %v1320
      %v1323 = vrot.slane %v1305, 4
      %v1324 = vsel %vm733, %v1323, %v1322
      %v1325 = vrot.slane %v1306, 3
      %v1326 = vsel %vm736, %v1325, %v1324
      %v1327 = vrot.slane %v1307, 2
      %v1328 = vsel %vm739, %v1327, %v1326
      %v1329 = vrot.slane %v1308, 1
      %v1330 = vsel %vm742, %v1329, %v1328
      %1331 = vrot.lane.b32.xlu0 %v1330, 55
      %v1332 = vpop.permute.xlu0 %1331
      %1334 = vst.msk [vmem:[%s1095] sm:$0xff] %vm990, %v1332
      %v1335 = vld [vmem:[#allocation2 + $0x8] sm:$0x1]
      %v1336 = vld [vmem:[#allocation2 + $0x18] sm:$0x1]
      %v1337 = vld [vmem:[#allocation2 + $0x28] sm:$0x1]
      %v1338 = vld [vmem:[#allocation2 + $0x38] sm:$0x1]
      %v1339 = vld [vmem:[#allocation2 + $0x48] sm:$0x1]
      %v1340 = vld [vmem:[#allocation2 + $0x58] sm:$0x1]
      %v1341 = vld [vmem:[#allocation2 + $0x68] sm:$0x1]
      %v1342 = vld [vmem:[#allocation2 + $0x78] sm:$0x1]
      %v1351 = vrot.slane %v1336, 7
      %v1352 = vsel %vm724, %v1351, %v1335
      %v1353 = vrot.slane %v1337, 6
      %v1354 = vsel %vm727, %v1353, %v1352
      %v1355 = vrot.slane %v1338, 5
      %v1356 = vsel %vm730, %v1355, %v1354
      %v1357 = vrot.slane %v1339, 4
      %v1358 = vsel %vm733, %v1357, %v1356
      %v1359 = vrot.slane %v1340, 3
      %v1360 = vsel %vm736, %v1359, %v1358
      %v1361 = vrot.slane %v1341, 2
      %v1362 = vsel %vm739, %v1361, %v1360
      %v1363 = vrot.slane %v1342, 1
      %v1364 = vsel %vm742, %v1363, %v1362
      %1365 = vrot.lane.b32.xlu0 %v1364, 63
      %v1366 = vpop.permute.xlu0 %1365
      %1368 = vst.msk [vmem:[%s1095] sm:$0xff] %vm1025, %v1366
      %v1369 = vld [vmem:[#allocation2 + $0x9] sm:$0x1]
      %v1370 = vld [vmem:[#allocation2 + $0x19] sm:$0x1]
      %v1371 = vld [vmem:[#allocation2 + $0x29] sm:$0x1]
      %v1372 = vld [vmem:[#allocation2 + $0x39] sm:$0x1]
      %v1373 = vld [vmem:[#allocation2 + $0x49] sm:$0x1]
      %v1374 = vld [vmem:[#allocation2 + $0x59] sm:$0x1]
      %v1375 = vld [vmem:[#allocation2 + $0x69] sm:$0x1]
      %v1376 = vld [vmem:[#allocation2 + $0x79] sm:$0x1]
      %v1385 = vrot.slane %v1370, 7
      %v1386 = vsel %vm724, %v1385, %v1369
      %v1387 = vrot.slane %v1371, 6
      %v1388 = vsel %vm727, %v1387, %v1386
      %v1389 = vrot.slane %v1372, 5
      %v1390 = vsel %vm730, %v1389, %v1388
      %v1391 = vrot.slane %v1373, 4
      %v1392 = vsel %vm733, %v1391, %v1390
      %v1393 = vrot.slane %v1374, 3
      %v1394 = vsel %vm736, %v1393, %v1392
      %v1395 = vrot.slane %v1375, 2
      %v1396 = vsel %vm739, %v1395, %v1394
      %v1397 = vrot.slane %v1376, 1
      %v1398 = vsel %vm742, %v1397, %v1396
      %1399 = vrot.lane.b32.xlu0 %v1398, 71
      %v1400 = vpop.permute.xlu0 %1399
      %1402 = vst.msk [vmem:[%s1095] sm:$0xff] %vm1060, %v1400
      %v1403 = vld [vmem:[#allocation2] sm:$0x1]
      %v1404 = vld [vmem:[#allocation2 + $0x10] sm:$0x1]
      %v1405 = vld [vmem:[#allocation2 + $0x20] sm:$0x1]
      %v1406 = vld [vmem:[#allocation2 + $0x30] sm:$0x1]
      %v1407 = vld [vmem:[#allocation2 + $0x40] sm:$0x1]
      %v1408 = vld [vmem:[#allocation2 + $0x50] sm:$0x1]
      %v1409 = vld [vmem:[#allocation2 + $0x60] sm:$0x1]
      %v1410 = vld [vmem:[#allocation2 + $0x70] sm:$0x1]
      %v1419 = vrot.slane %v1404, 7
      %v1420 = vsel %vm724, %v1419, %v1403
      %v1421 = vrot.slane %v1405, 6
      %v1422 = vsel %vm727, %v1421, %v1420
      %v1423 = vrot.slane %v1406, 5
      %v1424 = vsel %vm730, %v1423, %v1422
      %v1425 = vrot.slane %v1407, 4
      %v1426 = vsel %vm733, %v1425, %v1424
      %v1427 = vrot.slane %v1408, 3
      %v1428 = vsel %vm736, %v1427, %v1426
      %v1429 = vrot.slane %v1409, 2
      %v1430 = vsel %vm739, %v1429, %v1428
      %v1431 = vrot.slane %v1410, 1
      %v1432 = vsel %vm742, %v1431, %v1430
      %1433 = vrot.lane.b32.xlu0 %v1432, 126
      %v1434 = vpop.permute.xlu0 %1433
      %s1436 = scalar_lea.vmem [#allocation3], 16
      %1437 = vst.msk [vmem:[%s1436] sm:$0xff] %vm745, %v1434
      %v1438 = vld [vmem:[#allocation2 + $0x1] sm:$0x1]
      %v1439 = vld [vmem:[#allocation2 + $0x11] sm:$0x1]
      %v1440 = vld [vmem:[#allocation2 + $0x21] sm:$0x1]
      %v1441 = vld [vmem:[#allocation2 + $0x31] sm:$0x1]
      %v1442 = vld [vmem:[#allocation2 + $0x41] sm:$0x1]
      %v1443 = vld [vmem:[#allocation2 + $0x51] sm:$0x1]
      %v1444 = vld [vmem:[#allocation2 + $0x61] sm:$0x1]
      %v1445 = vld [vmem:[#allocation2 + $0x71] sm:$0x1]
      %v1454 = vrot.slane %v1439, 7
      %v1455 = vsel %vm724, %v1454, %v1438
      %v1456 = vrot.slane %v1440, 6
      %v1457 = vsel %vm727, %v1456, %v1455
      %v1458 = vrot.slane %v1441, 5
      %v1459 = vsel %vm730, %v1458, %v1457
      %v1460 = vrot.slane %v1442, 4
      %v1461 = vsel %vm733, %v1460, %v1459
      %v1462 = vrot.slane %v1443, 3
      %v1463 = vsel %vm736, %v1462, %v1461
      %v1464 = vrot.slane %v1444, 2
      %v1465 = vsel %vm739, %v1464, %v1463
      %v1466 = vrot.slane %v1445, 1
      %v1467 = vsel %vm742, %v1466, %v1465
      %1468 = vrot.lane.b32.xlu0 %v1467, 6
      %v1469 = vpop.permute.xlu0 %1468
      %1471 = vst.msk [vmem:[%s1436] sm:$0xff] %vm780, %v1469
      %v1472 = vld [vmem:[#allocation2 + $0x2] sm:$0x1]
      %v1473 = vld [vmem:[#allocation2 + $0x12] sm:$0x1]
      %v1474 = vld [vmem:[#allocation2 + $0x22] sm:$0x1]
      %v1475 = vld [vmem:[#allocation2 + $0x32] sm:$0x1]
      %v1476 = vld [vmem:[#allocation2 + $0x42] sm:$0x1]
      %v1477 = vld [vmem:[#allocation2 + $0x52] sm:$0x1]
      %v1478 = vld [vmem:[#allocation2 + $0x62] sm:$0x1]
      %v1479 = vld [vmem:[#allocation2 + $0x72] sm:$0x1]
      %v1488 = vrot.slane %v1473, 7
      %v1489 = vsel %vm724, %v1488, %v1472
      %v1490 = vrot.slane %v1474, 6
      %v1491 = vsel %vm727, %v1490, %v1489
      %v1492 = vrot.slane %v1475, 5
      %v1493 = vsel %vm730, %v1492, %v1491
      %v1494 = vrot.slane %v1476, 4
      %v1495 = vsel %vm733, %v1494, %v1493
      %v1496 = vrot.slane %v1477, 3
      %v1497 = vsel %vm736, %v1496, %v1495
      %v1498 = vrot.slane %v1478, 2
      %v1499 = vsel %vm739, %v1498, %v1497
      %v1500 = vrot.slane %v1479, 1
      %v1501 = vsel %vm742, %v1500, %v1499
      %1502 = vrot.lane.b32.xlu0 %v1501, 14
      %v1503 = vpop.permute.xlu0 %1502
      %1505 = vst.msk [vmem:[%s1436] sm:$0xff] %vm815, %v1503
      %v1506 = vld [vmem:[#allocation2 + $0x3] sm:$0x1]
      %v1507 = vld [vmem:[#allocation2 + $0x13] sm:$0x1]
      %v1508 = vld [vmem:[#allocation2 + $0x23] sm:$0x1]
      %v1509 = vld [vmem:[#allocation2 + $0x33] sm:$0x1]
      %v1510 = vld [vmem:[#allocation2 + $0x43] sm:$0x1]
      %v1511 = vld [vmem:[#allocation2 + $0x53] sm:$0x1]
      %v1512 = vld [vmem:[#allocation2 + $0x63] sm:$0x1]
      %v1513 = vld [vmem:[#allocation2 + $0x73] sm:$0x1]
      %v1522 = vrot.slane %v1507, 7
      %v1523 = vsel %vm724, %v1522, %v1506
      %v1524 = vrot.slane %v1508, 6
      %v1525 = vsel %vm727, %v1524, %v1523
      %v1526 = vrot.slane %v1509, 5
      %v1527 = vsel %vm730, %v1526, %v1525
      %v1528 = vrot.slane %v1510, 4
      %v1529 = vsel %vm733, %v1528, %v1527
      %v1530 = vrot.slane %v1511, 3
      %v1531 = vsel %vm736, %v1530, %v1529
      %v1532 = vrot.slane %v1512, 2
      %v1533 = vsel %vm739, %v1532, %v1531
      %v1534 = vrot.slane %v1513, 1
      %v1535 = vsel %vm742, %v1534, %v1533
      %1536 = vrot.lane.b32.xlu0 %v1535, 22
      %v1537 = vpop.permute.xlu0 %1536
      %1539 = vst.msk [vmem:[%s1436] sm:$0xff] %vm850, %v1537
      %v1540 = vld [vmem:[#allocation2 + $0x4] sm:$0x1]
      %v1541 = vld [vmem:[#allocation2 + $0x14] sm:$0x1]
      %v1542 = vld [vmem:[#allocation2 + $0x24] sm:$0x1]
      %v1543 = vld [vmem:[#allocation2 + $0x34] sm:$0x1]
      %v1544 = vld [vmem:[#allocation2 + $0x44] sm:$0x1]
      %v1545 = vld [vmem:[#allocation2 + $0x54] sm:$0x1]
      %v1546 = vld [vmem:[#allocation2 + $0x64] sm:$0x1]
      %v1547 = vld [vmem:[#allocation2 + $0x74] sm:$0x1]
      %v1556 = vrot.slane %v1541, 7
      %v1557 = vsel %vm724, %v1556, %v1540
      %v1558 = vrot.slane %v1542, 6
      %v1559 = vsel %vm727, %v1558, %v1557
      %v1560 = vrot.slane %v1543, 5
      %v1561 = vsel %vm730, %v1560, %v1559
      %v1562 = vrot.slane %v1544, 4
      %v1563 = vsel %vm733, %v1562, %v1561
      %v1564 = vrot.slane %v1545, 3
      %v1565 = vsel %vm736, %v1564, %v1563
      %v1566 = vrot.slane %v1546, 2
      %v1567 = vsel %vm739, %v1566, %v1565
      %v1568 = vrot.slane %v1547, 1
      %v1569 = vsel %vm742, %v1568, %v1567
      %1570 = vrot.lane.b32.xlu0 %v1569, 30
      %v1571 = vpop.permute.xlu0 %1570
      %1573 = vst.msk [vmem:[%s1436] sm:$0xff] %vm885, %v1571
      %v1574 = vld [vmem:[#allocation2 + $0x5] sm:$0x1]
      %v1575 = vld [vmem:[#allocation2 + $0x15] sm:$0x1]
      %v1576 = vld [vmem:[#allocation2 + $0x25] sm:$0x1]
      %v1577 = vld [vmem:[#allocation2 + $0x35] sm:$0x1]
      %v1578 = vld [vmem:[#allocation2 + $0x45] sm:$0x1]
      %v1579 = vld [vmem:[#allocation2 + $0x55] sm:$0x1]
      %v1580 = vld [vmem:[#allocation2 + $0x65] sm:$0x1]
      %v1581 = vld [vmem:[#allocation2 + $0x75] sm:$0x1]
      %v1590 = vrot.slane %v1575, 7
      %v1591 = vsel %vm724, %v1590, %v1574
      %v1592 = vrot.slane %v1576, 6
      %v1593 = vsel %vm727, %v1592, %v1591
      %v1594 = vrot.slane %v1577, 5
      %v1595 = vsel %vm730, %v1594, %v1593
      %v1596 = vrot.slane %v1578, 4
      %v1597 = vsel %vm733, %v1596, %v1595
      %v1598 = vrot.slane %v1579, 3
      %v1599 = vsel %vm736, %v1598, %v1597
      %v1600 = vrot.slane %v1580, 2
      %v1601 = vsel %vm739, %v1600, %v1599
      %v1602 = vrot.slane %v1581, 1
      %v1603 = vsel %vm742, %v1602, %v1601
      %1604 = vrot.lane.b32.xlu0 %v1603, 38
      %v1605 = vpop.permute.xlu0 %1604
      %1607 = vst.msk [vmem:[%s1436] sm:$0xff] %vm920, %v1605
      %v1608 = vld [vmem:[#allocation2 + $0x6] sm:$0x1]
      %v1609 = vld [vmem:[#allocation2 + $0x16] sm:$0x1]
      %v1610 = vld [vmem:[#allocation2 + $0x26] sm:$0x1]
      %v1611 = vld [vmem:[#allocation2 + $0x36] sm:$0x1]
      %v1612 = vld [vmem:[#allocation2 + $0x46] sm:$0x1]
      %v1613 = vld [vmem:[#allocation2 + $0x56] sm:$0x1]
      %v1614 = vld [vmem:[#allocation2 + $0x66] sm:$0x1]
      %v1615 = vld [vmem:[#allocation2 + $0x76] sm:$0x1]
      %v1624 = vrot.slane %v1609, 7
      %v1625 = vsel %vm724, %v1624, %v1608
      %v1626 = vrot.slane %v1610, 6
      %v1627 = vsel %vm727, %v1626, %v1625
      %v1628 = vrot.slane %v1611, 5
      %v1629 = vsel %vm730, %v1628, %v1627
      %v1630 = vrot.slane %v1612, 4
      %v1631 = vsel %vm733, %v1630, %v1629
      %v1632 = vrot.slane %v1613, 3
      %v1633 = vsel %vm736, %v1632, %v1631
      %v1634 = vrot.slane %v1614, 2
      %v1635 = vsel %vm739, %v1634, %v1633
      %v1636 = vrot.slane %v1615, 1
      %v1637 = vsel %vm742, %v1636, %v1635
      %1638 = vrot.lane.b32.xlu0 %v1637, 46
      %v1639 = vpop.permute.xlu0 %1638
      %1641 = vst.msk [vmem:[%s1436] sm:$0xff] %vm955, %v1639
      %v1642 = vld [vmem:[#allocation2 + $0x7] sm:$0x1]
      %v1643 = vld [vmem:[#allocation2 + $0x17] sm:$0x1]
      %v1644 = vld [vmem:[#allocation2 + $0x27] sm:$0x1]
      %v1645 = vld [vmem:[#allocation2 + $0x37] sm:$0x1]
      %v1646 = vld [vmem:[#allocation2 + $0x47] sm:$0x1]
      %v1647 = vld [vmem:[#allocation2 + $0x57] sm:$0x1]
      %v1648 = vld [vmem:[#allocation2 + $0x67] sm:$0x1]
      %v1649 = vld [vmem:[#allocation2 + $0x77] sm:$0x1]
      %v1658 = vrot.slane %v1643, 7
      %v1659 = vsel %vm724, %v1658, %v1642
      %v1660 = vrot.slane %v1644, 6
      %v1661 = vsel %vm727, %v1660, %v1659
      %v1662 = vrot.slane %v1645, 5
      %v1663 = vsel %vm730, %v1662, %v1661
      %v1664 = vrot.slane %v1646, 4
      %v1665 = vsel %vm733, %v1664, %v1663
      %v1666 = vrot.slane %v1647, 3
      %v1667 = vsel %vm736, %v1666, %v1665
      %v1668 = vrot.slane %v1648, 2
      %v1669 = vsel %vm739, %v1668, %v1667
      %v1670 = vrot.slane %v1649, 1
      %v1671 = vsel %vm742, %v1670, %v1669
      %1672 = vrot.lane.b32.xlu0 %v1671, 54
      %v1673 = vpop.permute.xlu0 %1672
      %1675 = vst.msk [vmem:[%s1436] sm:$0xff] %vm990, %v1673
      %v1676 = vld [vmem:[#allocation2 + $0x8] sm:$0x1]
      %v1677 = vld [vmem:[#allocation2 + $0x18] sm:$0x1]
      %v1678 = vld [vmem:[#allocation2 + $0x28] sm:$0x1]
      %v1679 = vld [vmem:[#allocation2 + $0x38] sm:$0x1]
      %v1680 = vld [vmem:[#allocation2 + $0x48] sm:$0x1]
      %v1681 = vld [vmem:[#allocation2 + $0x58] sm:$0x1]
      %v1682 = vld [vmem:[#allocation2 + $0x68] sm:$0x1]
      %v1683 = vld [vmem:[#allocation2 + $0x78] sm:$0x1]
      %v1692 = vrot.slane %v1677, 7
      %v1693 = vsel %vm724, %v1692, %v1676
      %v1694 = vrot.slane %v1678, 6
      %v1695 = vsel %vm727, %v1694, %v1693
      %v1696 = vrot.slane %v1679, 5
      %v1697 = vsel %vm730, %v1696, %v1695
      %v1698 = vrot.slane %v1680, 4
      %v1699 = vsel %vm733, %v1698, %v1697
      %v1700 = vrot.slane %v1681, 3
      %v1701 = vsel %vm736, %v1700, %v1699
      %v1702 = vrot.slane %v1682, 2
      %v1703 = vsel %vm739, %v1702, %v1701
      %v1704 = vrot.slane %v1683, 1
      %v1705 = vsel %vm742, %v1704, %v1703
      %1706 = vrot.lane.b32.xlu0 %v1705, 62
      %v1707 = vpop.permute.xlu0 %1706
      %1709 = vst.msk [vmem:[%s1436] sm:$0xff] %vm1025, %v1707
      %v1710 = vld [vmem:[#allocation2 + $0x9] sm:$0x1]
      %v1711 = vld [vmem:[#allocation2 + $0x19] sm:$0x1]
      %v1712 = vld [vmem:[#allocation2 + $0x29] sm:$0x1]
      %v1713 = vld [vmem:[#allocation2 + $0x39] sm:$0x1]
      %v1714 = vld [vmem:[#allocation2 + $0x49] sm:$0x1]
      %v1715 = vld [vmem:[#allocation2 + $0x59] sm:$0x1]
      %v1716 = vld [vmem:[#allocation2 + $0x69] sm:$0x1]
      %v1717 = vld [vmem:[#allocation2 + $0x79] sm:$0x1]
      %v1726 = vrot.slane %v1711, 7
      %v1727 = vsel %vm724, %v1726, %v1710
      %v1728 = vrot.slane %v1712, 6
      %v1729 = vsel %vm727, %v1728, %v1727
      %v1730 = vrot.slane %v1713, 5
      %v1731 = vsel %vm730, %v1730, %v1729
      %v1732 = vrot.slane %v1714, 4
      %v1733 = vsel %vm733, %v1732, %v1731
      %v1734 = vrot.slane %v1715, 3
      %v1735 = vsel %vm736, %v1734, %v1733
      %v1736 = vrot.slane %v1716, 2
      %v1737 = vsel %vm739, %v1736, %v1735
      %v1738 = vrot.slane %v1717, 1
      %v1739 = vsel %vm742, %v1738, %v1737
      %1740 = vrot.lane.b32.xlu0 %v1739, 70
      %v1741 = vpop.permute.xlu0 %1740
      %1743 = vst.msk [vmem:[%s1436] sm:$0xff] %vm1060, %v1741
      %v1744 = vld [vmem:[#allocation3] sm:$0xff]
      %vm1745 = vcmask 523264
      %1746 = vst.msk [vmem:[#allocation4] sm:$0xff] %vm1745, %v1744
      %v1747 = vld [vmem:[%s1095] sm:$0xff]
      %1748 = vst.msk [vmem:[#allocation4 + $0x8] sm:$0xff] %vm1745, %v1747
      %v1749 = vld [vmem:[#allocation3] sm:$0xff]
      %1751 = vrot.lane.b32.xlu0 %v1749, 120
      %v1752 = vpop.permute.xlu0 %1751
      %1754 = vst.msk [vmem:[#allocation4 + $0x10] sm:$0xff] %vm1745, %v1752
      %v1755 = vld [vmem:[%s1095] sm:$0xff]
      %1757 = vrot.lane.b32.xlu0 %v1755, 120
      %v1758 = vpop.permute.xlu0 %1757
      %1760 = vst.msk [vmem:[#allocation4 + $0x18] sm:$0xff] %vm1745, %v1758
      %v1761 = vld [vmem:[%s4] sm:$0xf]
      %v1762 = vld [vmem:[#allocation4] sm:$0xff]
      %v1763 = vld [vmem:[#allocation4 + $0x8] sm:$0xff]
      %v1764 = vld [vmem:[#allocation4 + $0x10] sm:$0xff]
      %v1765 = vld [vmem:[#allocation4 + $0x18] sm:$0xff]
      %v1766 = vld [vmem:[%s5] sm:$0xf]
      %1768 = vset.pattern.permute.xlu0 0
      %1769 = vperm.xlu0 %1768, %v1766
      %v1770 = vpop.permute.xlu0 %1769
      %v1773 = vsel %vm287, %v1761, 0
      %1775 = vmatprep.subr.mxu0 0.0
      %1776 = vmatpush1.msra.mxu0 %v1762
      %1777 = vmatprep.subr.mxu0 0.0
      %1778 = vmatpush1.msra.mxu0 %v1763
      %1779 = vmatprep.subr.mxu0 0.0
      %1780 = vmatpush1.msra.mxu0 %v1764
      %1781 = vmatprep.subr.mxu0 0.0
      %1782 = vmatpush1.msra.mxu0 %v1765
      %1783 = vmatprep.subr.mxu0 0.0
      %1784 = vmatpush1.msra.mxu0 0.0
      %1785 = vmatprep.subr.mxu0 0.0
      %1786 = vmatpush1.msra.mxu0 0.0
      %1787 = vmatprep.subr.mxu0 0.0
      %1788 = vmatpush1.msra.mxu0 0.0
      %1789 = vmatprep.subr.mxu0 0.0
      %1790 = vmatpush1.msra.mxu0 0.0
      %1791 = vmatprep.subr.mxu0 0.0
      %1792 = vmatpush1.msra.mxu0 0.0
      %1793 = vmatprep.subr.mxu0 0.0
      %1794 = vmatpush1.msra.mxu0 0.0
      %1795 = vmatprep.subr.mxu0 0.0
      %1796 = vmatpush1.msra.mxu0 0.0
      %1797 = vmatprep.subr.mxu0 0.0
      %1798 = vmatpush1.msra.mxu0 0.0
      %1799 = vmatprep.subr.mxu0 0.0
      %1800 = vmatpush1.msra.mxu0 0.0
      %1801 = vmatprep.subr.mxu0 0.0
      %1802 = vmatpush1.msra.mxu0 0.0
      %1803 = vmatprep.subr.mxu0 0.0
      %1804 = vmatpush1.msra.mxu0 0.0
      %1805 = vmatprep.subr.mxu0 0.0
      %1806 = vmatpush1.msra.mxu0 0.0
      %1807 = vmatprep.subr.mxu0 0.0
      %1808 = vmatpush1.msra.mxu0 0.0
      %1809 = vmatprep.subr.mxu0 0.0
      %1810 = vmatpush1.msra.mxu0 0.0
      %1811 = vmatprep.subr.mxu0 0.0
      %1812 = vmatpush1.msra.mxu0 0.0
      %1813 = vmatprep.subr.mxu0 0.0
      %1814 = vmatpush1.msra.mxu0 0.0
      %1815 = vmatprep.subr.mxu0 0.0
      %1816 = vmatpush1.msra.mxu0 0.0
      %1817 = vmatprep.subr.mxu0 0.0
      %1818 = vmatpush1.msra.mxu0 0.0
      %1819 = vmatprep.subr.mxu0 0.0
      %1820 = vmatpush1.msra.mxu0 0.0
      %1821 = vmatprep.subr.mxu0 0.0
      %1822 = vmatpush1.msra.mxu0 0.0
      %1823 = vmatprep.subr.mxu0 0.0
      %1824 = vmatpush1.msra.mxu0 0.0
      %1825 = vmatprep.subr.mxu0 0.0
      %1826 = vmatpush1.msra.mxu0 0.0
      %1827 = vmatprep.subr.mxu0 0.0
      %1828 = vmatpush1.msra.mxu0 0.0
      %1829 = vmatprep.subr.mxu0 0.0
      %1830 = vmatpush1.msra.mxu0 0.0
      %1831 = vmatprep.subr.mxu0 0.0
      %1832 = vmatpush1.msra.mxu0 0.0
      %1833 = vmatprep.subr.mxu0 0.0
      %1834 = vmatpush1.msra.mxu0 0.0
      %1835 = vmatprep.subr.mxu0 0.0
      %1836 = vmatpush1.msra.mxu0 0.0
      %1837 = vmatprep.subr.mxu0 0.0
      %1838 = vmatpush1.msra.mxu0 0.0
      %1839 = vmatprep.mubr.f32.mxu0 0.0
      %1840 = vmatmul.mubr.f32.gmra.mrb[0].mxu0 %v1773
      %v1841 = vpop.f32.mrb[0].mxu0
      %v1842 = vadd.f32 %v1770, %v1841
      %v1843 = vpop.f32.mrb[0].mxu0
      %1844 = vdwg.mxu0
      %vm1845 = vcmp.gt.f32.partialorder %v1842, 0.0
      %v1846 = vmul.f32 %v1842, 0.01
      %v1847 = vsel %vm1845, %v1842, %v1846
      %vm1848 = vcmask 519168
      %1849 = vst.msk [vmem:[%s265] sm:$0xf] %vm1848, %v1847
      %v1850 = vld [vmem:[%s1095] sm:$0xff]
      %1851 = vst.msk [vmem:[#allocation4] sm:$0xff] %vm1745, %v1850
      %v1852 = vld [vmem:[%s1436] sm:$0xff]
      %1853 = vst.msk [vmem:[#allocation4 + $0x8] sm:$0xff] %vm1745, %v1852
      %v1854 = vld [vmem:[%s1095] sm:$0xff]
      %1856 = vrot.lane.b32.xlu0 %v1854, 120
      %v1857 = vpop.permute.xlu0 %1856
      %1859 = vst.msk [vmem:[#allocation4 + $0x10] sm:$0xff] %vm1745, %v1857
      %v1860 = vld [vmem:[%s1436] sm:$0xff]
      %1862 = vrot.lane.b32.xlu0 %v1860, 120
      %v1863 = vpop.permute.xlu0 %1862
      %1865 = vst.msk [vmem:[#allocation4 + $0x18] sm:$0xff] %vm1745, %v1863
      %s1866 = scalar_lea.vmem %s4, 4
      %v1867 = vld [vmem:[%s1866] sm:$0xf]
      %v1868 = vld [vmem:[#allocation4] sm:$0xff]
      %v1869 = vld [vmem:[#allocation4 + $0x8] sm:$0xff]
      %v1870 = vld [vmem:[#allocation4 + $0x10] sm:$0xff]
      %v1871 = vld [vmem:[#allocation4 + $0x18] sm:$0xff]
      %v1872 = vld [vmem:[%s5] sm:$0xf]
      %1874 = vset.pattern.permute.xlu0 0
      %1875 = vperm.xlu0 %1874, %v1872
      %v1876 = vpop.permute.xlu0 %1875
      %v1879 = vsel %vm287, %v1867, 0
      %1881 = vmatprep.subr.mxu0 0.0
      %1882 = vmatpush1.msra.mxu0 %v1868
      %1883 = vmatprep.subr.mxu0 0.0
      %1884 = vmatpush1.msra.mxu0 %v1869
      %1885 = vmatprep.subr.mxu0 0.0
      %1886 = vmatpush1.msra.mxu0 %v1870
      %1887 = vmatprep.subr.mxu0 0.0
      %1888 = vmatpush1.msra.mxu0 %v1871
      %1889 = vmatprep.subr.mxu0 0.0
      %1890 = vmatpush1.msra.mxu0 0.0
      %1891 = vmatprep.subr.mxu0 0.0
      %1892 = vmatpush1.msra.mxu0 0.0
      %1893 = vmatprep.subr.mxu0 0.0
      %1894 = vmatpush1.msra.mxu0 0.0
      %1895 = vmatprep.subr.mxu0 0.0
      %1896 = vmatpush1.msra.mxu0 0.0
      %1897 = vmatprep.subr.mxu0 0.0
      %1898 = vmatpush1.msra.mxu0 0.0
      %1899 = vmatprep.subr.mxu0 0.0
      %1900 = vmatpush1.msra.mxu0 0.0
      %1901 = vmatprep.subr.mxu0 0.0
      %1902 = vmatpush1.msra.mxu0 0.0
      %1903 = vmatprep.subr.mxu0 0.0
      %1904 = vmatpush1.msra.mxu0 0.0
      %1905 = vmatprep.subr.mxu0 0.0
      %1906 = vmatpush1.msra.mxu0 0.0
      %1907 = vmatprep.subr.mxu0 0.0
      %1908 = vmatpush1.msra.mxu0 0.0
      %1909 = vmatprep.subr.mxu0 0.0
      %1910 = vmatpush1.msra.mxu0 0.0
      %1911 = vmatprep.subr.mxu0 0.0
      %1912 = vmatpush1.msra.mxu0 0.0
      %1913 = vmatprep.subr.mxu0 0.0
      %1914 = vmatpush1.msra.mxu0 0.0
      %1915 = vmatprep.subr.mxu0 0.0
      %1916 = vmatpush1.msra.mxu0 0.0
      %1917 = vmatprep.subr.mxu0 0.0
      %1918 = vmatpush1.msra.mxu0 0.0
      %1919 = vmatprep.subr.mxu0 0.0
      %1920 = vmatpush1.msra.mxu0 0.0
      %1921 = vmatprep.subr.mxu0 0.0
      %1922 = vmatpush1.msra.mxu0 0.0
      %1923 = vmatprep.subr.mxu0 0.0
      %1924 = vmatpush1.msra.mxu0 0.0
      %1925 = vmatprep.subr.mxu0 0.0
      %1926 = vmatpush1.msra.mxu0 0.0
      %1927 = vmatprep.subr.mxu0 0.0
      %1928 = vmatpush1.msra.mxu0 0.0
      %1929 = vmatprep.subr.mxu0 0.0
      %1930 = vmatpush1.msra.mxu0 0.0
      %1931 = vmatprep.subr.mxu0 0.0
      %1932 = vmatpush1.msra.mxu0 0.0
      %1933 = vmatprep.subr.mxu0 0.0
      %1934 = vmatpush1.msra.mxu0 0.0
      %1935 = vmatprep.subr.mxu0 0.0
      %1936 = vmatpush1.msra.mxu0 0.0
      %1937 = vmatprep.subr.mxu0 0.0
      %1938 = vmatpush1.msra.mxu0 0.0
      %1939 = vmatprep.subr.mxu0 0.0
      %1940 = vmatpush1.msra.mxu0 0.0
      %1941 = vmatprep.subr.mxu0 0.0
      %1942 = vmatpush1.msra.mxu0 0.0
      %1943 = vmatprep.subr.mxu0 0.0
      %1944 = vmatpush1.msra.mxu0 0.0
      %1945 = vmatprep.mubr.f32.mxu0 0.0
      %1946 = vmatmul.mubr.f32.gmra.mrb[0].mxu0 %v1879
      %v1947 = vpop.f32.mrb[0].mxu0
      %v1948 = vadd.f32 %v1876, %v1947
      %v1949 = vpop.f32.mrb[0].mxu0
      %1950 = vdwg.mxu0
      %vm1951 = vcmp.gt.f32.partialorder %v1948, 0.0
      %v1952 = vmul.f32 %v1948, 0.01
      %v1953 = vsel %vm1951, %v1948, %v1952
      %1955 = vrot.lane.b32.xlu0 %v1953, 64
      %v1956 = vpop.permute.xlu0 %1955
      %vm1958 = vcmask 1043968
      %1959 = vst.msk [vmem:[%s265] sm:$0xf] %vm1958, %v1956
      %v1960 = vld [vmem:[#allocation3] sm:$0xff]
      %1962 = vrot.lane.b32.xlu0 %v1960, 120
      %v1963 = vpop.permute.xlu0 %1962
      %1965 = vst.msk [vmem:[#allocation4] sm:$0xff] %vm1745, %v1963
      %v1966 = vld [vmem:[%s1095] sm:$0xff]
      %1968 = vrot.lane.b32.xlu0 %v1966, 120
      %v1969 = vpop.permute.xlu0 %1968
      %1971 = vst.msk [vmem:[#allocation4 + $0x8] sm:$0xff] %vm1745, %v1969
      %v1972 = vld [vmem:[#allocation3] sm:$0xff]
      %1974 = vrot.lane.b32.xlu0 %v1972, 112
      %v1975 = vpop.permute.xlu0 %1974
      %1977 = vst.msk [vmem:[#allocation4 + $0x10] sm:$0xff] %vm1745, %v1975
      %v1978 = vld [vmem:[%s1095] sm:$0xff]
      %1980 = vrot.lane.b32.xlu0 %v1978, 112
      %v1981 = vpop.permute.xlu0 %1980
      %1983 = vst.msk [vmem:[#allocation4 + $0x18] sm:$0xff] %vm1745, %v1981
      %s1984 = scalar_lea.vmem %s4, 8
      %v1985 = vld [vmem:[%s1984] sm:$0xf]
      %v1986 = vld [vmem:[#allocation4] sm:$0xff]
      %v1987 = vld [vmem:[#allocation4 + $0x8] sm:$0xff]
      %v1988 = vld [vmem:[#allocation4 + $0x10] sm:$0xff]
      %v1989 = vld [vmem:[#allocation4 + $0x18] sm:$0xff]
      %v1990 = vld [vmem:[%s5] sm:$0xf]
      %1992 = vset.pattern.permute.xlu0 0
      %1993 = vperm.xlu0 %1992, %v1990
      %v1994 = vpop.permute.xlu0 %1993
      %v1997 = vsel %vm287, %v1985, 0
      %1999 = vmatprep.subr.mxu0 0.0
      %2000 = vmatpush1.msra.mxu0 %v1986
      %2001 = vmatprep.subr.mxu0 0.0
      %2002 = vmatpush1.msra.mxu0 %v1987
      %2003 = vmatprep.subr.mxu0 0.0
      %2004 = vmatpush1.msra.mxu0 %v1988
      %2005 = vmatprep.subr.mxu0 0.0
      %2006 = vmatpush1.msra.mxu0 %v1989
      %2007 = vmatprep.subr.mxu0 0.0
      %2008 = vmatpush1.msra.mxu0 0.0
      %2009 = vmatprep.subr.mxu0 0.0
      %2010 = vmatpush1.msra.mxu0 0.0
      %2011 = vmatprep.subr.mxu0 0.0
      %2012 = vmatpush1.msra.mxu0 0.0
      %2013 = vmatprep.subr.mxu0 0.0
      %2014 = vmatpush1.msra.mxu0 0.0
      %2015 = vmatprep.subr.mxu0 0.0
      %2016 = vmatpush1.msra.mxu0 0.0
      %2017 = vmatprep.subr.mxu0 0.0
      %2018 = vmatpush1.msra.mxu0 0.0
      %2019 = vmatprep.subr.mxu0 0.0
      %2020 = vmatpush1.msra.mxu0 0.0
      %2021 = vmatprep.subr.mxu0 0.0
      %2022 = vmatpush1.msra.mxu0 0.0
      %2023 = vmatprep.subr.mxu0 0.0
      %2024 = vmatpush1.msra.mxu0 0.0
      %2025 = vmatprep.subr.mxu0 0.0
      %2026 = vmatpush1.msra.mxu0 0.0
      %2027 = vmatprep.subr.mxu0 0.0
      %2028 = vmatpush1.msra.mxu0 0.0
      %2029 = vmatprep.subr.mxu0 0.0
      %2030 = vmatpush1.msra.mxu0 0.0
      %2031 = vmatprep.subr.mxu0 0.0
      %2032 = vmatpush1.msra.mxu0 0.0
      %2033 = vmatprep.subr.mxu0 0.0
      %2034 = vmatpush1.msra.mxu0 0.0
      %2035 = vmatprep.subr.mxu0 0.0
      %2036 = vmatpush1.msra.mxu0 0.0
      %2037 = vmatprep.subr.mxu0 0.0
      %2038 = vmatpush1.msra.mxu0 0.0
      %2039 = vmatprep.subr.mxu0 0.0
      %2040 = vmatpush1.msra.mxu0 0.0
      %2041 = vmatprep.subr.mxu0 0.0
      %2042 = vmatpush1.msra.mxu0 0.0
      %2043 = vmatprep.subr.mxu0 0.0
      %2044 = vmatpush1.msra.mxu0 0.0
      %2045 = vmatprep.subr.mxu0 0.0
      %2046 = vmatpush1.msra.mxu0 0.0
      %2047 = vmatprep.subr.mxu0 0.0
      %2048 = vmatpush1.msra.mxu0 0.0
      %2049 = vmatprep.subr.mxu0 0.0
      %2050 = vmatpush1.msra.mxu0 0.0
      %2051 = vmatprep.subr.mxu0 0.0
      %2052 = vmatpush1.msra.mxu0 0.0
      %2053 = vmatprep.subr.mxu0 0.0
      %2054 = vmatpush1.msra.mxu0 0.0
      %2055 = vmatprep.subr.mxu0 0.0
      %2056 = vmatpush1.msra.mxu0 0.0
      %2057 = vmatprep.subr.mxu0 0.0
      %2058 = vmatpush1.msra.mxu0 0.0
      %2059 = vmatprep.subr.mxu0 0.0
      %2060 = vmatpush1.msra.mxu0 0.0
      %2061 = vmatprep.subr.mxu0 0.0
      %2062 = vmatpush1.msra.mxu0 0.0
      %2063 = vmatprep.mubr.f32.mxu0 0.0
      %2064 = vmatmul.mubr.f32.gmra.mrb[0].mxu0 %v1997
      %v2065 = vpop.f32.mrb[0].mxu0
      %v2066 = vadd.f32 %v1994, %v2065
      %v2067 = vpop.f32.mrb[0].mxu0
      %2068 = vdwg.mxu0
      %vm2069 = vcmp.gt.f32.partialorder %v2066, 0.0
      %v2070 = vmul.f32 %v2066, 0.01
      %v2071 = vsel %vm2069, %v2066, %v2070
      %2072 = vst.msk [vmem:[%s265 + $0x4] sm:$0xf] %vm1848, %v2071
      %v2073 = vld [vmem:[%s1095] sm:$0xff]
      %2075 = vrot.lane.b32.xlu0 %v2073, 120
      %v2076 = vpop.permute.xlu0 %2075
      %2078 = vst.msk [vmem:[#allocation4] sm:$0xff] %vm1745, %v2076
      %v2079 = vld [vmem:[%s1436] sm:$0xff]
      %2081 = vrot.lane.b32.xlu0 %v2079, 120
      %v2082 = vpop.permute.xlu0 %2081
      %2084 = vst.msk [vmem:[#allocation4 + $0x8] sm:$0xff] %vm1745, %v2082
      %v2085 = vld [vmem:[%s1095] sm:$0xff]
      %2087 = vrot.lane.b32.xlu0 %v2085, 112
      %v2088 = vpop.permute.xlu0 %2087
      %2090 = vst.msk [vmem:[#allocation4 + $0x10] sm:$0xff] %vm1745, %v2088
      %v2091 = vld [vmem:[%s1436] sm:$0xff]
      %2093 = vrot.lane.b32.xlu0 %v2091, 112
      %v2094 = vpop.permute.xlu0 %2093
      %2096 = vst.msk [vmem:[#allocation4 + $0x18] sm:$0xff] %vm1745, %v2094
      %s2097 = scalar_lea.vmem %s4, 12
      %v2098 = vld [vmem:[%s2097] sm:$0xf]
      %v2099 = vld [vmem:[#allocation4] sm:$0xff]
      %v2100 = vld [vmem:[#allocation4 + $0x8] sm:$0xff]
      %v2101 = vld [vmem:[#allocation4 + $0x10] sm:$0xff]
      %v2102 = vld [vmem:[#allocation4 + $0x18] sm:$0xff]
      %v2103 = vld [vmem:[%s5] sm:$0xf]
      %2105 = vset.pattern.permute.xlu0 0
      %2106 = vperm.xlu0 %2105, %v2103
      %v2107 = vpop.permute.xlu0 %2106
      %v2110 = vsel %vm287, %v2098, 0
      %2112 = vmatprep.subr.mxu0 0.0
      %2113 = vmatpush1.msra.mxu0 %v2099
      %2114 = vmatprep.subr.mxu0 0.0
      %2115 = vmatpush1.msra.mxu0 %v2100
      %2116 = vmatprep.subr.mxu0 0.0
      %2117 = vmatpush1.msra.mxu0 %v2101
      %2118 = vmatprep.subr.mxu0 0.0
      %2119 = vmatpush1.msra.mxu0 %v2102
      %2120 = vmatprep.subr.mxu0 0.0
      %2121 = vmatpush1.msra.mxu0 0.0
      %2122 = vmatprep.subr.mxu0 0.0
      %2123 = vmatpush1.msra.mxu0 0.0
      %2124 = vmatprep.subr.mxu0 0.0
      %2125 = vmatpush1.msra.mxu0 0.0
      %2126 = vmatprep.subr.mxu0 0.0
      %2127 = vmatpush1.msra.mxu0 0.0
      %2128 = vmatprep.subr.mxu0 0.0
      %2129 = vmatpush1.msra.mxu0 0.0
      %2130 = vmatprep.subr.mxu0 0.0
      %2131 = vmatpush1.msra.mxu0 0.0
      %2132 = vmatprep.subr.mxu0 0.0
      %2133 = vmatpush1.msra.mxu0 0.0
      %2134 = vmatprep.subr.mxu0 0.0
      %2135 = vmatpush1.msra.mxu0 0.0
      %2136 = vmatprep.subr.mxu0 0.0
      %2137 = vmatpush1.msra.mxu0 0.0
      %2138 = vmatprep.subr.mxu0 0.0
      %2139 = vmatpush1.msra.mxu0 0.0
      %2140 = vmatprep.subr.mxu0 0.0
      %2141 = vmatpush1.msra.mxu0 0.0
      %2142 = vmatprep.subr.mxu0 0.0
      %2143 = vmatpush1.msra.mxu0 0.0
      %2144 = vmatprep.subr.mxu0 0.0
      %2145 = vmatpush1.msra.mxu0 0.0
      %2146 = vmatprep.subr.mxu0 0.0
      %2147 = vmatpush1.msra.mxu0 0.0
      %2148 = vmatprep.subr.mxu0 0.0
      %2149 = vmatpush1.msra.mxu0 0.0
      %2150 = vmatprep.subr.mxu0 0.0
      %2151 = vmatpush1.msra.mxu0 0.0
      %2152 = vmatprep.subr.mxu0 0.0
      %2153 = vmatpush1.msra.mxu0 0.0
      %2154 = vmatprep.subr.mxu0 0.0
      %2155 = vmatpush1.msra.mxu0 0.0
      %2156 = vmatprep.subr.mxu0 0.0
      %2157 = vmatpush1.msra.mxu0 0.0
      %2158 = vmatprep.subr.mxu0 0.0
      %2159 = vmatpush1.msra.mxu0 0.0
      %2160 = vmatprep.subr.mxu0 0.0
      %2161 = vmatpush1.msra.mxu0 0.0
      %2162 = vmatprep.subr.mxu0 0.0
      %2163 = vmatpush1.msra.mxu0 0.0
      %2164 = vmatprep.subr.mxu0 0.0
      %2165 = vmatpush1.msra.mxu0 0.0
      %2166 = vmatprep.subr.mxu0 0.0
      %2167 = vmatpush1.msra.mxu0 0.0
      %2168 = vmatprep.subr.mxu0 0.0
      %2169 = vmatpush1.msra.mxu0 0.0
      %2170 = vmatprep.subr.mxu0 0.0
      %2171 = vmatpush1.msra.mxu0 0.0
      %2172 = vmatprep.subr.mxu0 0.0
      %2173 = vmatpush1.msra.mxu0 0.0
      %2174 = vmatprep.subr.mxu0 0.0
      %2175 = vmatpush1.msra.mxu0 0.0
      %2176 = vmatprep.mubr.f32.mxu0 0.0
      %2177 = vmatmul.mubr.f32.gmra.mrb[0].mxu0 %v2110
      %v2178 = vpop.f32.mrb[0].mxu0
      %v2179 = vadd.f32 %v2107, %v2178
      %v2180 = vpop.f32.mrb[0].mxu0
      %2181 = vdwg.mxu0
      %vm2182 = vcmp.gt.f32.partialorder %v2179, 0.0
      %v2183 = vmul.f32 %v2179, 0.01
      %v2184 = vsel %vm2182, %v2179, %v2183
      %2186 = vrot.lane.b32.xlu0 %v2184, 64
      %v2187 = vpop.permute.xlu0 %2186
      %2189 = vst.msk [vmem:[%s265 + $0x4] sm:$0xf] %vm1958, %v2187
      %p2190 = scmp.lt.s32.totalorder %s17, 1
      %s2191 = scalar_select %p2190, %s17, 1
      %s2192 = smul.addr %s2191, 2
      %s2193 = smul.addr %s2192, 4
      %s2194 = scalar_lea.vmem %s6, %s2193
      // Predicated region
      $region45: #{cnn_decode_layer_forward.1} parent=43 // pred_check
        %p2195 = pneg %p171
      $region46: #{cnn_decode_layer_forward.1} parent=43 // pred_check_branch
        %2197 = sbr.rel (%p2195) target = $region48
      $region47: #{cnn_decode_layer_forward.1} parent=43 // pred_region
        _
      $region48: #{cnn_decode_layer_forward.1} parent=43 // pred_fallthru
        _
    $region44: #{cnn_decode_layer_forward.1} parent=5 // pred_fallthru
      _
    %p2198 = scmp.le.s32.totalorder 2, %s12
    // Predicated region
    $region49: #{cnn_decode_layer_forward.1} parent=5 // pred_check
      %p2199 = pneg %p2198
    $region50: #{cnn_decode_layer_forward.1} parent=5 // pred_check_branch
      %2201 = sbr.rel (%p2199) target = $region52
    $region51: #{cnn_decode_layer_forward.1} parent=5 // pred_region
      %s2202 = ssub.s32 %s12, 2
      // Predicated region
      $region53: #{cnn_decode_layer_forward.1} parent=51 // pred_check
        %p2203 = pneg %p177
      $region54: #{cnn_decode_layer_forward.1} parent=51 // pred_check_branch
        %2205 = sbr.rel (%p2203) target = $region56
      $region55: #{cnn_decode_layer_forward.1} parent=51 // pred_region
        %p2206 = scmp.lt.s32.totalorder %s18, 1
        %s2207 = scalar_select %p2206, %s18, 1
        %s2208 = smul.addr %s2207, 2
        %s2209 = smul.addr %s2208, 4
        %s2210 = scalar_lea.vmem %s6, %s2209
      $region56: #{cnn_decode_layer_forward.1} parent=51 // pred_fallthru
        _
    $region52: #{cnn_decode_layer_forward.1} parent=5 // pred_fallthru
      _
  $region6: #{cnn_decode_layer_forward.1} parent=0 // loop_footer
    %s16 = sadd.s32 1, %s12
  $region7: #{cnn_decode_layer_forward.1} parent=0 // loop_footer_branch
    %11 = sbr.rel target = $region3
  $region8: #{cnn_decode_layer_forward.1} parent=0 // loop_exit
    _

</llo_original>
